<compile_context>
chip_gen: v7x
topology: tpu7x:2x2x1
jax: 0.10.0
libtpu: 0.0.40
codegen_flags: <defaults>
</compile_context>

<pallas_src>
import functools

import jax
import jax.numpy as jnp
from jax.experimental import pallas as pl
from jax.experimental.pallas import tpu as pltpu


def _round_up(x, m):
    return ((x + m - 1) // m) * m


# ------------------------------ fused kernel ------------------------------
def _make_fused_kernel(S, B, H, kernel_sizes):
    nb = len(kernel_sizes)

    def kernel(*refs):
        ids_ref = refs[0]                        # (B, S) int32, SMEM (scalar prefetch)
        table_ref = refs[1]                      # (V, 1, 8H): emb @ [Wih_f|Wih_b] + biases
        whh_f_ref, whh_b_ref = refs[2], refs[3]  # (H, 4H) each, gate cols (i, f, o, g)
        conv_refs = refs[4:4 + 2 * nb]           # per branch: (k*2H, Fp), (1, Fp)
        lw_ref, lb_ref, out_ref = refs[4 + 2 * nb:]

        whh_f = whh_f_ref[...]
        whh_b = whh_b_ref[...]

        # ---- fused embedding gather + input projection + bias (table lookup) ----
        # rows[t][b, :4H]  = forward-direction gate pre-activations for token x[b, t]
        # rows[t][b, 4H:]  = backward-direction gate pre-activations for token x[b, t]
        rows = []
        for t in range(S):
            rows.append(jnp.concatenate(
                [table_ref[ids_ref[b, t]] for b in range(B)], axis=0))   # (B, 8H)

        # ---- bidirectional LSTM recurrence (fully unrolled, states in vregs) ----
        def cell(gx_t, h, c, whh):
            # h/c are None at the first step (reference model uses zero init states).
            gates = gx_t if h is None else (
                gx_t + jnp.dot(h, whh, preferred_element_type=jnp.float32))
            sig = jax.nn.sigmoid(gates[:, 0:3 * H])        # (i, f, o) contiguous
            g = jnp.tanh(gates[:, 3 * H:4 * H])
            c_new = (sig[:, 0:H] * g if c is None
                     else sig[:, H:2 * H] * c + sig[:, 0:H] * g)
            h_new = sig[:, 2 * H:3 * H] * jnp.tanh(c_new)
            return h_new, c_new

        h_f = c_f = h_b = c_b = None
        h_fwd = [None] * S
        h_bwd = [None] * S
        for t in range(S):                       # S is small: full unroll
            tb = S - 1 - t
            h_f, c_f = cell(rows[t][:, 0:4 * H], h_f, c_f, whh_f)
            h_fwd[t] = h_f
            h_b, c_b = cell(rows[tb][:, 4 * H:8 * H], h_b, c_b, whh_b)
            h_bwd[tb] = h_b

        # Bi-LSTM output per time step, channel order [forward | backward].
        hcat = [jnp.concatenate([h_fwd[t], h_bwd[t]], axis=-1) for t in range(S)]

        # ---- conv branches: one im2col matmul each + bias + ReLU + global max-pool ----
        pooled = []
        for br, k in enumerate(kernel_sizes):
            w = conv_refs[2 * br][...]           # (k*2H, Fp)
            bias = conv_refs[2 * br + 1][...]    # (1, Fp)
            L = S - k + 1                        # valid conv length (S >= k guaranteed)
            x_rows = [jnp.concatenate([hcat[l + j] for j in range(k)], axis=-1)
                      for l in range(L)]         # each (B, k*2H)
            x = jnp.concatenate(x_rows, axis=0)  # (L*B, k*2H) im2col matrix
            y = jnp.maximum(
                jnp.dot(x, w, preferred_element_type=jnp.float32) + bias, 0.0)
            p = y[0:B, :]
            for l in range(1, L):                # global max-pool over time
                p = jnp.maximum(p, y[l * B:(l + 1) * B, :])
            pooled.append(p)                     # (B, Fp)

        # ---- fused linear head: single matmul over concatenated features ----
        # (Dropout p=0.5 of the reference model is identity at inference.)
        feat = jnp.concatenate(pooled, axis=-1)  # (B, nb*Fp)
        out_ref[...] = (jnp.dot(feat, lw_ref[...],
                                preferred_element_type=jnp.float32) + lb_ref[...])

    return kernel


# --------------------------- host-side param prep ---------------------------
def prepare_params(raw, kernel_sizes, num_filters, num_classes, hidden_size):
    """PyTorch-layout params -> kernel-ready layout (folded / transposed / padded)."""
    H = hidden_size
    F = num_filters
    Fp = _round_up(F, 128)
    Cp = _round_up(num_classes, 128)

    def reorder(w):  # PyTorch gate order (i, f, g, o) -> (i, f, o, g) along 4H axis
        return jnp.concatenate([w[0:2 * H], w[3 * H:4 * H], w[2 * H:3 * H]], axis=0)

    prep = {}
    emb = raw["embedding"]                                           # (V, E)

    # Fold embedding + input-to-hidden projection + (b_ih + b_hh) into one table.
    proj_blocks = []
    for d in ("f", "b"):
        wih = reorder(raw[f"w_ih_{d}"]).T                            # (E, 4H)
        b = reorder(raw[f"b_ih_{d}"] + raw[f"b_hh_{d}"])             # (4H,)
        proj_blocks.append(emb @ wih + b[None, :])                   # (V, 4H)
        prep[f"whh_{d}"] = reorder(raw[f"w_hh_{d}"]).T               # (H, 4H)
    table_proj = jnp.concatenate(proj_blocks, axis=1)                # (V, 8H)
    prep["table_proj"] = table_proj[:, None, :]                      # (V, 1, 8H)

    # Conv weights as im2col matrices (k*2H, Fp); K index = tap*2H + channel.
    for i, k in enumerate(kernel_sizes):
        w = jnp.transpose(raw[f"conv_w{i}"], (2, 1, 0)).reshape(k * 2 * H, F)
        prep[f"conv_w{i}"] = jnp.pad(w, ((0, 0), (0, Fp - F)))
        prep[f"conv_b{i}"] = jnp.pad(raw[f"conv_b{i}"], (0, Fp - F)).reshape(1, Fp)

    # Linear head, blocked per branch to match the lane-concatenated features.
    blocks = []
    for i in range(len(kernel_sizes)):
        blk = raw["lin_w"][:, i * F:(i + 1) * F].T                   # (F, C)
        blocks.append(jnp.pad(blk, ((0, Fp - F), (0, Cp - num_classes))))
    prep["lin_w"] = jnp.concatenate(blocks, axis=0)                  # (nb*Fp, Cp)
    prep["lin_b"] = jnp.pad(raw["lin_b"], (0, Cp - num_classes)).reshape(1, Cp)
    return prep


# --------------------------------- forward ---------------------------------
def lstmcnn_forward(prep, x_ids, *, kernel_sizes, num_classes):
    B, S = x_ids.shape
    H = prep["whh_f"].shape[0]
    V = prep["table_proj"].shape[0]
    Fp = prep["conv_b0"].shape[1]
    Cp = prep["lin_b"].shape[1]
    nb = len(kernel_sizes)

    # Valid conv needs at least max(kernel_sizes) time steps (see correctness note).
    assert S >= max(kernel_sizes), "sequence length must be >= max kernel size"

    conv_args, conv_specs = [], []
    for i, k in enumerate(kernel_sizes):
        conv_args += [prep[f"conv_w{i}"], prep[f"conv_b{i}"]]
        conv_specs += [pl.BlockSpec((k * 2 * H, Fp), lambda i_, ids: (0, 0)),
                       pl.BlockSpec((1, Fp), lambda i_, ids: (0, 0))]

    grid_spec = pltpu.PrefetchScalarGridSpec(
        num_scalar_prefetch=1,                       # x_ids -> SMEM
        grid=(1,),
        in_specs=[
            pl.BlockSpec((V, 1, 8 * H), lambda i_, ids: (0, 0, 0)),
            pl.BlockSpec((H, 4 * H), lambda i_, ids: (0, 0)),
            pl.BlockSpec((H, 4 * H), lambda i_, ids: (0, 0)),
            *conv_specs,
            pl.BlockSpec((nb * Fp, Cp), lambda i_, ids: (0, 0)),
            pl.BlockSpec((1, Cp), lambda i_, ids: (0, 0)),
        ],
        out_specs=pl.BlockSpec((B, Cp), lambda i_, ids: (0, 0)),
    )

    out = pl.pallas_call(
        _make_fused_kernel(S, B, H, kernel_sizes),
        out_shape=jax.ShapeDtypeStruct((B, Cp), jnp.float32),
        grid_spec=grid_spec,
        compiler_params=pltpu.CompilerParams(dimension_semantics=("arbitrary",)),
    )(x_ids,
      prep["table_proj"], prep["whh_f"], prep["whh_b"],
      *conv_args,
      prep["lin_w"], prep["lin_b"])

    # Dropout(p=0.5) is identity at inference time; slice off the lane padding.
    return out[:, :num_classes]


# ----------------------------------- main -----------------------------------
if __name__ == "__main__":
    B, S = 2, 8
    num_embeddings, E, H = 50, 16, 32
    num_filters = 100
    kernel_sizes = (3, 4, 5)
    num_classes = 11  # len(labels) in the original module

    key = jax.random.PRNGKey(0)
    keys = jax.random.split(key, 24)
    init = lambda k, shape: jax.random.normal(k, shape, jnp.float32) * 0.1

    # Raw parameters in PyTorch layout.
    raw = {
        "embedding": init(keys[0], (num_embeddings, E)),
        "w_ih_f": init(keys[1], (4 * H, E)),
        "w_hh_f": init(keys[2], (4 * H, H)),
        "b_ih_f": init(keys[3], (4 * H,)),
        "b_hh_f": init(keys[4], (4 * H,)),
        "w_ih_b": init(keys[5], (4 * H, E)),
        "w_hh_b": init(keys[6], (4 * H, H)),
        "b_ih_b": init(keys[7], (4 * H,)),
        "b_hh_b": init(keys[8], (4 * H,)),
        "lin_w": init(keys[9], (num_classes, len(kernel_sizes) * num_filters)),
        "lin_b": init(keys[10], (num_classes,)),
    }
    for i, k in enumerate(kernel_sizes):
        raw[f"conv_w{i}"] = init(keys[11 + 2 * i], (num_filters, 2 * H, k))
        raw[f"conv_b{i}"] = init(keys[12 + 2 * i], (num_filters,))

    prep = prepare_params(raw, kernel_sizes, num_filters, num_classes, H)
    x_ids = jax.random.randint(keys[23], (B, S), 0, num_embeddings, dtype=jnp.int32)

    fwd = jax.jit(functools.partial(lstmcnn_forward,
                                    kernel_sizes=kernel_sizes,
                                    num_classes=num_classes))
    logits = fwd(prep, x_ids)
    jax.block_until_ready(logits)
    assert logits.shape == (B, num_classes)
    print("KERNEL_OK")
</pallas_src>

<mosaic_0001>
module attributes {stable_mosaic.version = 11 : i64} {
  func.func @kernel(%arg0: i32, %arg1: memref<2x8xi32, #tpu.memory_space<smem>>, %arg2: memref<50x1x256xf32, #tpu.memory_space<vmem>>, %arg3: memref<32x128xf32, #tpu.memory_space<vmem>>, %arg4: memref<32x128xf32, #tpu.memory_space<vmem>>, %arg5: memref<192x128xf32, #tpu.memory_space<vmem>>, %arg6: memref<1x128xf32, #tpu.memory_space<vmem>>, %arg7: memref<256x128xf32, #tpu.memory_space<vmem>>, %arg8: memref<1x128xf32, #tpu.memory_space<vmem>>, %arg9: memref<320x128xf32, #tpu.memory_space<vmem>>, %arg10: memref<1x128xf32, #tpu.memory_space<vmem>>, %arg11: memref<384x128xf32, #tpu.memory_space<vmem>>, %arg12: memref<1x128xf32, #tpu.memory_space<vmem>>, %arg13: memref<2x128xf32, #tpu.memory_space<vmem>>) attributes {dimension_semantics = [#tpu.dimension_semantics<arbitrary>], iteration_bounds = array<i64: 1>, scalar_prefetch = 1 : i64, scratch_operands = 0 : i64, tpu.core_type = #tpu.core_type<tc>, window_params = [{pipeline_mode = #tpu.pipeline_mode<synchronous>, transform_indices = @transform_0, window_bounds = array<i64: 50, 1, 256>}, {pipeline_mode = #tpu.pipeline_mode<synchronous>, transform_indices = @transform_1, window_bounds = array<i64: 32, 128>}, {pipeline_mode = #tpu.pipeline_mode<synchronous>, transform_indices = @transform_2, window_bounds = array<i64: 32, 128>}, {pipeline_mode = #tpu.pipeline_mode<synchronous>, transform_indices = @transform_3, window_bounds = array<i64: 192, 128>}, {pipeline_mode = #tpu.pipeline_mode<synchronous>, transform_indices = @transform_4, window_bounds = array<i64: 1, 128>}, {pipeline_mode = #tpu.pipeline_mode<synchronous>, transform_indices = @transform_5, window_bounds = array<i64: 256, 128>}, {pipeline_mode = #tpu.pipeline_mode<synchronous>, transform_indices = @transform_6, window_bounds = array<i64: 1, 128>}, {pipeline_mode = #tpu.pipeline_mode<synchronous>, transform_indices = @transform_7, window_bounds = array<i64: 320, 128>}, {pipeline_mode = #tpu.pipeline_mode<synchronous>, transform_indices = @transform_8, window_bounds = array<i64: 1, 128>}, {pipeline_mode = #tpu.pipeline_mode<synchronous>, transform_indices = @transform_9, window_bounds = array<i64: 384, 128>}, {pipeline_mode = #tpu.pipeline_mode<synchronous>, transform_indices = @transform_10, window_bounds = array<i64: 1, 128>}, {pipeline_mode = #tpu.pipeline_mode<synchronous>, transform_indices = @transform_11, window_bounds = array<i64: 2, 128>}]} {
    %c0 = arith.constant 0 : index
    %c0_0 = arith.constant 0 : index
    %0 = vector.load %arg3[%c0, %c0_0] : memref<32x128xf32, #tpu.memory_space<vmem>>, vector<32x128xf32>
    %c0_1 = arith.constant 0 : index
    %c0_2 = arith.constant 0 : index
    %1 = vector.load %arg4[%c0_1, %c0_2] : memref<32x128xf32, #tpu.memory_space<vmem>>, vector<32x128xf32>
    %c0_3 = arith.constant 0 : index
    %c0_4 = arith.constant 0 : index
    %2 = memref.load %arg1[%c0_3, %c0_4] : memref<2x8xi32, #tpu.memory_space<smem>>
    %3 = arith.index_cast %2 : i32 to index
    %c0_5 = arith.constant 0 : index
    %c0_6 = arith.constant 0 : index
    %4 = vector.load %arg2[%3, %c0_5, %c0_6] : memref<50x1x256xf32, #tpu.memory_space<vmem>>, vector<1x1x256xf32>
    %5 = vector.shape_cast %4 : vector<1x1x256xf32> to vector<1x256xf32>
    %c1 = arith.constant 1 : index
    %c0_7 = arith.constant 0 : index
    %6 = memref.load %arg1[%c1, %c0_7] : memref<2x8xi32, #tpu.memory_space<smem>>
    %7 = arith.index_cast %6 : i32 to index
    %c0_8 = arith.constant 0 : index
    %c0_9 = arith.constant 0 : index
    %8 = vector.load %arg2[%7, %c0_8, %c0_9] : memref<50x1x256xf32, #tpu.memory_space<vmem>>, vector<1x1x256xf32>
    %9 = vector.shape_cast %8 : vector<1x1x256xf32> to vector<1x256xf32>
    %10 = tpu.concatenate %5, %9 in 0 : vector<1x256xf32>, vector<1x256xf32> -> vector<2x256xf32>
    %c0_10 = arith.constant 0 : index
    %c1_11 = arith.constant 1 : index
    %11 = memref.load %arg1[%c0_10, %c1_11] : memref<2x8xi32, #tpu.memory_space<smem>>
    %12 = arith.index_cast %11 : i32 to index
    %c0_12 = arith.constant 0 : index
    %c0_13 = arith.constant 0 : index
    %13 = vector.load %arg2[%12, %c0_12, %c0_13] : memref<50x1x256xf32, #tpu.memory_space<vmem>>, vector<1x1x256xf32>
    %14 = vector.shape_cast %13 : vector<1x1x256xf32> to vector<1x256xf32>
    %c1_14 = arith.constant 1 : index
    %c1_15 = arith.constant 1 : index
    %15 = memref.load %arg1[%c1_14, %c1_15] : memref<2x8xi32, #tpu.memory_space<smem>>
    %16 = arith.index_cast %15 : i32 to index
    %c0_16 = arith.constant 0 : index
    %c0_17 = arith.constant 0 : index
    %17 = vector.load %arg2[%16, %c0_16, %c0_17] : memref<50x1x256xf32, #tpu.memory_space<vmem>>, vector<1x1x256xf32>
    %18 = vector.shape_cast %17 : vector<1x1x256xf32> to vector<1x256xf32>
    %19 = tpu.concatenate %14, %18 in 0 : vector<1x256xf32>, vector<1x256xf32> -> vector<2x256xf32>
    %c0_18 = arith.constant 0 : index
    %c2 = arith.constant 2 : index
    %20 = memref.load %arg1[%c0_18, %c2] : memref<2x8xi32, #tpu.memory_space<smem>>
    %21 = arith.index_cast %20 : i32 to index
    %c0_19 = arith.constant 0 : index
    %c0_20 = arith.constant 0 : index
    %22 = vector.load %arg2[%21, %c0_19, %c0_20] : memref<50x1x256xf32, #tpu.memory_space<vmem>>, vector<1x1x256xf32>
    %23 = vector.shape_cast %22 : vector<1x1x256xf32> to vector<1x256xf32>
    %c1_21 = arith.constant 1 : index
    %c2_22 = arith.constant 2 : index
    %24 = memref.load %arg1[%c1_21, %c2_22] : memref<2x8xi32, #tpu.memory_space<smem>>
    %25 = arith.index_cast %24 : i32 to index
    %c0_23 = arith.constant 0 : index
    %c0_24 = arith.constant 0 : index
    %26 = vector.load %arg2[%25, %c0_23, %c0_24] : memref<50x1x256xf32, #tpu.memory_space<vmem>>, vector<1x1x256xf32>
    %27 = vector.shape_cast %26 : vector<1x1x256xf32> to vector<1x256xf32>
    %28 = tpu.concatenate %23, %27 in 0 : vector<1x256xf32>, vector<1x256xf32> -> vector<2x256xf32>
    %c0_25 = arith.constant 0 : index
    %c3 = arith.constant 3 : index
    %29 = memref.load %arg1[%c0_25, %c3] : memref<2x8xi32, #tpu.memory_space<smem>>
    %30 = arith.index_cast %29 : i32 to index
    %c0_26 = arith.constant 0 : index
    %c0_27 = arith.constant 0 : index
    %31 = vector.load %arg2[%30, %c0_26, %c0_27] : memref<50x1x256xf32, #tpu.memory_space<vmem>>, vector<1x1x256xf32>
    %32 = vector.shape_cast %31 : vector<1x1x256xf32> to vector<1x256xf32>
    %c1_28 = arith.constant 1 : index
    %c3_29 = arith.constant 3 : index
    %33 = memref.load %arg1[%c1_28, %c3_29] : memref<2x8xi32, #tpu.memory_space<smem>>
    %34 = arith.index_cast %33 : i32 to index
    %c0_30 = arith.constant 0 : index
    %c0_31 = arith.constant 0 : index
    %35 = vector.load %arg2[%34, %c0_30, %c0_31] : memref<50x1x256xf32, #tpu.memory_space<vmem>>, vector<1x1x256xf32>
    %36 = vector.shape_cast %35 : vector<1x1x256xf32> to vector<1x256xf32>
    %37 = tpu.concatenate %32, %36 in 0 : vector<1x256xf32>, vector<1x256xf32> -> vector<2x256xf32>
    %c0_32 = arith.constant 0 : index
    %c4 = arith.constant 4 : index
    %38 = memref.load %arg1[%c0_32, %c4] : memref<2x8xi32, #tpu.memory_space<smem>>
    %39 = arith.index_cast %38 : i32 to index
    %c0_33 = arith.constant 0 : index
    %c0_34 = arith.constant 0 : index
    %40 = vector.load %arg2[%39, %c0_33, %c0_34] : memref<50x1x256xf32, #tpu.memory_space<vmem>>, vector<1x1x256xf32>
    %41 = vector.shape_cast %40 : vector<1x1x256xf32> to vector<1x256xf32>
    %c1_35 = arith.constant 1 : index
    %c4_36 = arith.constant 4 : index
    %42 = memref.load %arg1[%c1_35, %c4_36] : memref<2x8xi32, #tpu.memory_space<smem>>
    %43 = arith.index_cast %42 : i32 to index
    %c0_37 = arith.constant 0 : index
    %c0_38 = arith.constant 0 : index
    %44 = vector.load %arg2[%43, %c0_37, %c0_38] : memref<50x1x256xf32, #tpu.memory_space<vmem>>, vector<1x1x256xf32>
    %45 = vector.shape_cast %44 : vector<1x1x256xf32> to vector<1x256xf32>
    %46 = tpu.concatenate %41, %45 in 0 : vector<1x256xf32>, vector<1x256xf32> -> vector<2x256xf32>
    %c0_39 = arith.constant 0 : index
    %c5 = arith.constant 5 : index
    %47 = memref.load %arg1[%c0_39, %c5] : memref<2x8xi32, #tpu.memory_space<smem>>
    %48 = arith.index_cast %47 : i32 to index
    %c0_40 = arith.constant 0 : index
    %c0_41 = arith.constant 0 : index
    %49 = vector.load %arg2[%48, %c0_40, %c0_41] : memref<50x1x256xf32, #tpu.memory_space<vmem>>, vector<1x1x256xf32>
    %50 = vector.shape_cast %49 : vector<1x1x256xf32> to vector<1x256xf32>
    %c1_42 = arith.constant 1 : index
    %c5_43 = arith.constant 5 : index
    %51 = memref.load %arg1[%c1_42, %c5_43] : memref<2x8xi32, #tpu.memory_space<smem>>
    %52 = arith.index_cast %51 : i32 to index
    %c0_44 = arith.constant 0 : index
    %c0_45 = arith.constant 0 : index
    %53 = vector.load %arg2[%52, %c0_44, %c0_45] : memref<50x1x256xf32, #tpu.memory_space<vmem>>, vector<1x1x256xf32>
    %54 = vector.shape_cast %53 : vector<1x1x256xf32> to vector<1x256xf32>
    %55 = tpu.concatenate %50, %54 in 0 : vector<1x256xf32>, vector<1x256xf32> -> vector<2x256xf32>
    %c0_46 = arith.constant 0 : index
    %c6 = arith.constant 6 : index
    %56 = memref.load %arg1[%c0_46, %c6] : memref<2x8xi32, #tpu.memory_space<smem>>
    %57 = arith.index_cast %56 : i32 to index
    %c0_47 = arith.constant 0 : index
    %c0_48 = arith.constant 0 : index
    %58 = vector.load %arg2[%57, %c0_47, %c0_48] : memref<50x1x256xf32, #tpu.memory_space<vmem>>, vector<1x1x256xf32>
    %59 = vector.shape_cast %58 : vector<1x1x256xf32> to vector<1x256xf32>
    %c1_49 = arith.constant 1 : index
    %c6_50 = arith.constant 6 : index
    %60 = memref.load %arg1[%c1_49, %c6_50] : memref<2x8xi32, #tpu.memory_space<smem>>
    %61 = arith.index_cast %60 : i32 to index
    %c0_51 = arith.constant 0 : index
    %c0_52 = arith.constant 0 : index
    %62 = vector.load %arg2[%61, %c0_51, %c0_52] : memref<50x1x256xf32, #tpu.memory_space<vmem>>, vector<1x1x256xf32>
    %63 = vector.shape_cast %62 : vector<1x1x256xf32> to vector<1x256xf32>
    %64 = tpu.concatenate %59, %63 in 0 : vector<1x256xf32>, vector<1x256xf32> -> vector<2x256xf32>
    %c0_53 = arith.constant 0 : index
    %c7 = arith.constant 7 : index
    %65 = memref.load %arg1[%c0_53, %c7] : memref<2x8xi32, #tpu.memory_space<smem>>
    %66 = arith.index_cast %65 : i32 to index
    %c0_54 = arith.constant 0 : index
    %c0_55 = arith.constant 0 : index
    %67 = vector.load %arg2[%66, %c0_54, %c0_55] : memref<50x1x256xf32, #tpu.memory_space<vmem>>, vector<1x1x256xf32>
    %68 = vector.shape_cast %67 : vector<1x1x256xf32> to vector<1x256xf32>
    %c1_56 = arith.constant 1 : index
    %c7_57 = arith.constant 7 : index
    %69 = memref.load %arg1[%c1_56, %c7_57] : memref<2x8xi32, #tpu.memory_space<smem>>
    %70 = arith.index_cast %69 : i32 to index
    %c0_58 = arith.constant 0 : index
    %c0_59 = arith.constant 0 : index
    %71 = vector.load %arg2[%70, %c0_58, %c0_59] : memref<50x1x256xf32, #tpu.memory_space<vmem>>, vector<1x1x256xf32>
    %72 = vector.shape_cast %71 : vector<1x1x256xf32> to vector<1x256xf32>
    %73 = tpu.concatenate %68, %72 in 0 : vector<1x256xf32>, vector<1x256xf32> -> vector<2x256xf32>
    %74 = vector.extract_strided_slice %10 {offsets = [0, 0], sizes = [2, 128], strides = [1, 1]} : vector<2x256xf32> to vector<2x128xf32>
    %75 = vector.extract_strided_slice %74 {offsets = [0, 0], sizes = [2, 96], strides = [1, 1]} : vector<2x128xf32> to vector<2x96xf32>
    %76 = arith.negf %75 : vector<2x96xf32>
    %77 = math.exp %76 : vector<2x96xf32>
    %cst = arith.constant 1.000000e+00 : f32
    %78 = vector.broadcast %cst : f32 to vector<2x96xf32>
    %79 = arith.addf %78, %77 : vector<2x96xf32>
    %80 = arith.divf %78, %79 : vector<2x96xf32>
    %81 = vector.extract_strided_slice %74 {offsets = [0, 96], sizes = [2, 32], strides = [1, 1]} : vector<2x128xf32> to vector<2x32xf32>
    %82 = math.tanh %81 : vector<2x32xf32>
    %83 = vector.extract_strided_slice %80 {offsets = [0, 0], sizes = [2, 32], strides = [1, 1]} : vector<2x96xf32> to vector<2x32xf32>
    %84 = arith.mulf %83, %82 : vector<2x32xf32>
    %85 = vector.extract_strided_slice %80 {offsets = [0, 64], sizes = [2, 32], strides = [1, 1]} : vector<2x96xf32> to vector<2x32xf32>
    %86 = math.tanh %84 : vector<2x32xf32>
    %87 = arith.mulf %85, %86 : vector<2x32xf32>
    %88 = vector.extract_strided_slice %73 {offsets = [0, 128], sizes = [2, 128], strides = [1, 1]} : vector<2x256xf32> to vector<2x128xf32>
    %89 = vector.extract_strided_slice %88 {offsets = [0, 0], sizes = [2, 96], strides = [1, 1]} : vector<2x128xf32> to vector<2x96xf32>
    %90 = arith.negf %89 : vector<2x96xf32>
    %91 = math.exp %90 : vector<2x96xf32>
    %cst_60 = arith.constant 1.000000e+00 : f32
    %92 = vector.broadcast %cst_60 : f32 to vector<2x96xf32>
    %93 = arith.addf %92, %91 : vector<2x96xf32>
    %94 = arith.divf %92, %93 : vector<2x96xf32>
    %95 = vector.extract_strided_slice %88 {offsets = [0, 96], sizes = [2, 32], strides = [1, 1]} : vector<2x128xf32> to vector<2x32xf32>
    %96 = math.tanh %95 : vector<2x32xf32>
    %97 = vector.extract_strided_slice %94 {offsets = [0, 0], sizes = [2, 32], strides = [1, 1]} : vector<2x96xf32> to vector<2x32xf32>
    %98 = arith.mulf %97, %96 : vector<2x32xf32>
    %99 = vector.extract_strided_slice %94 {offsets = [0, 64], sizes = [2, 32], strides = [1, 1]} : vector<2x96xf32> to vector<2x32xf32>
    %100 = math.tanh %98 : vector<2x32xf32>
    %101 = arith.mulf %99, %100 : vector<2x32xf32>
    %102 = vector.extract_strided_slice %19 {offsets = [0, 0], sizes = [2, 128], strides = [1, 1]} : vector<2x256xf32> to vector<2x128xf32>
    %cst_61 = arith.constant dense<0.000000e+00> : vector<2x128xf32>
    %103 = tpu.matmul %87, %0, %cst_61 {dimension_numbers = #tpu.dot_dimension_numbers<[1], [0], [0], [1], [0, 0, 1, 1], [], []>} : vector<2x32xf32>, vector<32x128xf32>, vector<2x128xf32> -> vector<2x128xf32>
    %104 = arith.addf %102, %103 : vector<2x128xf32>
    %105 = vector.extract_strided_slice %104 {offsets = [0, 0], sizes = [2, 96], strides = [1, 1]} : vector<2x128xf32> to vector<2x96xf32>
    %106 = arith.negf %105 : vector<2x96xf32>
    %107 = math.exp %106 : vector<2x96xf32>
    %cst_62 = arith.constant 1.000000e+00 : f32
    %108 = vector.broadcast %cst_62 : f32 to vector<2x96xf32>
    %109 = arith.addf %108, %107 : vector<2x96xf32>
    %110 = arith.divf %108, %109 : vector<2x96xf32>
    %111 = vector.extract_strided_slice %104 {offsets = [0, 96], sizes = [2, 32], strides = [1, 1]} : vector<2x128xf32> to vector<2x32xf32>
    %112 = math.tanh %111 : vector<2x32xf32>
    %113 = vector.extract_strided_slice %110 {offsets = [0, 32], sizes = [2, 32], strides = [1, 1]} : vector<2x96xf32> to vector<2x32xf32>
    %114 = arith.mulf %113, %84 : vector<2x32xf32>
    %115 = vector.extract_strided_slice %110 {offsets = [0, 0], sizes = [2, 32], strides = [1, 1]} : vector<2x96xf32> to vector<2x32xf32>
    %116 = arith.mulf %115, %112 : vector<2x32xf32>
    %117 = arith.addf %114, %116 : vector<2x32xf32>
    %118 = vector.extract_strided_slice %110 {offsets = [0, 64], sizes = [2, 32], strides = [1, 1]} : vector<2x96xf32> to vector<2x32xf32>
    %119 = math.tanh %117 : vector<2x32xf32>
    %120 = arith.mulf %118, %119 : vector<2x32xf32>
    %121 = vector.extract_strided_slice %64 {offsets = [0, 128], sizes = [2, 128], strides = [1, 1]} : vector<2x256xf32> to vector<2x128xf32>
    %cst_63 = arith.constant dense<0.000000e+00> : vector<2x128xf32>
    %122 = tpu.matmul %101, %1, %cst_63 {dimension_numbers = #tpu.dot_dimension_numbers<[1], [0], [0], [1], [0, 0, 1, 1], [], []>} : vector<2x32xf32>, vector<32x128xf32>, vector<2x128xf32> -> vector<2x128xf32>
    %123 = arith.addf %121, %122 : vector<2x128xf32>
    %124 = vector.extract_strided_slice %123 {offsets = [0, 0], sizes = [2, 96], strides = [1, 1]} : vector<2x128xf32> to vector<2x96xf32>
    %125 = arith.negf %124 : vector<2x96xf32>
    %126 = math.exp %125 : vector<2x96xf32>
    %cst_64 = arith.constant 1.000000e+00 : f32
    %127 = vector.broadcast %cst_64 : f32 to vector<2x96xf32>
    %128 = arith.addf %127, %126 : vector<2x96xf32>
    %129 = arith.divf %127, %128 : vector<2x96xf32>
    %130 = vector.extract_strided_slice %123 {offsets = [0, 96], sizes = [2, 32], strides = [1, 1]} : vector<2x128xf32> to vector<2x32xf32>
    %131 = math.tanh %130 : vector<2x32xf32>
    %132 = vector.extract_strided_slice %129 {offsets = [0, 32], sizes = [2, 32], strides = [1, 1]} : vector<2x96xf32> to vector<2x32xf32>
    %133 = arith.mulf %132, %98 : vector<2x32xf32>
    %134 = vector.extract_strided_slice %129 {offsets = [0, 0], sizes = [2, 32], strides = [1, 1]} : vector<2x96xf32> to vector<2x32xf32>
    %135 = arith.mulf %134, %131 : vector<2x32xf32>
    %136 = arith.addf %133, %135 : vector<2x32xf32>
    %137 = vector.extract_strided_slice %129 {offsets = [0, 64], sizes = [2, 32], strides = [1, 1]} : vector<2x96xf32> to vector<2x32xf32>
    %138 = math.tanh %136 : vector<2x32xf32>
    %139 = arith.mulf %137, %138 : vector<2x32xf32>
    %140 = vector.extract_strided_slice %28 {offsets = [0, 0], sizes = [2, 128], strides = [1, 1]} : vector<2x256xf32> to vector<2x128xf32>
    %cst_65 = arith.constant dense<0.000000e+00> : vector<2x128xf32>
    %141 = tpu.matmul %120, %0, %cst_65 {dimension_numbers = #tpu.dot_dimension_numbers<[1], [0], [0], [1], [0, 0, 1, 1], [], []>} : vector<2x32xf32>, vector<32x128xf32>, vector<2x128xf32> -> vector<2x128xf32>
    %142 = arith.addf %140, %141 : vector<2x128xf32>
    %143 = vector.extract_strided_slice %142 {offsets = [0, 0], sizes = [2, 96], strides = [1, 1]} : vector<2x128xf32> to vector<2x96xf32>
    %144 = arith.negf %143 : vector<2x96xf32>
    %145 = math.exp %144 : vector<2x96xf32>
    %cst_66 = arith.constant 1.000000e+00 : f32
    %146 = vector.broadcast %cst_66 : f32 to vector<2x96xf32>
    %147 = arith.addf %146, %145 : vector<2x96xf32>
    %148 = arith.divf %146, %147 : vector<2x96xf32>
    %149 = vector.extract_strided_slice %142 {offsets = [0, 96], sizes = [2, 32], strides = [1, 1]} : vector<2x128xf32> to vector<2x32xf32>
    %150 = math.tanh %149 : vector<2x32xf32>
    %151 = vector.extract_strided_slice %148 {offsets = [0, 32], sizes = [2, 32], strides = [1, 1]} : vector<2x96xf32> to vector<2x32xf32>
    %152 = arith.mulf %151, %117 : vector<2x32xf32>
    %153 = vector.extract_strided_slice %148 {offsets = [0, 0], sizes = [2, 32], strides = [1, 1]} : vector<2x96xf32> to vector<2x32xf32>
    %154 = arith.mulf %153, %150 : vector<2x32xf32>
    %155 = arith.addf %152, %154 : vector<2x32xf32>
    %156 = vector.extract_strided_slice %148 {offsets = [0, 64], sizes = [2, 32], strides = [1, 1]} : vector<2x96xf32> to vector<2x32xf32>
    %157 = math.tanh %155 : vector<2x32xf32>
    %158 = arith.mulf %156, %157 : vector<2x32xf32>
    %159 = vector.extract_strided_slice %55 {offsets = [0, 128], sizes = [2, 128], strides = [1, 1]} : vector<2x256xf32> to vector<2x128xf32>
    %cst_67 = arith.constant dense<0.000000e+00> : vector<2x128xf32>
    %160 = tpu.matmul %139, %1, %cst_67 {dimension_numbers = #tpu.dot_dimension_numbers<[1], [0], [0], [1], [0, 0, 1, 1], [], []>} : vector<2x32xf32>, vector<32x128xf32>, vector<2x128xf32> -> vector<2x128xf32>
    %161 = arith.addf %159, %160 : vector<2x128xf32>
    %162 = vector.extract_strided_slice %161 {offsets = [0, 0], sizes = [2, 96], strides = [1, 1]} : vector<2x128xf32> to vector<2x96xf32>
    %163 = arith.negf %162 : vector<2x96xf32>
    %164 = math.exp %163 : vector<2x96xf32>
    %cst_68 = arith.constant 1.000000e+00 : f32
    %165 = vector.broadcast %cst_68 : f32 to vector<2x96xf32>
    %166 = arith.addf %165, %164 : vector<2x96xf32>
    %167 = arith.divf %165, %166 : vector<2x96xf32>
    %168 = vector.extract_strided_slice %161 {offsets = [0, 96], sizes = [2, 32], strides = [1, 1]} : vector<2x128xf32> to vector<2x32xf32>
    %169 = math.tanh %168 : vector<2x32xf32>
    %170 = vector.extract_strided_slice %167 {offsets = [0, 32], sizes = [2, 32], strides = [1, 1]} : vector<2x96xf32> to vector<2x32xf32>
    %171 = arith.mulf %170, %136 : vector<2x32xf32>
    %172 = vector.extract_strided_slice %167 {offsets = [0, 0], sizes = [2, 32], strides = [1, 1]} : vector<2x96xf32> to vector<2x32xf32>
    %173 = arith.mulf %172, %169 : vector<2x32xf32>
    %174 = arith.addf %171, %173 : vector<2x32xf32>
    %175 = vector.extract_strided_slice %167 {offsets = [0, 64], sizes = [2, 32], strides = [1, 1]} : vector<2x96xf32> to vector<2x32xf32>
    %176 = math.tanh %174 : vector<2x32xf32>
    %177 = arith.mulf %175, %176 : vector<2x32xf32>
    %178 = vector.extract_strided_slice %37 {offsets = [0, 0], sizes = [2, 128], strides = [1, 1]} : vector<2x256xf32> to vector<2x128xf32>
    %cst_69 = arith.constant dense<0.000000e+00> : vector<2x128xf32>
    %179 = tpu.matmul %158, %0, %cst_69 {dimension_numbers = #tpu.dot_dimension_numbers<[1], [0], [0], [1], [0, 0, 1, 1], [], []>} : vector<2x32xf32>, vector<32x128xf32>, vector<2x128xf32> -> vector<2x128xf32>
    %180 = arith.addf %178, %179 : vector<2x128xf32>
    %181 = vector.extract_strided_slice %180 {offsets = [0, 0], sizes = [2, 96], strides = [1, 1]} : vector<2x128xf32> to vector<2x96xf32>
    %182 = arith.negf %181 : vector<2x96xf32>
    %183 = math.exp %182 : vector<2x96xf32>
    %cst_70 = arith.constant 1.000000e+00 : f32
    %184 = vector.broadcast %cst_70 : f32 to vector<2x96xf32>
    %185 = arith.addf %184, %183 : vector<2x96xf32>
    %186 = arith.divf %184, %185 : vector<2x96xf32>
    %187 = vector.extract_strided_slice %180 {offsets = [0, 96], sizes = [2, 32], strides = [1, 1]} : vector<2x128xf32> to vector<2x32xf32>
    %188 = math.tanh %187 : vector<2x32xf32>
    %189 = vector.extract_strided_slice %186 {offsets = [0, 32], sizes = [2, 32], strides = [1, 1]} : vector<2x96xf32> to vector<2x32xf32>
    %190 = arith.mulf %189, %155 : vector<2x32xf32>
    %191 = vector.extract_strided_slice %186 {offsets = [0, 0], sizes = [2, 32], strides = [1, 1]} : vector<2x96xf32> to vector<2x32xf32>
    %192 = arith.mulf %191, %188 : vector<2x32xf32>
    %193 = arith.addf %190, %192 : vector<2x32xf32>
    %194 = vector.extract_strided_slice %186 {offsets = [0, 64], sizes = [2, 32], strides = [1, 1]} : vector<2x96xf32> to vector<2x32xf32>
    %195 = math.tanh %193 : vector<2x32xf32>
    %196 = arith.mulf %194, %195 : vector<2x32xf32>
    %197 = vector.extract_strided_slice %46 {offsets = [0, 128], sizes = [2, 128], strides = [1, 1]} : vector<2x256xf32> to vector<2x128xf32>
    %cst_71 = arith.constant dense<0.000000e+00> : vector<2x128xf32>
    %198 = tpu.matmul %177, %1, %cst_71 {dimension_numbers = #tpu.dot_dimension_numbers<[1], [0], [0], [1], [0, 0, 1, 1], [], []>} : vector<2x32xf32>, vector<32x128xf32>, vector<2x128xf32> -> vector<2x128xf32>
    %199 = arith.addf %197, %198 : vector<2x128xf32>
    %200 = vector.extract_strided_slice %199 {offsets = [0, 0], sizes = [2, 96], strides = [1, 1]} : vector<2x128xf32> to vector<2x96xf32>
    %201 = arith.negf %200 : vector<2x96xf32>
    %202 = math.exp %201 : vector<2x96xf32>
    %cst_72 = arith.constant 1.000000e+00 : f32
    %203 = vector.broadcast %cst_72 : f32 to vector<2x96xf32>
    %204 = arith.addf %203, %202 : vector<2x96xf32>
    %205 = arith.divf %203, %204 : vector<2x96xf32>
    %206 = vector.extract_strided_slice %199 {offsets = [0, 96], sizes = [2, 32], strides = [1, 1]} : vector<2x128xf32> to vector<2x32xf32>
    %207 = math.tanh %206 : vector<2x32xf32>
    %208 = vector.extract_strided_slice %205 {offsets = [0, 32], sizes = [2, 32], strides = [1, 1]} : vector<2x96xf32> to vector<2x32xf32>
    %209 = arith.mulf %208, %174 : vector<2x32xf32>
    %210 = vector.extract_strided_slice %205 {offsets = [0, 0], sizes = [2, 32], strides = [1, 1]} : vector<2x96xf32> to vector<2x32xf32>
    %211 = arith.mulf %210, %207 : vector<2x32xf32>
    %212 = arith.addf %209, %211 : vector<2x32xf32>
    %213 = vector.extract_strided_slice %205 {offsets = [0, 64], sizes = [2, 32], strides = [1, 1]} : vector<2x96xf32> to vector<2x32xf32>
    %214 = math.tanh %212 : vector<2x32xf32>
    %215 = arith.mulf %213, %214 : vector<2x32xf32>
    %216 = vector.extract_strided_slice %46 {offsets = [0, 0], sizes = [2, 128], strides = [1, 1]} : vector<2x256xf32> to vector<2x128xf32>
    %cst_73 = arith.constant dense<0.000000e+00> : vector<2x128xf32>
    %217 = tpu.matmul %196, %0, %cst_73 {dimension_numbers = #tpu.dot_dimension_numbers<[1], [0], [0], [1], [0, 0, 1, 1], [], []>} : vector<2x32xf32>, vector<32x128xf32>, vector<2x128xf32> -> vector<2x128xf32>
    %218 = arith.addf %216, %217 : vector<2x128xf32>
    %219 = vector.extract_strided_slice %218 {offsets = [0, 0], sizes = [2, 96], strides = [1, 1]} : vector<2x128xf32> to vector<2x96xf32>
    %220 = arith.negf %219 : vector<2x96xf32>
    %221 = math.exp %220 : vector<2x96xf32>
    %cst_74 = arith.constant 1.000000e+00 : f32
    %222 = vector.broadcast %cst_74 : f32 to vector<2x96xf32>
    %223 = arith.addf %222, %221 : vector<2x96xf32>
    %224 = arith.divf %222, %223 : vector<2x96xf32>
    %225 = vector.extract_strided_slice %218 {offsets = [0, 96], sizes = [2, 32], strides = [1, 1]} : vector<2x128xf32> to vector<2x32xf32>
    %226 = math.tanh %225 : vector<2x32xf32>
    %227 = vector.extract_strided_slice %224 {offsets = [0, 32], sizes = [2, 32], strides = [1, 1]} : vector<2x96xf32> to vector<2x32xf32>
    %228 = arith.mulf %227, %193 : vector<2x32xf32>
    %229 = vector.extract_strided_slice %224 {offsets = [0, 0], sizes = [2, 32], strides = [1, 1]} : vector<2x96xf32> to vector<2x32xf32>
    %230 = arith.mulf %229, %226 : vector<2x32xf32>
    %231 = arith.addf %228, %230 : vector<2x32xf32>
    %232 = vector.extract_strided_slice %224 {offsets = [0, 64], sizes = [2, 32], strides = [1, 1]} : vector<2x96xf32> to vector<2x32xf32>
    %233 = math.tanh %231 : vector<2x32xf32>
    %234 = arith.mulf %232, %233 : vector<2x32xf32>
    %235 = vector.extract_strided_slice %37 {offsets = [0, 128], sizes = [2, 128], strides = [1, 1]} : vector<2x256xf32> to vector<2x128xf32>
    %cst_75 = arith.constant dense<0.000000e+00> : vector<2x128xf32>
    %236 = tpu.matmul %215, %1, %cst_75 {dimension_numbers = #tpu.dot_dimension_numbers<[1], [0], [0], [1], [0, 0, 1, 1], [], []>} : vector<2x32xf32>, vector<32x128xf32>, vector<2x128xf32> -> vector<2x128xf32>
    %237 = arith.addf %235, %236 : vector<2x128xf32>
    %238 = vector.extract_strided_slice %237 {offsets = [0, 0], sizes = [2, 96], strides = [1, 1]} : vector<2x128xf32> to vector<2x96xf32>
    %239 = arith.negf %238 : vector<2x96xf32>
    %240 = math.exp %239 : vector<2x96xf32>
    %cst_76 = arith.constant 1.000000e+00 : f32
    %241 = vector.broadcast %cst_76 : f32 to vector<2x96xf32>
    %242 = arith.addf %241, %240 : vector<2x96xf32>
    %243 = arith.divf %241, %242 : vector<2x96xf32>
    %244 = vector.extract_strided_slice %237 {offsets = [0, 96], sizes = [2, 32], strides = [1, 1]} : vector<2x128xf32> to vector<2x32xf32>
    %245 = math.tanh %244 : vector<2x32xf32>
    %246 = vector.extract_strided_slice %243 {offsets = [0, 32], sizes = [2, 32], strides = [1, 1]} : vector<2x96xf32> to vector<2x32xf32>
    %247 = arith.mulf %246, %212 : vector<2x32xf32>
    %248 = vector.extract_strided_slice %243 {offsets = [0, 0], sizes = [2, 32], strides = [1, 1]} : vector<2x96xf32> to vector<2x32xf32>
    %249 = arith.mulf %248, %245 : vector<2x32xf32>
    %250 = arith.addf %247, %249 : vector<2x32xf32>
    %251 = vector.extract_strided_slice %243 {offsets = [0, 64], sizes = [2, 32], strides = [1, 1]} : vector<2x96xf32> to vector<2x32xf32>
    %252 = math.tanh %250 : vector<2x32xf32>
    %253 = arith.mulf %251, %252 : vector<2x32xf32>
    %254 = vector.extract_strided_slice %55 {offsets = [0, 0], sizes = [2, 128], strides = [1, 1]} : vector<2x256xf32> to vector<2x128xf32>
    %cst_77 = arith.constant dense<0.000000e+00> : vector<2x128xf32>
    %255 = tpu.matmul %234, %0, %cst_77 {dimension_numbers = #tpu.dot_dimension_numbers<[1], [0], [0], [1], [0, 0, 1, 1], [], []>} : vector<2x32xf32>, vector<32x128xf32>, vector<2x128xf32> -> vector<2x128xf32>
    %256 = arith.addf %254, %255 : vector<2x128xf32>
    %257 = vector.extract_strided_slice %256 {offsets = [0, 0], sizes = [2, 96], strides = [1, 1]} : vector<2x128xf32> to vector<2x96xf32>
    %258 = arith.negf %257 : vector<2x96xf32>
    %259 = math.exp %258 : vector<2x96xf32>
    %cst_78 = arith.constant 1.000000e+00 : f32
    %260 = vector.broadcast %cst_78 : f32 to vector<2x96xf32>
    %261 = arith.addf %260, %259 : vector<2x96xf32>
    %262 = arith.divf %260, %261 : vector<2x96xf32>
    %263 = vector.extract_strided_slice %256 {offsets = [0, 96], sizes = [2, 32], strides = [1, 1]} : vector<2x128xf32> to vector<2x32xf32>
    %264 = math.tanh %263 : vector<2x32xf32>
    %265 = vector.extract_strided_slice %262 {offsets = [0, 32], sizes = [2, 32], strides = [1, 1]} : vector<2x96xf32> to vector<2x32xf32>
    %266 = arith.mulf %265, %231 : vector<2x32xf32>
    %267 = vector.extract_strided_slice %262 {offsets = [0, 0], sizes = [2, 32], strides = [1, 1]} : vector<2x96xf32> to vector<2x32xf32>
    %268 = arith.mulf %267, %264 : vector<2x32xf32>
    %269 = arith.addf %266, %268 : vector<2x32xf32>
    %270 = vector.extract_strided_slice %262 {offsets = [0, 64], sizes = [2, 32], strides = [1, 1]} : vector<2x96xf32> to vector<2x32xf32>
    %271 = math.tanh %269 : vector<2x32xf32>
    %272 = arith.mulf %270, %271 : vector<2x32xf32>
    %273 = vector.extract_strided_slice %28 {offsets = [0, 128], sizes = [2, 128], strides = [1, 1]} : vector<2x256xf32> to vector<2x128xf32>
    %cst_79 = arith.constant dense<0.000000e+00> : vector<2x128xf32>
    %274 = tpu.matmul %253, %1, %cst_79 {dimension_numbers = #tpu.dot_dimension_numbers<[1], [0], [0], [1], [0, 0, 1, 1], [], []>} : vector<2x32xf32>, vector<32x128xf32>, vector<2x128xf32> -> vector<2x128xf32>
    %275 = arith.addf %273, %274 : vector<2x128xf32>
    %276 = vector.extract_strided_slice %275 {offsets = [0, 0], sizes = [2, 96], strides = [1, 1]} : vector<2x128xf32> to vector<2x96xf32>
    %277 = arith.negf %276 : vector<2x96xf32>
    %278 = math.exp %277 : vector<2x96xf32>
    %cst_80 = arith.constant 1.000000e+00 : f32
    %279 = vector.broadcast %cst_80 : f32 to vector<2x96xf32>
    %280 = arith.addf %279, %278 : vector<2x96xf32>
    %281 = arith.divf %279, %280 : vector<2x96xf32>
    %282 = vector.extract_strided_slice %275 {offsets = [0, 96], sizes = [2, 32], strides = [1, 1]} : vector<2x128xf32> to vector<2x32xf32>
    %283 = math.tanh %282 : vector<2x32xf32>
    %284 = vector.extract_strided_slice %281 {offsets = [0, 32], sizes = [2, 32], strides = [1, 1]} : vector<2x96xf32> to vector<2x32xf32>
    %285 = arith.mulf %284, %250 : vector<2x32xf32>
    %286 = vector.extract_strided_slice %281 {offsets = [0, 0], sizes = [2, 32], strides = [1, 1]} : vector<2x96xf32> to vector<2x32xf32>
    %287 = arith.mulf %286, %283 : vector<2x32xf32>
    %288 = arith.addf %285, %287 : vector<2x32xf32>
    %289 = vector.extract_strided_slice %281 {offsets = [0, 64], sizes = [2, 32], strides = [1, 1]} : vector<2x96xf32> to vector<2x32xf32>
    %290 = math.tanh %288 : vector<2x32xf32>
    %291 = arith.mulf %289, %290 : vector<2x32xf32>
    %292 = vector.extract_strided_slice %64 {offsets = [0, 0], sizes = [2, 128], strides = [1, 1]} : vector<2x256xf32> to vector<2x128xf32>
    %cst_81 = arith.constant dense<0.000000e+00> : vector<2x128xf32>
    %293 = tpu.matmul %272, %0, %cst_81 {dimension_numbers = #tpu.dot_dimension_numbers<[1], [0], [0], [1], [0, 0, 1, 1], [], []>} : vector<2x32xf32>, vector<32x128xf32>, vector<2x128xf32> -> vector<2x128xf32>
    %294 = arith.addf %292, %293 : vector<2x128xf32>
    %295 = vector.extract_strided_slice %294 {offsets = [0, 0], sizes = [2, 96], strides = [1, 1]} : vector<2x128xf32> to vector<2x96xf32>
    %296 = arith.negf %295 : vector<2x96xf32>
    %297 = math.exp %296 : vector<2x96xf32>
    %cst_82 = arith.constant 1.000000e+00 : f32
    %298 = vector.broadcast %cst_82 : f32 to vector<2x96xf32>
    %299 = arith.addf %298, %297 : vector<2x96xf32>
    %300 = arith.divf %298, %299 : vector<2x96xf32>
    %301 = vector.extract_strided_slice %294 {offsets = [0, 96], sizes = [2, 32], strides = [1, 1]} : vector<2x128xf32> to vector<2x32xf32>
    %302 = math.tanh %301 : vector<2x32xf32>
    %303 = vector.extract_strided_slice %300 {offsets = [0, 32], sizes = [2, 32], strides = [1, 1]} : vector<2x96xf32> to vector<2x32xf32>
    %304 = arith.mulf %303, %269 : vector<2x32xf32>
    %305 = vector.extract_strided_slice %300 {offsets = [0, 0], sizes = [2, 32], strides = [1, 1]} : vector<2x96xf32> to vector<2x32xf32>
    %306 = arith.mulf %305, %302 : vector<2x32xf32>
    %307 = arith.addf %304, %306 : vector<2x32xf32>
    %308 = vector.extract_strided_slice %300 {offsets = [0, 64], sizes = [2, 32], strides = [1, 1]} : vector<2x96xf32> to vector<2x32xf32>
    %309 = math.tanh %307 : vector<2x32xf32>
    %310 = arith.mulf %308, %309 : vector<2x32xf32>
    %311 = vector.extract_strided_slice %19 {offsets = [0, 128], sizes = [2, 128], strides = [1, 1]} : vector<2x256xf32> to vector<2x128xf32>
    %cst_83 = arith.constant dense<0.000000e+00> : vector<2x128xf32>
    %312 = tpu.matmul %291, %1, %cst_83 {dimension_numbers = #tpu.dot_dimension_numbers<[1], [0], [0], [1], [0, 0, 1, 1], [], []>} : vector<2x32xf32>, vector<32x128xf32>, vector<2x128xf32> -> vector<2x128xf32>
    %313 = arith.addf %311, %312 : vector<2x128xf32>
    %314 = vector.extract_strided_slice %313 {offsets = [0, 0], sizes = [2, 96], strides = [1, 1]} : vector<2x128xf32> to vector<2x96xf32>
    %315 = arith.negf %314 : vector<2x96xf32>
    %316 = math.exp %315 : vector<2x96xf32>
    %cst_84 = arith.constant 1.000000e+00 : f32
    %317 = vector.broadcast %cst_84 : f32 to vector<2x96xf32>
    %318 = arith.addf %317, %316 : vector<2x96xf32>
    %319 = arith.divf %317, %318 : vector<2x96xf32>
    %320 = vector.extract_strided_slice %313 {offsets = [0, 96], sizes = [2, 32], strides = [1, 1]} : vector<2x128xf32> to vector<2x32xf32>
    %321 = math.tanh %320 : vector<2x32xf32>
    %322 = vector.extract_strided_slice %319 {offsets = [0, 32], sizes = [2, 32], strides = [1, 1]} : vector<2x96xf32> to vector<2x32xf32>
    %323 = arith.mulf %322, %288 : vector<2x32xf32>
    %324 = vector.extract_strided_slice %319 {offsets = [0, 0], sizes = [2, 32], strides = [1, 1]} : vector<2x96xf32> to vector<2x32xf32>
    %325 = arith.mulf %324, %321 : vector<2x32xf32>
    %326 = arith.addf %323, %325 : vector<2x32xf32>
    %327 = vector.extract_strided_slice %319 {offsets = [0, 64], sizes = [2, 32], strides = [1, 1]} : vector<2x96xf32> to vector<2x32xf32>
    %328 = math.tanh %326 : vector<2x32xf32>
    %329 = arith.mulf %327, %328 : vector<2x32xf32>
    %330 = vector.extract_strided_slice %73 {offsets = [0, 0], sizes = [2, 128], strides = [1, 1]} : vector<2x256xf32> to vector<2x128xf32>
    %cst_85 = arith.constant dense<0.000000e+00> : vector<2x128xf32>
    %331 = tpu.matmul %310, %0, %cst_85 {dimension_numbers = #tpu.dot_dimension_numbers<[1], [0], [0], [1], [0, 0, 1, 1], [], []>} : vector<2x32xf32>, vector<32x128xf32>, vector<2x128xf32> -> vector<2x128xf32>
    %332 = arith.addf %330, %331 : vector<2x128xf32>
    %333 = vector.extract_strided_slice %332 {offsets = [0, 0], sizes = [2, 96], strides = [1, 1]} : vector<2x128xf32> to vector<2x96xf32>
    %334 = arith.negf %333 : vector<2x96xf32>
    %335 = math.exp %334 : vector<2x96xf32>
    %cst_86 = arith.constant 1.000000e+00 : f32
    %336 = vector.broadcast %cst_86 : f32 to vector<2x96xf32>
    %337 = arith.addf %336, %335 : vector<2x96xf32>
    %338 = arith.divf %336, %337 : vector<2x96xf32>
    %339 = vector.extract_strided_slice %332 {offsets = [0, 96], sizes = [2, 32], strides = [1, 1]} : vector<2x128xf32> to vector<2x32xf32>
    %340 = math.tanh %339 : vector<2x32xf32>
    %341 = vector.extract_strided_slice %338 {offsets = [0, 32], sizes = [2, 32], strides = [1, 1]} : vector<2x96xf32> to vector<2x32xf32>
    %342 = arith.mulf %341, %307 : vector<2x32xf32>
    %343 = vector.extract_strided_slice %338 {offsets = [0, 0], sizes = [2, 32], strides = [1, 1]} : vector<2x96xf32> to vector<2x32xf32>
    %344 = arith.mulf %343, %340 : vector<2x32xf32>
    %345 = arith.addf %342, %344 : vector<2x32xf32>
    %346 = vector.extract_strided_slice %338 {offsets = [0, 64], sizes = [2, 32], strides = [1, 1]} : vector<2x96xf32> to vector<2x32xf32>
    %347 = math.tanh %345 : vector<2x32xf32>
    %348 = arith.mulf %346, %347 : vector<2x32xf32>
    %349 = vector.extract_strided_slice %10 {offsets = [0, 128], sizes = [2, 128], strides = [1, 1]} : vector<2x256xf32> to vector<2x128xf32>
    %cst_87 = arith.constant dense<0.000000e+00> : vector<2x128xf32>
    %350 = tpu.matmul %329, %1, %cst_87 {dimension_numbers = #tpu.dot_dimension_numbers<[1], [0], [0], [1], [0, 0, 1, 1], [], []>} : vector<2x32xf32>, vector<32x128xf32>, vector<2x128xf32> -> vector<2x128xf32>
    %351 = arith.addf %349, %350 : vector<2x128xf32>
    %352 = vector.extract_strided_slice %351 {offsets = [0, 0], sizes = [2, 96], strides = [1, 1]} : vector<2x128xf32> to vector<2x96xf32>
    %353 = arith.negf %352 : vector<2x96xf32>
    %354 = math.exp %353 : vector<2x96xf32>
    %cst_88 = arith.constant 1.000000e+00 : f32
    %355 = vector.broadcast %cst_88 : f32 to vector<2x96xf32>
    %356 = arith.addf %355, %354 : vector<2x96xf32>
    %357 = arith.divf %355, %356 : vector<2x96xf32>
    %358 = vector.extract_strided_slice %351 {offsets = [0, 96], sizes = [2, 32], strides = [1, 1]} : vector<2x128xf32> to vector<2x32xf32>
    %359 = math.tanh %358 : vector<2x32xf32>
    %360 = vector.extract_strided_slice %357 {offsets = [0, 32], sizes = [2, 32], strides = [1, 1]} : vector<2x96xf32> to vector<2x32xf32>
    %361 = arith.mulf %360, %326 : vector<2x32xf32>
    %362 = vector.extract_strided_slice %357 {offsets = [0, 0], sizes = [2, 32], strides = [1, 1]} : vector<2x96xf32> to vector<2x32xf32>
    %363 = arith.mulf %362, %359 : vector<2x32xf32>
    %364 = arith.addf %361, %363 : vector<2x32xf32>
    %365 = vector.extract_strided_slice %357 {offsets = [0, 64], sizes = [2, 32], strides = [1, 1]} : vector<2x96xf32> to vector<2x32xf32>
    %366 = math.tanh %364 : vector<2x32xf32>
    %367 = arith.mulf %365, %366 : vector<2x32xf32>
    %368 = tpu.concatenate %87, %367 in 1 : vector<2x32xf32>, vector<2x32xf32> -> vector<2x64xf32>
    %369 = tpu.concatenate %120, %329 in 1 : vector<2x32xf32>, vector<2x32xf32> -> vector<2x64xf32>
    %370 = tpu.concatenate %158, %291 in 1 : vector<2x32xf32>, vector<2x32xf32> -> vector<2x64xf32>
    %371 = tpu.concatenate %196, %253 in 1 : vector<2x32xf32>, vector<2x32xf32> -> vector<2x64xf32>
    %372 = tpu.concatenate %234, %215 in 1 : vector<2x32xf32>, vector<2x32xf32> -> vector<2x64xf32>
    %373 = tpu.concatenate %272, %177 in 1 : vector<2x32xf32>, vector<2x32xf32> -> vector<2x64xf32>
    %374 = tpu.concatenate %310, %139 in 1 : vector<2x32xf32>, vector<2x32xf32> -> vector<2x64xf32>
    %375 = tpu.concatenate %348, %101 in 1 : vector<2x32xf32>, vector<2x32xf32> -> vector<2x64xf32>
    %c0_89 = arith.constant 0 : index
    %c0_90 = arith.constant 0 : index
    %376 = vector.load %arg5[%c0_89, %c0_90] : memref<192x128xf32, #tpu.memory_space<vmem>>, vector<192x128xf32>
    %c0_91 = arith.constant 0 : index
    %c0_92 = arith.constant 0 : index
    %377 = vector.load %arg6[%c0_91, %c0_92] : memref<1x128xf32, #tpu.memory_space<vmem>>, vector<1x128xf32>
    %378 = tpu.concatenate %368, %369, %370 in 1 : vector<2x64xf32>, vector<2x64xf32>, vector<2x64xf32> -> vector<2x192xf32>
    %379 = tpu.concatenate %369, %370, %371 in 1 : vector<2x64xf32>, vector<2x64xf32>, vector<2x64xf32> -> vector<2x192xf32>
    %380 = tpu.concatenate %370, %371, %372 in 1 : vector<2x64xf32>, vector<2x64xf32>, vector<2x64xf32> -> vector<2x192xf32>
    %381 = tpu.concatenate %371, %372, %373 in 1 : vector<2x64xf32>, vector<2x64xf32>, vector<2x64xf32> -> vector<2x192xf32>
    %382 = tpu.concatenate %372, %373, %374 in 1 : vector<2x64xf32>, vector<2x64xf32>, vector<2x64xf32> -> vector<2x192xf32>
    %383 = tpu.concatenate %373, %374, %375 in 1 : vector<2x64xf32>, vector<2x64xf32>, vector<2x64xf32> -> vector<2x192xf32>
    %384 = tpu.concatenate %378, %379, %380, %381, %382, %383 in 0 : vector<2x192xf32>, vector<2x192xf32>, vector<2x192xf32>, vector<2x192xf32>, vector<2x192xf32>, vector<2x192xf32> -> vector<12x192xf32>
    %cst_93 = arith.constant dense<0.000000e+00> : vector<12x128xf32>
    %385 = tpu.matmul %384, %376, %cst_93 {dimension_numbers = #tpu.dot_dimension_numbers<[1], [0], [0], [1], [0, 0, 1, 1], [], []>} : vector<12x192xf32>, vector<192x128xf32>, vector<12x128xf32> -> vector<12x128xf32>
    %386 = vector.broadcast %377 : vector<1x128xf32> to vector<12x128xf32>
    %387 = arith.addf %385, %386 : vector<12x128xf32>
    %cst_94 = arith.constant 0.000000e+00 : f32
    %388 = vector.broadcast %cst_94 : f32 to vector<12x128xf32>
    %389 = arith.maximumf %387, %388 : vector<12x128xf32>
    %390 = vector.extract_strided_slice %389 {offsets = [0, 0], sizes = [2, 128], strides = [1, 1]} : vector<12x128xf32> to vector<2x128xf32>
    %391 = vector.extract_strided_slice %389 {offsets = [2, 0], sizes = [2, 128], strides = [1, 1]} : vector<12x128xf32> to vector<2x128xf32>
    %392 = arith.maximumf %390, %391 : vector<2x128xf32>
    %393 = vector.extract_strided_slice %389 {offsets = [4, 0], sizes = [2, 128], strides = [1, 1]} : vector<12x128xf32> to vector<2x128xf32>
    %394 = arith.maximumf %392, %393 : vector<2x128xf32>
    %395 = vector.extract_strided_slice %389 {offsets = [6, 0], sizes = [2, 128], strides = [1, 1]} : vector<12x128xf32> to vector<2x128xf32>
    %396 = arith.maximumf %394, %395 : vector<2x128xf32>
    %397 = vector.extract_strided_slice %389 {offsets = [8, 0], sizes = [2, 128], strides = [1, 1]} : vector<12x128xf32> to vector<2x128xf32>
    %398 = arith.maximumf %396, %397 : vector<2x128xf32>
    %399 = vector.extract_strided_slice %389 {offsets = [10, 0], sizes = [2, 128], strides = [1, 1]} : vector<12x128xf32> to vector<2x128xf32>
    %400 = arith.maximumf %398, %399 : vector<2x128xf32>
    %c0_95 = arith.constant 0 : index
    %c0_96 = arith.constant 0 : index
    %401 = vector.load %arg7[%c0_95, %c0_96] : memref<256x128xf32, #tpu.memory_space<vmem>>, vector<256x128xf32>
    %c0_97 = arith.constant 0 : index
    %c0_98 = arith.constant 0 : index
    %402 = vector.load %arg8[%c0_97, %c0_98] : memref<1x128xf32, #tpu.memory_space<vmem>>, vector<1x128xf32>
    %403 = tpu.concatenate %368, %369, %370, %371 in 1 : vector<2x64xf32>, vector<2x64xf32>, vector<2x64xf32>, vector<2x64xf32> -> vector<2x256xf32>
    %404 = tpu.concatenate %369, %370, %371, %372 in 1 : vector<2x64xf32>, vector<2x64xf32>, vector<2x64xf32>, vector<2x64xf32> -> vector<2x256xf32>
    %405 = tpu.concatenate %370, %371, %372, %373 in 1 : vector<2x64xf32>, vector<2x64xf32>, vector<2x64xf32>, vector<2x64xf32> -> vector<2x256xf32>
    %406 = tpu.concatenate %371, %372, %373, %374 in 1 : vector<2x64xf32>, vector<2x64xf32>, vector<2x64xf32>, vector<2x64xf32> -> vector<2x256xf32>
    %407 = tpu.concatenate %372, %373, %374, %375 in 1 : vector<2x64xf32>, vector<2x64xf32>, vector<2x64xf32>, vector<2x64xf32> -> vector<2x256xf32>
    %408 = tpu.concatenate %403, %404, %405, %406, %407 in 0 : vector<2x256xf32>, vector<2x256xf32>, vector<2x256xf32>, vector<2x256xf32>, vector<2x256xf32> -> vector<10x256xf32>
    %cst_99 = arith.constant dense<0.000000e+00> : vector<10x128xf32>
    %409 = tpu.matmul %408, %401, %cst_99 {dimension_numbers = #tpu.dot_dimension_numbers<[1], [0], [0], [1], [0, 0, 1, 1], [], []>} : vector<10x256xf32>, vector<256x128xf32>, vector<10x128xf32> -> vector<10x128xf32>
    %410 = vector.broadcast %402 : vector<1x128xf32> to vector<10x128xf32>
    %411 = arith.addf %409, %410 : vector<10x128xf32>
    %cst_100 = arith.constant 0.000000e+00 : f32
    %412 = vector.broadcast %cst_100 : f32 to vector<10x128xf32>
    %413 = arith.maximumf %411, %412 : vector<10x128xf32>
    %414 = vector.extract_strided_slice %413 {offsets = [0, 0], sizes = [2, 128], strides = [1, 1]} : vector<10x128xf32> to vector<2x128xf32>
    %415 = vector.extract_strided_slice %413 {offsets = [2, 0], sizes = [2, 128], strides = [1, 1]} : vector<10x128xf32> to vector<2x128xf32>
    %416 = arith.maximumf %414, %415 : vector<2x128xf32>
    %417 = vector.extract_strided_slice %413 {offsets = [4, 0], sizes = [2, 128], strides = [1, 1]} : vector<10x128xf32> to vector<2x128xf32>
    %418 = arith.maximumf %416, %417 : vector<2x128xf32>
    %419 = vector.extract_strided_slice %413 {offsets = [6, 0], sizes = [2, 128], strides = [1, 1]} : vector<10x128xf32> to vector<2x128xf32>
    %420 = arith.maximumf %418, %419 : vector<2x128xf32>
    %421 = vector.extract_strided_slice %413 {offsets = [8, 0], sizes = [2, 128], strides = [1, 1]} : vector<10x128xf32> to vector<2x128xf32>
    %422 = arith.maximumf %420, %421 : vector<2x128xf32>
    %c0_101 = arith.constant 0 : index
    %c0_102 = arith.constant 0 : index
    %423 = vector.load %arg9[%c0_101, %c0_102] : memref<320x128xf32, #tpu.memory_space<vmem>>, vector<320x128xf32>
    %c0_103 = arith.constant 0 : index
    %c0_104 = arith.constant 0 : index
    %424 = vector.load %arg10[%c0_103, %c0_104] : memref<1x128xf32, #tpu.memory_space<vmem>>, vector<1x128xf32>
    %425 = tpu.concatenate %368, %369, %370, %371, %372 in 1 : vector<2x64xf32>, vector<2x64xf32>, vector<2x64xf32>, vector<2x64xf32>, vector<2x64xf32> -> vector<2x320xf32>
    %426 = tpu.concatenate %369, %370, %371, %372, %373 in 1 : vector<2x64xf32>, vector<2x64xf32>, vector<2x64xf32>, vector<2x64xf32>, vector<2x64xf32> -> vector<2x320xf32>
    %427 = tpu.concatenate %370, %371, %372, %373, %374 in 1 : vector<2x64xf32>, vector<2x64xf32>, vector<2x64xf32>, vector<2x64xf32>, vector<2x64xf32> -> vector<2x320xf32>
    %428 = tpu.concatenate %371, %372, %373, %374, %375 in 1 : vector<2x64xf32>, vector<2x64xf32>, vector<2x64xf32>, vector<2x64xf32>, vector<2x64xf32> -> vector<2x320xf32>
    %429 = tpu.concatenate %425, %426, %427, %428 in 0 : vector<2x320xf32>, vector<2x320xf32>, vector<2x320xf32>, vector<2x320xf32> -> vector<8x320xf32>
    %cst_105 = arith.constant dense<0.000000e+00> : vector<8x128xf32>
    %430 = tpu.matmul %429, %423, %cst_105 {dimension_numbers = #tpu.dot_dimension_numbers<[1], [0], [0], [1], [0, 0, 1, 1], [], []>} : vector<8x320xf32>, vector<320x128xf32>, vector<8x128xf32> -> vector<8x128xf32>
    %431 = vector.broadcast %424 : vector<1x128xf32> to vector<8x128xf32>
    %432 = arith.addf %430, %431 : vector<8x128xf32>
    %cst_106 = arith.constant 0.000000e+00 : f32
    %433 = vector.broadcast %cst_106 : f32 to vector<8x128xf32>
    %434 = arith.maximumf %432, %433 : vector<8x128xf32>
    %435 = vector.extract_strided_slice %434 {offsets = [0, 0], sizes = [2, 128], strides = [1, 1]} : vector<8x128xf32> to vector<2x128xf32>
    %436 = vector.extract_strided_slice %434 {offsets = [2, 0], sizes = [2, 128], strides = [1, 1]} : vector<8x128xf32> to vector<2x128xf32>
    %437 = arith.maximumf %435, %436 : vector<2x128xf32>
    %438 = vector.extract_strided_slice %434 {offsets = [4, 0], sizes = [2, 128], strides = [1, 1]} : vector<8x128xf32> to vector<2x128xf32>
    %439 = arith.maximumf %437, %438 : vector<2x128xf32>
    %440 = vector.extract_strided_slice %434 {offsets = [6, 0], sizes = [2, 128], strides = [1, 1]} : vector<8x128xf32> to vector<2x128xf32>
    %441 = arith.maximumf %439, %440 : vector<2x128xf32>
    %442 = tpu.concatenate %400, %422, %441 in 1 : vector<2x128xf32>, vector<2x128xf32>, vector<2x128xf32> -> vector<2x384xf32>
    %c0_107 = arith.constant 0 : index
    %c0_108 = arith.constant 0 : index
    %443 = vector.load %arg11[%c0_107, %c0_108] : memref<384x128xf32, #tpu.memory_space<vmem>>, vector<384x128xf32>
    %cst_109 = arith.constant dense<0.000000e+00> : vector<2x128xf32>
    %444 = tpu.matmul %442, %443, %cst_109 {dimension_numbers = #tpu.dot_dimension_numbers<[1], [0], [0], [1], [0, 0, 1, 1], [], []>} : vector<2x384xf32>, vector<384x128xf32>, vector<2x128xf32> -> vector<2x128xf32>
    %c0_110 = arith.constant 0 : index
    %c0_111 = arith.constant 0 : index
    %445 = vector.load %arg12[%c0_110, %c0_111] : memref<1x128xf32, #tpu.memory_space<vmem>>, vector<1x128xf32>
    %446 = vector.broadcast %445 : vector<1x128xf32> to vector<2x128xf32>
    %447 = arith.addf %444, %446 : vector<2x128xf32>
    %c0_112 = arith.constant 0 : index
    %c0_113 = arith.constant 0 : index
    %448 = vector.load %arg13[%c0_112, %c0_113] : memref<2x128xf32, #tpu.memory_space<vmem>>, vector<2x128xf32>
    tpu.vector_store %arg13[%c0_112, %c0_113], %447 {strides = array<i32>} : memref<2x128xf32, #tpu.memory_space<vmem>>, vector<2x128xf32>,
    return
  }
  func.func @transform_0(%arg0: i32, %arg1: memref<2x8xi32, #tpu.memory_space<smem>>) -> (i32, i32, i32) {
    %c0_i32 = arith.constant 0 : i32
    %c0_i32_0 = arith.constant 0 : i32
    %c0_i32_1 = arith.constant 0 : i32
    %c0_i32_2 = arith.constant 0 : i32
    return %c0_i32, %c0_i32_0, %c0_i32_1 : i32, i32, i32
  }
  func.func @transform_1(%arg0: i32, %arg1: memref<2x8xi32, #tpu.memory_space<smem>>) -> (i32, i32) {
    %c0_i32 = arith.constant 0 : i32
    %c0_i32_0 = arith.constant 0 : i32
    %c0_i32_1 = arith.constant 0 : i32
    return %c0_i32, %c0_i32_0 : i32, i32
  }
  func.func @transform_2(%arg0: i32, %arg1: memref<2x8xi32, #tpu.memory_space<smem>>) -> (i32, i32) {
    %c0_i32 = arith.constant 0 : i32
    %c0_i32_0 = arith.constant 0 : i32
    %c0_i32_1 = arith.constant 0 : i32
    return %c0_i32, %c0_i32_0 : i32, i32
  }
  func.func @transform_3(%arg0: i32, %arg1: memref<2x8xi32, #tpu.memory_space<smem>>) -> (i32, i32) {
    %c0_i32 = arith.constant 0 : i32
    %c0_i32_0 = arith.constant 0 : i32
    %c0_i32_1 = arith.constant 0 : i32
    return %c0_i32, %c0_i32_0 : i32, i32
  }
  func.func @transform_4(%arg0: i32, %arg1: memref<2x8xi32, #tpu.memory_space<smem>>) -> (i32, i32) {
    %c0_i32 = arith.constant 0 : i32
    %c0_i32_0 = arith.constant 0 : i32
    %c0_i32_1 = arith.constant 0 : i32
    return %c0_i32, %c0_i32_0 : i32, i32
  }
  func.func @transform_5(%arg0: i32, %arg1: memref<2x8xi32, #tpu.memory_space<smem>>) -> (i32, i32) {
    %c0_i32 = arith.constant 0 : i32
    %c0_i32_0 = arith.constant 0 : i32
    %c0_i32_1 = arith.constant 0 : i32
    return %c0_i32, %c0_i32_0 : i32, i32
  }
  func.func @transform_6(%arg0: i32, %arg1: memref<2x8xi32, #tpu.memory_space<smem>>) -> (i32, i32) {
    %c0_i32 = arith.constant 0 : i32
    %c0_i32_0 = arith.constant 0 : i32
    %c0_i32_1 = arith.constant 0 : i32
    return %c0_i32, %c0_i32_0 : i32, i32
  }
  func.func @transform_7(%arg0: i32, %arg1: memref<2x8xi32, #tpu.memory_space<smem>>) -> (i32, i32) {
    %c0_i32 = arith.constant 0 : i32
    %c0_i32_0 = arith.constant 0 : i32
    %c0_i32_1 = arith.constant 0 : i32
    return %c0_i32, %c0_i32_0 : i32, i32
  }
  func.func @transform_8(%arg0: i32, %arg1: memref<2x8xi32, #tpu.memory_space<smem>>) -> (i32, i32) {
    %c0_i32 = arith.constant 0 : i32
    %c0_i32_0 = arith.constant 0 : i32
    %c0_i32_1 = arith.constant 0 : i32
    return %c0_i32, %c0_i32_0 : i32, i32
  }
  func.func @transform_9(%arg0: i32, %arg1: memref<2x8xi32, #tpu.memory_space<smem>>) -> (i32, i32) {
    %c0_i32 = arith.constant 0 : i32
    %c0_i32_0 = arith.constant 0 : i32
    %c0_i32_1 = arith.constant 0 : i32
    return %c0_i32, %c0_i32_0 : i32, i32
  }
  func.func @transform_10(%arg0: i32, %arg1: memref<2x8xi32, #tpu.memory_space<smem>>) -> (i32, i32) {
    %c0_i32 = arith.constant 0 : i32
    %c0_i32_0 = arith.constant 0 : i32
    %c0_i32_1 = arith.constant 0 : i32
    return %c0_i32, %c0_i32_0 : i32, i32
  }
  func.func @transform_11(%arg0: i32, %arg1: memref<2x8xi32, #tpu.memory_space<smem>>) -> (i32, i32) {
    %c0_i32 = arith.constant 0 : i32
    %c0_i32_0 = arith.constant 0 : i32
    %c0_i32_1 = arith.constant 0 : i32
    return %c0_i32, %c0_i32_0 : i32, i32
  }
}

</mosaic_0001>

<llo_original>
// kernel: lstmcnn_forward.1
$region0: #{lstmcnn_forward.1}
  #allocation0 [shape = 'u32[]', space=smem, size = 0x4, offset = 0x4, fixed_abs, tag = 'smem constant byte address 0x4 - core index']
  #allocation1 [shape = 'u32[144,128]{1,0:T(1,128)}', space=vmem, size = 0x12000, scoped, tag = 'internal scratch']
  #allocation2 [shape = 's32[1]{0}', space=sflag, size = 0x4, scoped, tag = 'scoped memory for lstmcnn_forward.1']
  #allocation3 [shape = 'u8[1024]{0}', space=smem, size = 0x400, scoped, tag = 'prefetched SMEM operand 0']
  %s0 = inlined_call_operand.vmem [shape: s32[2,8], index: 0, kind: input, shape index: {}]
  %s1 = inlined_call_operand.hbm [shape: f32[50,1,256], index: 1, kind: input, shape index: {}]
  %s2 = inlined_call_operand.vmem [shape: f32[32,128], index: 2, kind: input, shape index: {}]
  %s3 = inlined_call_operand.hbm [shape: f32[32,128], index: 3, kind: input, shape index: {}]
  %s4 = inlined_call_operand.hbm [shape: f32[192,128], index: 4, kind: input, shape index: {}]
  %s5 = inlined_call_operand.hbm [shape: f32[1,128], index: 5, kind: input, shape index: {}]
  %s6 = inlined_call_operand.hbm [shape: f32[256,128], index: 6, kind: input, shape index: {}]
  %s7 = inlined_call_operand.vmem [shape: f32[1,128], index: 7, kind: input, shape index: {}]
  %s8 = inlined_call_operand.hbm [shape: f32[320,128], index: 8, kind: input, shape index: {}]
  %s9 = inlined_call_operand.vmem [shape: f32[1,128], index: 9, kind: input, shape index: {}]
  %s10 = inlined_call_operand.hbm [shape: f32[384,128], index: 10, kind: input, shape index: {}]
  %s11 = inlined_call_operand.vmem [shape: f32[1,128], index: 11, kind: input, shape index: {}]
  %s12 = inlined_call_operand.hbm [shape: f32[2,128], index: 12, kind: output, shape index: {}]
  %s13 = sld [smem:[#allocation0]]
  $region82: #{lstmcnn_forward.1} parent=0
    _
  %s15 = ssub.s32 1, %s13
  %s16 = scalar_select 0, %s15, %s13
  %s17 = sshll.u32 %s0, 4
  %s18 = int_to_ptr.vmem [resolvable:$true] %s17
  %20 = dma.vmem_to_smem %s18, 32, [#allocation3], [#allocation2]
  %21 = dma.done [#allocation2], 32
  %22 = sfence
  $region1: #{lstmcnn_forward.1} parent=0
    #allocation4 [shape = 'u8[51200]{0}', space=vmem, size = 0xc800, scoped, tag = 'input window, operand 1, single buffered']
    #allocation5 [shape = 's32[1]{0}', space=sflag, size = 0x4, scoped, tag = 'scoped memory for lstmcnn_forward.1']
    #allocation6 [shape = 's32[1]{0}', space=sflag, size = 0x4, scoped, tag = 'scoped memory for lstmcnn_forward.1']
    #allocation7 [shape = 'u8[16384]{0}', space=vmem, size = 0x4000, scoped, tag = 'input window, operand 3, single buffered']
    #allocation8 [shape = 's32[1]{0}', space=sflag, size = 0x4, scoped, tag = 'scoped memory for lstmcnn_forward.1']
    #allocation9 [shape = 'u8[98304]{0}', space=vmem, size = 0x18000, scoped, tag = 'input window, operand 4, single buffered']
    #allocation10 [shape = 'u8[512]{0}', space=vmem, size = 0x400, scoped, tag = 'input window, operand 5, single buffered']
    #allocation11 [shape = 's32[1]{0}', space=sflag, size = 0x4, scoped, tag = 'scoped memory for lstmcnn_forward.1']
    #allocation12 [shape = 'u8[131072]{0}', space=vmem, size = 0x20000, scoped, tag = 'input window, operand 6, single buffered']
    #allocation13 [shape = 'u8[163840]{0}', space=vmem, size = 0x28000, scoped, tag = 'input window, operand 8, single buffered']
    #allocation14 [shape = 's32[1]{0}', space=sflag, size = 0x4, scoped, tag = 'scoped memory for lstmcnn_forward.1']
    #allocation15 [shape = 'u8[196608]{0}', space=vmem, size = 0x30000, scoped, tag = 'input window, operand 10, single buffered']
    #allocation16 [shape = 'u8[1024]{0}', space=vmem, size = 0x400, scoped, tag = 'output window, operand 0, single buffered']
    %23 = vsyncpa [#allocation5], 0
    %24 = vsyncpa [#allocation8], 0
    %25 = vsyncpa [#allocation11], 0
    %26 = vsyncpa [#allocation14], 0
    %27 = vsyncpa [#allocation6], 0
    // Predicated region
    $region2: #{lstmcnn_forward.1} parent=1 // pred_check
      _
    $region3: #{lstmcnn_forward.1} parent=1 // pred_check_branch
      %29 = sbr.rel (0) target = $region5
    $region4: #{lstmcnn_forward.1} parent=1 // pred_region
      %s31 = ssub.s32 1600, 1600
      %32 = vsyncadd [#allocation5], %s31
      %s33 = sshll.u32 [#allocation4], 4
      %s34 = int_to_ptr.vmem [resolvable:$true] %s33
      %39 = dma.hbm_to_vmem [thread:$0]  %s1, 1600, %s34, [#allocation5], 32, 32, 2
    $region5: #{lstmcnn_forward.1} parent=1 // pred_fallthru
      _
    // Predicated region
    $region6: #{lstmcnn_forward.1} parent=1 // pred_check
      _
    $region7: #{lstmcnn_forward.1} parent=1 // pred_check_branch
      %41 = sbr.rel (0) target = $region9
    $region8: #{lstmcnn_forward.1} parent=1 // pred_region
      _
    $region9: #{lstmcnn_forward.1} parent=1 // pred_fallthru
      _
    // Predicated region
    $region10: #{lstmcnn_forward.1} parent=1 // pred_check
      _
    $region11: #{lstmcnn_forward.1} parent=1 // pred_check_branch
      %43 = sbr.rel (0) target = $region13
    $region12: #{lstmcnn_forward.1} parent=1 // pred_region
      %s45 = ssub.s32 512, 512
      %46 = vsyncadd [#allocation8], %s45
      %s47 = sshll.u32 [#allocation7], 4
      %s48 = int_to_ptr.vmem [resolvable:$true] %s47
      %53 = dma.hbm_to_vmem [thread:$0]  %s3, 512, %s48, [#allocation8], 128, 128, 8
    $region13: #{lstmcnn_forward.1} parent=1 // pred_fallthru
      _
    // Predicated region
    $region14: #{lstmcnn_forward.1} parent=1 // pred_check
      _
    $region15: #{lstmcnn_forward.1} parent=1 // pred_check_branch
      %55 = sbr.rel (0) target = $region17
    $region16: #{lstmcnn_forward.1} parent=1 // pred_region
      %s57 = ssub.s32 3072, 3072
      %58 = vsyncadd [#allocation8], %s57
      %s59 = sshll.u32 [#allocation9], 4
      %s60 = int_to_ptr.vmem [resolvable:$true] %s59
      %65 = dma.hbm_to_vmem [thread:$0]  %s4, 3072, %s60, [#allocation8], 128, 128, 8
    $region17: #{lstmcnn_forward.1} parent=1 // pred_fallthru
      _
    // Predicated region
    $region18: #{lstmcnn_forward.1} parent=1 // pred_check
      _
    $region19: #{lstmcnn_forward.1} parent=1 // pred_check_branch
      %67 = sbr.rel (0) target = $region21
    $region20: #{lstmcnn_forward.1} parent=1 // pred_region
      %s69 = ssub.s32 16, 16
      %70 = vsyncadd [#allocation11], %s69
      %s72 = sshll.u32 [#allocation10], 4
      %s73 = int_to_ptr.vmem [resolvable:$true] %s72
      %75 = dma.hbm_to_vmem [thread:$0]  %s5, 16, %s73, [#allocation11]
    $region21: #{lstmcnn_forward.1} parent=1 // pred_fallthru
      _
    // Predicated region
    $region22: #{lstmcnn_forward.1} parent=1 // pred_check
      _
    $region23: #{lstmcnn_forward.1} parent=1 // pred_check_branch
      %77 = sbr.rel (0) target = $region25
    $region24: #{lstmcnn_forward.1} parent=1 // pred_region
      %s79 = ssub.s32 4096, 4096
      %80 = vsyncadd [#allocation11], %s79
      %s81 = sshll.u32 [#allocation12], 4
      %s82 = int_to_ptr.vmem [resolvable:$true] %s81
      %87 = dma.hbm_to_vmem [thread:$0]  %s6, 4096, %s82, [#allocation11], 128, 128, 8
    $region25: #{lstmcnn_forward.1} parent=1 // pred_fallthru
      _
    // Predicated region
    $region26: #{lstmcnn_forward.1} parent=1 // pred_check
      _
    $region27: #{lstmcnn_forward.1} parent=1 // pred_check_branch
      %89 = sbr.rel (0) target = $region29
    $region28: #{lstmcnn_forward.1} parent=1 // pred_region
      _
    $region29: #{lstmcnn_forward.1} parent=1 // pred_fallthru
      _
    // Predicated region
    $region30: #{lstmcnn_forward.1} parent=1 // pred_check
      _
    $region31: #{lstmcnn_forward.1} parent=1 // pred_check_branch
      %91 = sbr.rel (0) target = $region33
    $region32: #{lstmcnn_forward.1} parent=1 // pred_region
      %s93 = ssub.s32 5120, 5120
      %94 = vsyncadd [#allocation14], %s93
      %s95 = sshll.u32 [#allocation13], 4
      %s96 = int_to_ptr.vmem [resolvable:$true] %s95
      %101 = dma.hbm_to_vmem [thread:$0]  %s8, 5120, %s96, [#allocation14], 128, 128, 8
    $region33: #{lstmcnn_forward.1} parent=1 // pred_fallthru
      _
    // Predicated region
    $region34: #{lstmcnn_forward.1} parent=1 // pred_check
      _
    $region35: #{lstmcnn_forward.1} parent=1 // pred_check_branch
      %103 = sbr.rel (0) target = $region37
    $region36: #{lstmcnn_forward.1} parent=1 // pred_region
      _
    $region37: #{lstmcnn_forward.1} parent=1 // pred_fallthru
      _
    // Predicated region
    $region38: #{lstmcnn_forward.1} parent=1 // pred_check
      _
    $region39: #{lstmcnn_forward.1} parent=1 // pred_check_branch
      %105 = sbr.rel (0) target = $region41
    $region40: #{lstmcnn_forward.1} parent=1 // pred_region
      %s107 = ssub.s32 6144, 6144
      %108 = vsyncadd [#allocation14], %s107
      %s109 = sshll.u32 [#allocation15], 4
      %s110 = int_to_ptr.vmem [resolvable:$true] %s109
      %115 = dma.hbm_to_vmem [thread:$0]  %s10, 6144, %s110, [#allocation14], 128, 128, 8
    $region41: #{lstmcnn_forward.1} parent=1 // pred_fallthru
      _
    // Predicated region
    $region42: #{lstmcnn_forward.1} parent=1 // pred_check
      _
    $region43: #{lstmcnn_forward.1} parent=1 // pred_check_branch
      %117 = sbr.rel (0) target = $region45
    $region44: #{lstmcnn_forward.1} parent=1 // pred_region
      _
    $region45: #{lstmcnn_forward.1} parent=1 // pred_fallthru
      _
    // Predicated region
    $region46: #{lstmcnn_forward.1} parent=1 // pred_check
      _
    $region47: #{lstmcnn_forward.1} parent=1 // pred_check_branch
      %119 = sbr.rel (0) target = $region49
    $region48: #{lstmcnn_forward.1} parent=1 // pred_region
      %120 = dma.done [#allocation5], 1600
    $region49: #{lstmcnn_forward.1} parent=1 // pred_fallthru
      _
    // Predicated region
    $region50: #{lstmcnn_forward.1} parent=1 // pred_check
      _
    $region51: #{lstmcnn_forward.1} parent=1 // pred_check_branch
      %122 = sbr.rel (0) target = $region53
    $region52: #{lstmcnn_forward.1} parent=1 // pred_region
      %123 = dma.done [#allocation8], 512
    $region53: #{lstmcnn_forward.1} parent=1 // pred_fallthru
      _
    // Predicated region
    $region54: #{lstmcnn_forward.1} parent=1 // pred_check
      _
    $region55: #{lstmcnn_forward.1} parent=1 // pred_check_branch
      %125 = sbr.rel (0) target = $region57
    $region56: #{lstmcnn_forward.1} parent=1 // pred_region
      %126 = dma.done [#allocation8], 3072
    $region57: #{lstmcnn_forward.1} parent=1 // pred_fallthru
      _
    // Predicated region
    $region58: #{lstmcnn_forward.1} parent=1 // pred_check
      _
    $region59: #{lstmcnn_forward.1} parent=1 // pred_check_branch
      %128 = sbr.rel (0) target = $region61
    $region60: #{lstmcnn_forward.1} parent=1 // pred_region
      %129 = dma.done [#allocation11], 16
    $region61: #{lstmcnn_forward.1} parent=1 // pred_fallthru
      _
    // Predicated region
    $region62: #{lstmcnn_forward.1} parent=1 // pred_check
      _
    $region63: #{lstmcnn_forward.1} parent=1 // pred_check_branch
      %131 = sbr.rel (0) target = $region65
    $region64: #{lstmcnn_forward.1} parent=1 // pred_region
      %132 = dma.done [#allocation11], 4096
    $region65: #{lstmcnn_forward.1} parent=1 // pred_fallthru
      _
    // Predicated region
    $region66: #{lstmcnn_forward.1} parent=1 // pred_check
      _
    $region67: #{lstmcnn_forward.1} parent=1 // pred_check_branch
      %134 = sbr.rel (0) target = $region69
    $region68: #{lstmcnn_forward.1} parent=1 // pred_region
      %135 = dma.done [#allocation14], 5120
    $region69: #{lstmcnn_forward.1} parent=1 // pred_fallthru
      _
    // Predicated region
    $region70: #{lstmcnn_forward.1} parent=1 // pred_check
      _
    $region71: #{lstmcnn_forward.1} parent=1 // pred_check_branch
      %137 = sbr.rel (0) target = $region73
    $region72: #{lstmcnn_forward.1} parent=1 // pred_region
      %138 = dma.done [#allocation14], 6144
    $region73: #{lstmcnn_forward.1} parent=1 // pred_fallthru
      _
    %v139 = vld [vmem:[%s2] sm:$0xff]
    %v140 = vld [vmem:[%s2 + $0x8] sm:$0xff]
    %v141 = vld [vmem:[%s2 + $0x10] sm:$0xff]
    %v142 = vld [vmem:[%s2 + $0x18] sm:$0xff]
    %v143 = vld [vmem:[#allocation7] sm:$0xff]
    %v144 = vld [vmem:[#allocation7 + $0x8] sm:$0xff]
    %v145 = vld [vmem:[#allocation7 + $0x10] sm:$0xff]
    %v146 = vld [vmem:[#allocation7 + $0x18] sm:$0xff]
    %s147 = sld [smem:[#allocation3]]
    %s148 = smul.u32 %s147, 2
    %s149 = scalar_lea.vmem [#allocation4], %s148
    %v150 = vld [vmem:[%s149] sm:$0x3]
    %s151 = sld [smem:[#allocation3 + $0x80]]
    %s152 = smul.u32 %s151, 2
    %s153 = scalar_lea.vmem [#allocation4], %s152
    %v154 = vld [vmem:[%s153] sm:$0x3]
    %v156 = vlaneseq
    %v157 = vshrl.u32 %v156, 7
    %v158 = vsub.s32 0, %v157
    %v159 = vrot.slane %v150, %v158
    %v160 = vlaneseq
    %v161 = vshrl.u32 %v160, 7
    %v162 = vsub.s32 1, %v161
    %v163 = vrot.slane %v150, %v162
    %v167 = vlaneseq
    %v168 = vshrl.u32 %v167, 7
    %v169 = vsub.s32 0, %v168
    %v170 = vrot.slane %v154, %v169
    %v171 = vlaneseq
    %v172 = vshrl.u32 %v171, 7
    %v173 = vsub.s32 1, %v172
    %v174 = vrot.slane %v154, %v173
    %vm177 = vcmask 1040384
    %v178 = vsel %vm177, %v159, %v170
    %v179 = vsel %vm177, %v163, %v174
    %s180 = sld [smem:[#allocation3 + $0x1]]
    %s181 = smul.u32 %s180, 2
    %s182 = scalar_lea.vmem [#allocation4], %s181
    %v183 = vld [vmem:[%s182] sm:$0x3]
    %s184 = sld [smem:[#allocation3 + $0x81]]
    %s185 = smul.u32 %s184, 2
    %s186 = scalar_lea.vmem [#allocation4], %s185
    %v187 = vld [vmem:[%s186] sm:$0x3]
    %v189 = vlaneseq
    %v190 = vshrl.u32 %v189, 7
    %v191 = vsub.s32 0, %v190
    %v192 = vrot.slane %v183, %v191
    %v193 = vlaneseq
    %v194 = vshrl.u32 %v193, 7
    %v195 = vsub.s32 1, %v194
    %v196 = vrot.slane %v183, %v195
    %v200 = vlaneseq
    %v201 = vshrl.u32 %v200, 7
    %v202 = vsub.s32 0, %v201
    %v203 = vrot.slane %v187, %v202
    %v204 = vlaneseq
    %v205 = vshrl.u32 %v204, 7
    %v206 = vsub.s32 1, %v205
    %v207 = vrot.slane %v187, %v206
    %v210 = vsel %vm177, %v192, %v203
    %v211 = vsel %vm177, %v196, %v207
    %s212 = sld [smem:[#allocation3 + $0x2]]
    %s213 = smul.u32 %s212, 2
    %s214 = scalar_lea.vmem [#allocation4], %s213
    %v215 = vld [vmem:[%s214] sm:$0x3]
    %s216 = sld [smem:[#allocation3 + $0x82]]
    %s217 = smul.u32 %s216, 2
    %s218 = scalar_lea.vmem [#allocation4], %s217
    %v219 = vld [vmem:[%s218] sm:$0x3]
    %v221 = vlaneseq
    %v222 = vshrl.u32 %v221, 7
    %v223 = vsub.s32 0, %v222
    %v224 = vrot.slane %v215, %v223
    %v225 = vlaneseq
    %v226 = vshrl.u32 %v225, 7
    %v227 = vsub.s32 1, %v226
    %v228 = vrot.slane %v215, %v227
    %v232 = vlaneseq
    %v233 = vshrl.u32 %v232, 7
    %v234 = vsub.s32 0, %v233
    %v235 = vrot.slane %v219, %v234
    %v236 = vlaneseq
    %v237 = vshrl.u32 %v236, 7
    %v238 = vsub.s32 1, %v237
    %v239 = vrot.slane %v219, %v238
    %v242 = vsel %vm177, %v224, %v235
    %v243 = vsel %vm177, %v228, %v239
    %s244 = sld [smem:[#allocation3 + $0x3]]
    %s245 = smul.u32 %s244, 2
    %s246 = scalar_lea.vmem [#allocation4], %s245
    %v247 = vld [vmem:[%s246] sm:$0x3]
    %s248 = sld [smem:[#allocation3 + $0x83]]
    %s249 = smul.u32 %s248, 2
    %s250 = scalar_lea.vmem [#allocation4], %s249
    %v251 = vld [vmem:[%s250] sm:$0x3]
    %v253 = vlaneseq
    %v254 = vshrl.u32 %v253, 7
    %v255 = vsub.s32 0, %v254
    %v256 = vrot.slane %v247, %v255
    %v257 = vlaneseq
    %v258 = vshrl.u32 %v257, 7
    %v259 = vsub.s32 1, %v258
    %v260 = vrot.slane %v247, %v259
    %v264 = vlaneseq
    %v265 = vshrl.u32 %v264, 7
    %v266 = vsub.s32 0, %v265
    %v267 = vrot.slane %v251, %v266
    %v268 = vlaneseq
    %v269 = vshrl.u32 %v268, 7
    %v270 = vsub.s32 1, %v269
    %v271 = vrot.slane %v251, %v270
    %v274 = vsel %vm177, %v256, %v267
    %v275 = vsel %vm177, %v260, %v271
    %s276 = sld [smem:[#allocation3 + $0x4]]
    %s277 = smul.u32 %s276, 2
    %s278 = scalar_lea.vmem [#allocation4], %s277
    %v279 = vld [vmem:[%s278] sm:$0x3]
    %s280 = sld [smem:[#allocation3 + $0x84]]
    %s281 = smul.u32 %s280, 2
    %s282 = scalar_lea.vmem [#allocation4], %s281
    %v283 = vld [vmem:[%s282] sm:$0x3]
    %v285 = vlaneseq
    %v286 = vshrl.u32 %v285, 7
    %v287 = vsub.s32 0, %v286
    %v288 = vrot.slane %v279, %v287
    %v289 = vlaneseq
    %v290 = vshrl.u32 %v289, 7
    %v291 = vsub.s32 1, %v290
    %v292 = vrot.slane %v279, %v291
    %v296 = vlaneseq
    %v297 = vshrl.u32 %v296, 7
    %v298 = vsub.s32 0, %v297
    %v299 = vrot.slane %v283, %v298
    %v300 = vlaneseq
    %v301 = vshrl.u32 %v300, 7
    %v302 = vsub.s32 1, %v301
    %v303 = vrot.slane %v283, %v302
    %v306 = vsel %vm177, %v288, %v299
    %v307 = vsel %vm177, %v292, %v303
    %s308 = sld [smem:[#allocation3 + $0x5]]
    %s309 = smul.u32 %s308, 2
    %s310 = scalar_lea.vmem [#allocation4], %s309
    %v311 = vld [vmem:[%s310] sm:$0x3]
    %s312 = sld [smem:[#allocation3 + $0x85]]
    %s313 = smul.u32 %s312, 2
    %s314 = scalar_lea.vmem [#allocation4], %s313
    %v315 = vld [vmem:[%s314] sm:$0x3]
    %v317 = vlaneseq
    %v318 = vshrl.u32 %v317, 7
    %v319 = vsub.s32 0, %v318
    %v320 = vrot.slane %v311, %v319
    %v321 = vlaneseq
    %v322 = vshrl.u32 %v321, 7
    %v323 = vsub.s32 1, %v322
    %v324 = vrot.slane %v311, %v323
    %v328 = vlaneseq
    %v329 = vshrl.u32 %v328, 7
    %v330 = vsub.s32 0, %v329
    %v331 = vrot.slane %v315, %v330
    %v332 = vlaneseq
    %v333 = vshrl.u32 %v332, 7
    %v334 = vsub.s32 1, %v333
    %v335 = vrot.slane %v315, %v334
    %v338 = vsel %vm177, %v320, %v331
    %v339 = vsel %vm177, %v324, %v335
    %s340 = sld [smem:[#allocation3 + $0x6]]
    %s341 = smul.u32 %s340, 2
    %s342 = scalar_lea.vmem [#allocation4], %s341
    %v343 = vld [vmem:[%s342] sm:$0x3]
    %s344 = sld [smem:[#allocation3 + $0x86]]
    %s345 = smul.u32 %s344, 2
    %s346 = scalar_lea.vmem [#allocation4], %s345
    %v347 = vld [vmem:[%s346] sm:$0x3]
    %v349 = vlaneseq
    %v350 = vshrl.u32 %v349, 7
    %v351 = vsub.s32 0, %v350
    %v352 = vrot.slane %v343, %v351
    %v353 = vlaneseq
    %v354 = vshrl.u32 %v353, 7
    %v355 = vsub.s32 1, %v354
    %v356 = vrot.slane %v343, %v355
    %v360 = vlaneseq
    %v361 = vshrl.u32 %v360, 7
    %v362 = vsub.s32 0, %v361
    %v363 = vrot.slane %v347, %v362
    %v364 = vlaneseq
    %v365 = vshrl.u32 %v364, 7
    %v366 = vsub.s32 1, %v365
    %v367 = vrot.slane %v347, %v366
    %v370 = vsel %vm177, %v352, %v363
    %v371 = vsel %vm177, %v356, %v367
    %s372 = sld [smem:[#allocation3 + $0x7]]
    %s373 = smul.u32 %s372, 2
    %s374 = scalar_lea.vmem [#allocation4], %s373
    %v375 = vld [vmem:[%s374] sm:$0x3]
    %s376 = sld [smem:[#allocation3 + $0x87]]
    %s377 = smul.u32 %s376, 2
    %s378 = scalar_lea.vmem [#allocation4], %s377
    %v379 = vld [vmem:[%s378] sm:$0x3]
    %v381 = vlaneseq
    %v382 = vshrl.u32 %v381, 7
    %v383 = vsub.s32 0, %v382
    %v384 = vrot.slane %v375, %v383
    %v385 = vlaneseq
    %v386 = vshrl.u32 %v385, 7
    %v387 = vsub.s32 1, %v386
    %v388 = vrot.slane %v375, %v387
    %v392 = vlaneseq
    %v393 = vshrl.u32 %v392, 7
    %v394 = vsub.s32 0, %v393
    %v395 = vrot.slane %v379, %v394
    %v396 = vlaneseq
    %v397 = vshrl.u32 %v396, 7
    %v398 = vsub.s32 1, %v397
    %v399 = vrot.slane %v379, %v398
    %v402 = vsel %vm177, %v384, %v395
    %v403 = vsel %vm177, %v388, %v399
    %v404 = vxor.u32 %v178, 2147483648
    %v405 = vmul.f32 %v404, 1.442695
    %v406 = vpow.pop %v405
    %v407 = vadd.f32 %v406, 1.0
    %v408 = vrcp.pop %v407
    %v409 = vmul.f32 1.0, %v408
    %v410 = vtanh.pop %v178
    %412 = vrot.lane.b32.xlu0 %v410, 32
    %v413 = vpop.permute.xlu0 %412
    %v415 = vmul.f32 %v409, %v413
    %v416 = vtanh.pop %v415
    %418 = vrot.lane.b32.xlu0 %v416, 64
    %v419 = vpop.permute.xlu0 %418
    %v421 = vmul.f32 %v409, %v419
    %v422 = vxor.u32 %v403, 2147483648
    %v423 = vmul.f32 %v422, 1.442695
    %v424 = vpow.pop %v423
    %v425 = vadd.f32 %v424, 1.0
    %v426 = vrcp.pop %v425
    %v427 = vmul.f32 1.0, %v426
    %v428 = vtanh.pop %v403
    %430 = vrot.lane.b32.xlu0 %v428, 32
    %v431 = vpop.permute.xlu0 %430
    %v433 = vmul.f32 %v427, %v431
    %v434 = vtanh.pop %v433
    %436 = vrot.lane.b32.xlu0 %v434, 64
    %v437 = vpop.permute.xlu0 %436
    %v439 = vmul.f32 %v427, %v437
    %441 = vrot.lane.b32.xlu0 %v421, 64
    %v442 = vpop.permute.xlu0 %441
    %vm443 = vcmask 261120
    %v444 = vsel %vm443, %v442, 0
    %446 = vmatprep.subr.mxu0 0.0
    %447 = vmatpush1.msra.mxu0 %v139
    %448 = vmatprep.subr.mxu0 0.0
    %449 = vmatpush1.msra.mxu0 %v140
    %450 = vmatprep.subr.mxu0 0.0
    %451 = vmatpush1.msra.mxu0 %v141
    %452 = vmatprep.subr.mxu0 0.0
    %453 = vmatpush1.msra.mxu0 %v142
    %454 = vmatprep.subr.mxu0 0.0
    %455 = vmatpush1.msra.mxu0 0.0
    %456 = vmatprep.subr.mxu0 0.0
    %457 = vmatpush1.msra.mxu0 0.0
    %458 = vmatprep.subr.mxu0 0.0
    %459 = vmatpush1.msra.mxu0 0.0
    %460 = vmatprep.subr.mxu0 0.0
    %461 = vmatpush1.msra.mxu0 0.0
    %462 = vmatprep.subr.mxu0 0.0
    %463 = vmatpush1.msra.mxu0 0.0
    %464 = vmatprep.subr.mxu0 0.0
    %465 = vmatpush1.msra.mxu0 0.0
    %466 = vmatprep.subr.mxu0 0.0
    %467 = vmatpush1.msra.mxu0 0.0
    %468 = vmatprep.subr.mxu0 0.0
    %469 = vmatpush1.msra.mxu0 0.0
    %470 = vmatprep.subr.mxu0 0.0
    %471 = vmatpush1.msra.mxu0 0.0
    %472 = vmatprep.subr.mxu0 0.0
    %473 = vmatpush1.msra.mxu0 0.0
    %474 = vmatprep.subr.mxu0 0.0
    %475 = vmatpush1.msra.mxu0 0.0
    %476 = vmatprep.subr.mxu0 0.0
    %477 = vmatpush1.msra.mxu0 0.0
    %478 = vmatprep.subr.mxu0 0.0
    %479 = vmatpush1.msra.mxu0 0.0
    %480 = vmatprep.subr.mxu0 0.0
    %481 = vmatpush1.msra.mxu0 0.0
    %482 = vmatprep.subr.mxu0 0.0
    %483 = vmatpush1.msra.mxu0 0.0
    %484 = vmatprep.subr.mxu0 0.0
    %485 = vmatpush1.msra.mxu0 0.0
    %486 = vmatprep.subr.mxu0 0.0
    %487 = vmatpush1.msra.mxu0 0.0
    %488 = vmatprep.subr.mxu0 0.0
    %489 = vmatpush1.msra.mxu0 0.0
    %490 = vmatprep.subr.mxu0 0.0
    %491 = vmatpush1.msra.mxu0 0.0
    %492 = vmatprep.subr.mxu0 0.0
    %493 = vmatpush1.msra.mxu0 0.0
    %494 = vmatprep.subr.mxu0 0.0
    %495 = vmatpush1.msra.mxu0 0.0
    %496 = vmatprep.subr.mxu0 0.0
    %497 = vmatpush1.msra.mxu0 0.0
    %498 = vmatprep.subr.mxu0 0.0
    %499 = vmatpush1.msra.mxu0 0.0
    %500 = vmatprep.subr.mxu0 0.0
    %501 = vmatpush1.msra.mxu0 0.0
    %502 = vmatprep.subr.mxu0 0.0
    %503 = vmatpush1.msra.mxu0 0.0
    %504 = vmatprep.subr.mxu0 0.0
    %505 = vmatpush1.msra.mxu0 0.0
    %506 = vmatprep.subr.mxu0 0.0
    %507 = vmatpush1.msra.mxu0 0.0
    %508 = vmatprep.subr.mxu0 0.0
    %509 = vmatpush1.msra.mxu0 0.0
    %510 = vmatprep.mubr.f32.mxu0 0.0
    %511 = vmatmul.mubr.f32.gmra.mrb[0].mxu0 %v444
    %v512 = vpop.f32.mrb[0].mxu0
    %v513 = vadd.f32 0.0, %v512
    %v514 = vpop.f32.mrb[0].mxu0
    %515 = vdwg.mxu0
    %v516 = vadd.f32 %v210, %v513
    %v517 = vxor.u32 %v516, 2147483648
    %v518 = vmul.f32 %v517, 1.442695
    %v519 = vpow.pop %v518
    %v520 = vadd.f32 %v519, 1.0
    %v521 = vrcp.pop %v520
    %v522 = vmul.f32 1.0, %v521
    %v523 = vtanh.pop %v516
    %525 = vrot.lane.b32.xlu0 %v415, 32
    %v526 = vpop.permute.xlu0 %525
    %v528 = vmul.f32 %v522, %v526
    %530 = vrot.lane.b32.xlu0 %v523, 32
    %v531 = vpop.permute.xlu0 %530
    %v533 = vmul.f32 %v522, %v531
    %535 = vrot.lane.b32.xlu0 %v533, 32
    %v536 = vpop.permute.xlu0 %535
    %v538 = vadd.f32 %v528, %v536
    %v539 = vtanh.pop %v538
    %541 = vrot.lane.b32.xlu0 %v539, 32
    %v542 = vpop.permute.xlu0 %541
    %v544 = vmul.f32 %v522, %v542
    %546 = vrot.lane.b32.xlu0 %v439, 64
    %v547 = vpop.permute.xlu0 %546
    %v548 = vsel %vm443, %v547, 0
    %550 = vmatprep.subr.mxu0 0.0
    %551 = vmatpush1.msra.mxu0 %v143
    %552 = vmatprep.subr.mxu0 0.0
    %553 = vmatpush1.msra.mxu0 %v144
    %554 = vmatprep.subr.mxu0 0.0
    %555 = vmatpush1.msra.mxu0 %v145
    %556 = vmatprep.subr.mxu0 0.0
    %557 = vmatpush1.msra.mxu0 %v146
    %558 = vmatprep.subr.mxu0 0.0
    %559 = vmatpush1.msra.mxu0 0.0
    %560 = vmatprep.subr.mxu0 0.0
    %561 = vmatpush1.msra.mxu0 0.0
    %562 = vmatprep.subr.mxu0 0.0
    %563 = vmatpush1.msra.mxu0 0.0
    %564 = vmatprep.subr.mxu0 0.0
    %565 = vmatpush1.msra.mxu0 0.0
    %566 = vmatprep.subr.mxu0 0.0
    %567 = vmatpush1.msra.mxu0 0.0
    %568 = vmatprep.subr.mxu0 0.0
    %569 = vmatpush1.msra.mxu0 0.0
    %570 = vmatprep.subr.mxu0 0.0
    %571 = vmatpush1.msra.mxu0 0.0
    %572 = vmatprep.subr.mxu0 0.0
    %573 = vmatpush1.msra.mxu0 0.0
    %574 = vmatprep.subr.mxu0 0.0
    %575 = vmatpush1.msra.mxu0 0.0
    %576 = vmatprep.subr.mxu0 0.0
    %577 = vmatpush1.msra.mxu0 0.0
    %578 = vmatprep.subr.mxu0 0.0
    %579 = vmatpush1.msra.mxu0 0.0
    %580 = vmatprep.subr.mxu0 0.0
    %581 = vmatpush1.msra.mxu0 0.0
    %582 = vmatprep.subr.mxu0 0.0
    %583 = vmatpush1.msra.mxu0 0.0
    %584 = vmatprep.subr.mxu0 0.0
    %585 = vmatpush1.msra.mxu0 0.0
    %586 = vmatprep.subr.mxu0 0.0
    %587 = vmatpush1.msra.mxu0 0.0
    %588 = vmatprep.subr.mxu0 0.0
    %589 = vmatpush1.msra.mxu0 0.0
    %590 = vmatprep.subr.mxu0 0.0
    %591 = vmatpush1.msra.mxu0 0.0
    %592 = vmatprep.subr.mxu0 0.0
    %593 = vmatpush1.msra.mxu0 0.0
    %594 = vmatprep.subr.mxu0 0.0
    %595 = vmatpush1.msra.mxu0 0.0
    %596 = vmatprep.subr.mxu0 0.0
    %597 = vmatpush1.msra.mxu0 0.0
    %598 = vmatprep.subr.mxu0 0.0
    %599 = vmatpush1.msra.mxu0 0.0
    %600 = vmatprep.subr.mxu0 0.0
    %601 = vmatpush1.msra.mxu0 0.0
    %602 = vmatprep.subr.mxu0 0.0
    %603 = vmatpush1.msra.mxu0 0.0
    %604 = vmatprep.subr.mxu0 0.0
    %605 = vmatpush1.msra.mxu0 0.0
    %606 = vmatprep.subr.mxu0 0.0
    %607 = vmatpush1.msra.mxu0 0.0
    %608 = vmatprep.subr.mxu0 0.0
    %609 = vmatpush1.msra.mxu0 0.0
    %610 = vmatprep.subr.mxu0 0.0
    %611 = vmatpush1.msra.mxu0 0.0
    %612 = vmatprep.subr.mxu0 0.0
    %613 = vmatpush1.msra.mxu0 0.0
    %614 = vmatprep.mubr.f32.mxu0 0.0
    %615 = vmatmul.mubr.f32.gmra.mrb[0].mxu0 %v548
    %v616 = vpop.f32.mrb[0].mxu0
    %v617 = vadd.f32 0.0, %v616
    %v618 = vpop.f32.mrb[0].mxu0
    %619 = vdwg.mxu0
    %v620 = vadd.f32 %v371, %v617
    %v621 = vxor.u32 %v620, 2147483648
    %v622 = vmul.f32 %v621, 1.442695
    %v623 = vpow.pop %v622
    %v624 = vadd.f32 %v623, 1.0
    %v625 = vrcp.pop %v624
    %v626 = vmul.f32 1.0, %v625
    %v627 = vtanh.pop %v620
    %629 = vrot.lane.b32.xlu0 %v433, 32
    %v630 = vpop.permute.xlu0 %629
    %v632 = vmul.f32 %v626, %v630
    %634 = vrot.lane.b32.xlu0 %v627, 32
    %v635 = vpop.permute.xlu0 %634
    %v637 = vmul.f32 %v626, %v635
    %639 = vrot.lane.b32.xlu0 %v637, 32
    %v640 = vpop.permute.xlu0 %639
    %v642 = vadd.f32 %v632, %v640
    %v643 = vtanh.pop %v642
    %645 = vrot.lane.b32.xlu0 %v643, 32
    %v646 = vpop.permute.xlu0 %645
    %v648 = vmul.f32 %v626, %v646
    %650 = vrot.lane.b32.xlu0 %v544, 64
    %v651 = vpop.permute.xlu0 %650
    %v652 = vsel %vm443, %v651, 0
    %654 = vmatprep.subr.mxu0 0.0
    %655 = vmatpush1.msra.mxu0 %v139
    %656 = vmatprep.subr.mxu0 0.0
    %657 = vmatpush1.msra.mxu0 %v140
    %658 = vmatprep.subr.mxu0 0.0
    %659 = vmatpush1.msra.mxu0 %v141
    %660 = vmatprep.subr.mxu0 0.0
    %661 = vmatpush1.msra.mxu0 %v142
    %662 = vmatprep.subr.mxu0 0.0
    %663 = vmatpush1.msra.mxu0 0.0
    %664 = vmatprep.subr.mxu0 0.0
    %665 = vmatpush1.msra.mxu0 0.0
    %666 = vmatprep.subr.mxu0 0.0
    %667 = vmatpush1.msra.mxu0 0.0
    %668 = vmatprep.subr.mxu0 0.0
    %669 = vmatpush1.msra.mxu0 0.0
    %670 = vmatprep.subr.mxu0 0.0
    %671 = vmatpush1.msra.mxu0 0.0
    %672 = vmatprep.subr.mxu0 0.0
    %673 = vmatpush1.msra.mxu0 0.0
    %674 = vmatprep.subr.mxu0 0.0
    %675 = vmatpush1.msra.mxu0 0.0
    %676 = vmatprep.subr.mxu0 0.0
    %677 = vmatpush1.msra.mxu0 0.0
    %678 = vmatprep.subr.mxu0 0.0
    %679 = vmatpush1.msra.mxu0 0.0
    %680 = vmatprep.subr.mxu0 0.0
    %681 = vmatpush1.msra.mxu0 0.0
    %682 = vmatprep.subr.mxu0 0.0
    %683 = vmatpush1.msra.mxu0 0.0
    %684 = vmatprep.subr.mxu0 0.0
    %685 = vmatpush1.msra.mxu0 0.0
    %686 = vmatprep.subr.mxu0 0.0
    %687 = vmatpush1.msra.mxu0 0.0
    %688 = vmatprep.subr.mxu0 0.0
    %689 = vmatpush1.msra.mxu0 0.0
    %690 = vmatprep.subr.mxu0 0.0
    %691 = vmatpush1.msra.mxu0 0.0
    %692 = vmatprep.subr.mxu0 0.0
    %693 = vmatpush1.msra.mxu0 0.0
    %694 = vmatprep.subr.mxu0 0.0
    %695 = vmatpush1.msra.mxu0 0.0
    %696 = vmatprep.subr.mxu0 0.0
    %697 = vmatpush1.msra.mxu0 0.0
    %698 = vmatprep.subr.mxu0 0.0
    %699 = vmatpush1.msra.mxu0 0.0
    %700 = vmatprep.subr.mxu0 0.0
    %701 = vmatpush1.msra.mxu0 0.0
    %702 = vmatprep.subr.mxu0 0.0
    %703 = vmatpush1.msra.mxu0 0.0
    %704 = vmatprep.subr.mxu0 0.0
    %705 = vmatpush1.msra.mxu0 0.0
    %706 = vmatprep.subr.mxu0 0.0
    %707 = vmatpush1.msra.mxu0 0.0
    %708 = vmatprep.subr.mxu0 0.0
    %709 = vmatpush1.msra.mxu0 0.0
    %710 = vmatprep.subr.mxu0 0.0
    %711 = vmatpush1.msra.mxu0 0.0
    %712 = vmatprep.subr.mxu0 0.0
    %713 = vmatpush1.msra.mxu0 0.0
    %714 = vmatprep.subr.mxu0 0.0
    %715 = vmatpush1.msra.mxu0 0.0
    %716 = vmatprep.subr.mxu0 0.0
    %717 = vmatpush1.msra.mxu0 0.0
    %718 = vmatprep.mubr.f32.mxu0 0.0
    %719 = vmatmul.mubr.f32.gmra.mrb[0].mxu0 %v652
    %v720 = vpop.f32.mrb[0].mxu0
    %v721 = vadd.f32 0.0, %v720
    %v722 = vpop.f32.mrb[0].mxu0
    %723 = vdwg.mxu0
    %v724 = vadd.f32 %v242, %v721
    %v725 = vxor.u32 %v724, 2147483648
    %v726 = vmul.f32 %v725, 1.442695
    %v727 = vpow.pop %v726
    %v728 = vadd.f32 %v727, 1.0
    %v729 = vrcp.pop %v728
    %v730 = vmul.f32 1.0, %v729
    %v731 = vtanh.pop %v724
    %v732 = vmul.f32 %v730, %v538
    %734 = vrot.lane.b32.xlu0 %v731, 32
    %v735 = vpop.permute.xlu0 %734
    %v737 = vmul.f32 %v730, %v735
    %739 = vrot.lane.b32.xlu0 %v737, 32
    %v740 = vpop.permute.xlu0 %739
    %v742 = vadd.f32 %v732, %v740
    %v743 = vtanh.pop %v742
    %745 = vrot.lane.b32.xlu0 %v743, 32
    %v746 = vpop.permute.xlu0 %745
    %v748 = vmul.f32 %v730, %v746
    %750 = vrot.lane.b32.xlu0 %v648, 64
    %v751 = vpop.permute.xlu0 %750
    %v752 = vsel %vm443, %v751, 0
    %754 = vmatprep.subr.mxu0 0.0
    %755 = vmatpush1.msra.mxu0 %v143
    %756 = vmatprep.subr.mxu0 0.0
    %757 = vmatpush1.msra.mxu0 %v144
    %758 = vmatprep.subr.mxu0 0.0
    %759 = vmatpush1.msra.mxu0 %v145
    %760 = vmatprep.subr.mxu0 0.0
    %761 = vmatpush1.msra.mxu0 %v146
    %762 = vmatprep.subr.mxu0 0.0
    %763 = vmatpush1.msra.mxu0 0.0
    %764 = vmatprep.subr.mxu0 0.0
    %765 = vmatpush1.msra.mxu0 0.0
    %766 = vmatprep.subr.mxu0 0.0
    %767 = vmatpush1.msra.mxu0 0.0
    %768 = vmatprep.subr.mxu0 0.0
    %769 = vmatpush1.msra.mxu0 0.0
    %770 = vmatprep.subr.mxu0 0.0
    %771 = vmatpush1.msra.mxu0 0.0
    %772 = vmatprep.subr.mxu0 0.0
    %773 = vmatpush1.msra.mxu0 0.0
    %774 = vmatprep.subr.mxu0 0.0
    %775 = vmatpush1.msra.mxu0 0.0
    %776 = vmatprep.subr.mxu0 0.0
    %777 = vmatpush1.msra.mxu0 0.0
    %778 = vmatprep.subr.mxu0 0.0
    %779 = vmatpush1.msra.mxu0 0.0
    %780 = vmatprep.subr.mxu0 0.0
    %781 = vmatpush1.msra.mxu0 0.0
    %782 = vmatprep.subr.mxu0 0.0
    %783 = vmatpush1.msra.mxu0 0.0
    %784 = vmatprep.subr.mxu0 0.0
    %785 = vmatpush1.msra.mxu0 0.0
    %786 = vmatprep.subr.mxu0 0.0
    %787 = vmatpush1.msra.mxu0 0.0
    %788 = vmatprep.subr.mxu0 0.0
    %789 = vmatpush1.msra.mxu0 0.0
    %790 = vmatprep.subr.mxu0 0.0
    %791 = vmatpush1.msra.mxu0 0.0
    %792 = vmatprep.subr.mxu0 0.0
    %793 = vmatpush1.msra.mxu0 0.0
    %794 = vmatprep.subr.mxu0 0.0
    %795 = vmatpush1.msra.mxu0 0.0
    %796 = vmatprep.subr.mxu0 0.0
    %797 = vmatpush1.msra.mxu0 0.0
    %798 = vmatprep.subr.mxu0 0.0
    %799 = vmatpush1.msra.mxu0 0.0
    %800 = vmatprep.subr.mxu0 0.0
    %801 = vmatpush1.msra.mxu0 0.0
    %802 = vmatprep.subr.mxu0 0.0
    %803 = vmatpush1.msra.mxu0 0.0
    %804 = vmatprep.subr.mxu0 0.0
    %805 = vmatpush1.msra.mxu0 0.0
    %806 = vmatprep.subr.mxu0 0.0
    %807 = vmatpush1.msra.mxu0 0.0
    %808 = vmatprep.subr.mxu0 0.0
    %809 = vmatpush1.msra.mxu0 0.0
    %810 = vmatprep.subr.mxu0 0.0
    %811 = vmatpush1.msra.mxu0 0.0
    %812 = vmatprep.subr.mxu0 0.0
    %813 = vmatpush1.msra.mxu0 0.0
    %814 = vmatprep.subr.mxu0 0.0
    %815 = vmatpush1.msra.mxu0 0.0
    %816 = vmatprep.subr.mxu0 0.0
    %817 = vmatpush1.msra.mxu0 0.0
    %818 = vmatprep.mubr.f32.mxu0 0.0
    %819 = vmatmul.mubr.f32.gmra.mrb[0].mxu0 %v752
    %v820 = vpop.f32.mrb[0].mxu0
    %v821 = vadd.f32 0.0, %v820
    %v822 = vpop.f32.mrb[0].mxu0
    %823 = vdwg.mxu0
    %v824 = vadd.f32 %v339, %v821
    %v825 = vxor.u32 %v824, 2147483648
    %v826 = vmul.f32 %v825, 1.442695
    %v827 = vpow.pop %v826
    %v828 = vadd.f32 %v827, 1.0
    %v829 = vrcp.pop %v828
    %v830 = vmul.f32 1.0, %v829
    %v831 = vtanh.pop %v824
    %v832 = vmul.f32 %v830, %v642
    %834 = vrot.lane.b32.xlu0 %v831, 32
    %v835 = vpop.permute.xlu0 %834
    %v837 = vmul.f32 %v830, %v835
    %839 = vrot.lane.b32.xlu0 %v837, 32
    %v840 = vpop.permute.xlu0 %839
    %v842 = vadd.f32 %v832, %v840
    %v843 = vtanh.pop %v842
    %845 = vrot.lane.b32.xlu0 %v843, 32
    %v846 = vpop.permute.xlu0 %845
    %v848 = vmul.f32 %v830, %v846
    %850 = vrot.lane.b32.xlu0 %v748, 64
    %v851 = vpop.permute.xlu0 %850
    %v852 = vsel %vm443, %v851, 0
    %854 = vmatprep.subr.mxu0 0.0
    %855 = vmatpush1.msra.mxu0 %v139
    %856 = vmatprep.subr.mxu0 0.0
    %857 = vmatpush1.msra.mxu0 %v140
    %858 = vmatprep.subr.mxu0 0.0
    %859 = vmatpush1.msra.mxu0 %v141
    %860 = vmatprep.subr.mxu0 0.0
    %861 = vmatpush1.msra.mxu0 %v142
    %862 = vmatprep.subr.mxu0 0.0
    %863 = vmatpush1.msra.mxu0 0.0
    %864 = vmatprep.subr.mxu0 0.0
    %865 = vmatpush1.msra.mxu0 0.0
    %866 = vmatprep.subr.mxu0 0.0
    %867 = vmatpush1.msra.mxu0 0.0
    %868 = vmatprep.subr.mxu0 0.0
    %869 = vmatpush1.msra.mxu0 0.0
    %870 = vmatprep.subr.mxu0 0.0
    %871 = vmatpush1.msra.mxu0 0.0
    %872 = vmatprep.subr.mxu0 0.0
    %873 = vmatpush1.msra.mxu0 0.0
    %874 = vmatprep.subr.mxu0 0.0
    %875 = vmatpush1.msra.mxu0 0.0
    %876 = vmatprep.subr.mxu0 0.0
    %877 = vmatpush1.msra.mxu0 0.0
    %878 = vmatprep.subr.mxu0 0.0
    %879 = vmatpush1.msra.mxu0 0.0
    %880 = vmatprep.subr.mxu0 0.0
    %881 = vmatpush1.msra.mxu0 0.0
    %882 = vmatprep.subr.mxu0 0.0
    %883 = vmatpush1.msra.mxu0 0.0
    %884 = vmatprep.subr.mxu0 0.0
    %885 = vmatpush1.msra.mxu0 0.0
    %886 = vmatprep.subr.mxu0 0.0
    %887 = vmatpush1.msra.mxu0 0.0
    %888 = vmatprep.subr.mxu0 0.0
    %889 = vmatpush1.msra.mxu0 0.0
    %890 = vmatprep.subr.mxu0 0.0
    %891 = vmatpush1.msra.mxu0 0.0
    %892 = vmatprep.subr.mxu0 0.0
    %893 = vmatpush1.msra.mxu0 0.0
    %894 = vmatprep.subr.mxu0 0.0
    %895 = vmatpush1.msra.mxu0 0.0
    %896 = vmatprep.subr.mxu0 0.0
    %897 = vmatpush1.msra.mxu0 0.0
    %898 = vmatprep.subr.mxu0 0.0
    %899 = vmatpush1.msra.mxu0 0.0
    %900 = vmatprep.subr.mxu0 0.0
    %901 = vmatpush1.msra.mxu0 0.0
    %902 = vmatprep.subr.mxu0 0.0
    %903 = vmatpush1.msra.mxu0 0.0
    %904 = vmatprep.subr.mxu0 0.0
    %905 = vmatpush1.msra.mxu0 0.0
    %906 = vmatprep.subr.mxu0 0.0
    %907 = vmatpush1.msra.mxu0 0.0
    %908 = vmatprep.subr.mxu0 0.0
    %909 = vmatpush1.msra.mxu0 0.0
    %910 = vmatprep.subr.mxu0 0.0
    %911 = vmatpush1.msra.mxu0 0.0
    %912 = vmatprep.subr.mxu0 0.0
    %913 = vmatpush1.msra.mxu0 0.0
    %914 = vmatprep.subr.mxu0 0.0
    %915 = vmatpush1.msra.mxu0 0.0
    %916 = vmatprep.subr.mxu0 0.0
    %917 = vmatpush1.msra.mxu0 0.0
    %918 = vmatprep.mubr.f32.mxu0 0.0
    %919 = vmatmul.mubr.f32.gmra.mrb[0].mxu0 %v852
    %v920 = vpop.f32.mrb[0].mxu0
    %v921 = vadd.f32 0.0, %v920
    %v922 = vpop.f32.mrb[0].mxu0
    %923 = vdwg.mxu0
    %v924 = vadd.f32 %v274, %v921
    %v925 = vxor.u32 %v924, 2147483648
    %v926 = vmul.f32 %v925, 1.442695
    %v927 = vpow.pop %v926
    %v928 = vadd.f32 %v927, 1.0
    %v929 = vrcp.pop %v928
    %v930 = vmul.f32 1.0, %v929
    %v931 = vtanh.pop %v924
    %v932 = vmul.f32 %v930, %v742
    %934 = vrot.lane.b32.xlu0 %v931, 32
    %v935 = vpop.permute.xlu0 %934
    %v937 = vmul.f32 %v930, %v935
    %939 = vrot.lane.b32.xlu0 %v937, 32
    %v940 = vpop.permute.xlu0 %939
    %v942 = vadd.f32 %v932, %v940
    %v943 = vtanh.pop %v942
    %945 = vrot.lane.b32.xlu0 %v943, 32
    %v946 = vpop.permute.xlu0 %945
    %v948 = vmul.f32 %v930, %v946
    %950 = vrot.lane.b32.xlu0 %v848, 64
    %v951 = vpop.permute.xlu0 %950
    %v952 = vsel %vm443, %v951, 0
    %954 = vmatprep.subr.mxu0 0.0
    %955 = vmatpush1.msra.mxu0 %v143
    %956 = vmatprep.subr.mxu0 0.0
    %957 = vmatpush1.msra.mxu0 %v144
    %958 = vmatprep.subr.mxu0 0.0
    %959 = vmatpush1.msra.mxu0 %v145
    %960 = vmatprep.subr.mxu0 0.0
    %961 = vmatpush1.msra.mxu0 %v146
    %962 = vmatprep.subr.mxu0 0.0
    %963 = vmatpush1.msra.mxu0 0.0
    %964 = vmatprep.subr.mxu0 0.0
    %965 = vmatpush1.msra.mxu0 0.0
    %966 = vmatprep.subr.mxu0 0.0
    %967 = vmatpush1.msra.mxu0 0.0
    %968 = vmatprep.subr.mxu0 0.0
    %969 = vmatpush1.msra.mxu0 0.0
    %970 = vmatprep.subr.mxu0 0.0
    %971 = vmatpush1.msra.mxu0 0.0
    %972 = vmatprep.subr.mxu0 0.0
    %973 = vmatpush1.msra.mxu0 0.0
    %974 = vmatprep.subr.mxu0 0.0
    %975 = vmatpush1.msra.mxu0 0.0
    %976 = vmatprep.subr.mxu0 0.0
    %977 = vmatpush1.msra.mxu0 0.0
    %978 = vmatprep.subr.mxu0 0.0
    %979 = vmatpush1.msra.mxu0 0.0
    %980 = vmatprep.subr.mxu0 0.0
    %981 = vmatpush1.msra.mxu0 0.0
    %982 = vmatprep.subr.mxu0 0.0
    %983 = vmatpush1.msra.mxu0 0.0
    %984 = vmatprep.subr.mxu0 0.0
    %985 = vmatpush1.msra.mxu0 0.0
    %986 = vmatprep.subr.mxu0 0.0
    %987 = vmatpush1.msra.mxu0 0.0
    %988 = vmatprep.subr.mxu0 0.0
    %989 = vmatpush1.msra.mxu0 0.0
    %990 = vmatprep.subr.mxu0 0.0
    %991 = vmatpush1.msra.mxu0 0.0
    %992 = vmatprep.subr.mxu0 0.0
    %993 = vmatpush1.msra.mxu0 0.0
    %994 = vmatprep.subr.mxu0 0.0
    %995 = vmatpush1.msra.mxu0 0.0
    %996 = vmatprep.subr.mxu0 0.0
    %997 = vmatpush1.msra.mxu0 0.0
    %998 = vmatprep.subr.mxu0 0.0
    %999 = vmatpush1.msra.mxu0 0.0
    %1000 = vmatprep.subr.mxu0 0.0
    %1001 = vmatpush1.msra.mxu0 0.0
    %1002 = vmatprep.subr.mxu0 0.0
    %1003 = vmatpush1.msra.mxu0 0.0
    %1004 = vmatprep.subr.mxu0 0.0
    %1005 = vmatpush1.msra.mxu0 0.0
    %1006 = vmatprep.subr.mxu0 0.0
    %1007 = vmatpush1.msra.mxu0 0.0
    %1008 = vmatprep.subr.mxu0 0.0
    %1009 = vmatpush1.msra.mxu0 0.0
    %1010 = vmatprep.subr.mxu0 0.0
    %1011 = vmatpush1.msra.mxu0 0.0
    %1012 = vmatprep.subr.mxu0 0.0
    %1013 = vmatpush1.msra.mxu0 0.0
    %1014 = vmatprep.subr.mxu0 0.0
    %1015 = vmatpush1.msra.mxu0 0.0
    %1016 = vmatprep.subr.mxu0 0.0
    %1017 = vmatpush1.msra.mxu0 0.0
    %1018 = vmatprep.mubr.f32.mxu0 0.0
    %1019 = vmatmul.mubr.f32.gmra.mrb[0].mxu0 %v952
    %v1020 = vpop.f32.mrb[0].mxu0
    %v1021 = vadd.f32 0.0, %v1020
    %v1022 = vpop.f32.mrb[0].mxu0
    %1023 = vdwg.mxu0
    %v1024 = vadd.f32 %v307, %v1021
    %v1025 = vxor.u32 %v1024, 2147483648
    %v1026 = vmul.f32 %v1025, 1.442695
    %v1027 = vpow.pop %v1026
    %v1028 = vadd.f32 %v1027, 1.0
    %v1029 = vrcp.pop %v1028
    %v1030 = vmul.f32 1.0, %v1029
    %v1031 = vtanh.pop %v1024
    %v1032 = vmul.f32 %v1030, %v842
    %1034 = vrot.lane.b32.xlu0 %v1031, 32
    %v1035 = vpop.permute.xlu0 %1034
    %v1037 = vmul.f32 %v1030, %v1035
    %1039 = vrot.lane.b32.xlu0 %v1037, 32
    %v1040 = vpop.permute.xlu0 %1039
    %v1042 = vadd.f32 %v1032, %v1040
    %v1043 = vtanh.pop %v1042
    %1045 = vrot.lane.b32.xlu0 %v1043, 32
    %v1046 = vpop.permute.xlu0 %1045
    %v1048 = vmul.f32 %v1030, %v1046
    %1050 = vrot.lane.b32.xlu0 %v948, 64
    %v1051 = vpop.permute.xlu0 %1050
    %v1052 = vsel %vm443, %v1051, 0
    %1054 = vmatprep.subr.mxu0 0.0
    %1055 = vmatpush1.msra.mxu0 %v139
    %1056 = vmatprep.subr.mxu0 0.0
    %1057 = vmatpush1.msra.mxu0 %v140
    %1058 = vmatprep.subr.mxu0 0.0
    %1059 = vmatpush1.msra.mxu0 %v141
    %1060 = vmatprep.subr.mxu0 0.0
    %1061 = vmatpush1.msra.mxu0 %v142
    %1062 = vmatprep.subr.mxu0 0.0
    %1063 = vmatpush1.msra.mxu0 0.0
    %1064 = vmatprep.subr.mxu0 0.0
    %1065 = vmatpush1.msra.mxu0 0.0
    %1066 = vmatprep.subr.mxu0 0.0
    %1067 = vmatpush1.msra.mxu0 0.0
    %1068 = vmatprep.subr.mxu0 0.0
    %1069 = vmatpush1.msra.mxu0 0.0
    %1070 = vmatprep.subr.mxu0 0.0
    %1071 = vmatpush1.msra.mxu0 0.0
    %1072 = vmatprep.subr.mxu0 0.0
    %1073 = vmatpush1.msra.mxu0 0.0
    %1074 = vmatprep.subr.mxu0 0.0
    %1075 = vmatpush1.msra.mxu0 0.0
    %1076 = vmatprep.subr.mxu0 0.0
    %1077 = vmatpush1.msra.mxu0 0.0
    %1078 = vmatprep.subr.mxu0 0.0
    %1079 = vmatpush1.msra.mxu0 0.0
    %1080 = vmatprep.subr.mxu0 0.0
    %1081 = vmatpush1.msra.mxu0 0.0
    %1082 = vmatprep.subr.mxu0 0.0
    %1083 = vmatpush1.msra.mxu0 0.0
    %1084 = vmatprep.subr.mxu0 0.0
    %1085 = vmatpush1.msra.mxu0 0.0
    %1086 = vmatprep.subr.mxu0 0.0
    %1087 = vmatpush1.msra.mxu0 0.0
    %1088 = vmatprep.subr.mxu0 0.0
    %1089 = vmatpush1.msra.mxu0 0.0
    %1090 = vmatprep.subr.mxu0 0.0
    %1091 = vmatpush1.msra.mxu0 0.0
    %1092 = vmatprep.subr.mxu0 0.0
    %1093 = vmatpush1.msra.mxu0 0.0
    %1094 = vmatprep.subr.mxu0 0.0
    %1095 = vmatpush1.msra.mxu0 0.0
    %1096 = vmatprep.subr.mxu0 0.0
    %1097 = vmatpush1.msra.mxu0 0.0
    %1098 = vmatprep.subr.mxu0 0.0
    %1099 = vmatpush1.msra.mxu0 0.0
    %1100 = vmatprep.subr.mxu0 0.0
    %1101 = vmatpush1.msra.mxu0 0.0
    %1102 = vmatprep.subr.mxu0 0.0
    %1103 = vmatpush1.msra.mxu0 0.0
    %1104 = vmatprep.subr.mxu0 0.0
    %1105 = vmatpush1.msra.mxu0 0.0
    %1106 = vmatprep.subr.mxu0 0.0
    %1107 = vmatpush1.msra.mxu0 0.0
    %1108 = vmatprep.subr.mxu0 0.0
    %1109 = vmatpush1.msra.mxu0 0.0
    %1110 = vmatprep.subr.mxu0 0.0
    %1111 = vmatpush1.msra.mxu0 0.0
    %1112 = vmatprep.subr.mxu0 0.0
    %1113 = vmatpush1.msra.mxu0 0.0
    %1114 = vmatprep.subr.mxu0 0.0
    %1115 = vmatpush1.msra.mxu0 0.0
    %1116 = vmatprep.subr.mxu0 0.0
    %1117 = vmatpush1.msra.mxu0 0.0
    %1118 = vmatprep.mubr.f32.mxu0 0.0
    %1119 = vmatmul.mubr.f32.gmra.mrb[0].mxu0 %v1052
    %v1120 = vpop.f32.mrb[0].mxu0
    %v1121 = vadd.f32 0.0, %v1120
    %v1122 = vpop.f32.mrb[0].mxu0
    %1123 = vdwg.mxu0
    %v1124 = vadd.f32 %v306, %v1121
    %v1125 = vxor.u32 %v1124, 2147483648
    %v1126 = vmul.f32 %v1125, 1.442695
    %v1127 = vpow.pop %v1126
    %v1128 = vadd.f32 %v1127, 1.0
    %v1129 = vrcp.pop %v1128
    %v1130 = vmul.f32 1.0, %v1129
    %v1131 = vtanh.pop %v1124
    %v1132 = vmul.f32 %v1130, %v942
    %1134 = vrot.lane.b32.xlu0 %v1131, 32
    %v1135 = vpop.permute.xlu0 %1134
    %v1137 = vmul.f32 %v1130, %v1135
    %1139 = vrot.lane.b32.xlu0 %v1137, 32
    %v1140 = vpop.permute.xlu0 %1139
    %v1142 = vadd.f32 %v1132, %v1140
    %v1143 = vtanh.pop %v1142
    %1145 = vrot.lane.b32.xlu0 %v1143, 32
    %v1146 = vpop.permute.xlu0 %1145
    %v1148 = vmul.f32 %v1130, %v1146
    %1150 = vrot.lane.b32.xlu0 %v1048, 64
    %v1151 = vpop.permute.xlu0 %1150
    %v1152 = vsel %vm443, %v1151, 0
    %1154 = vmatprep.subr.mxu0 0.0
    %1155 = vmatpush1.msra.mxu0 %v143
    %1156 = vmatprep.subr.mxu0 0.0
    %1157 = vmatpush1.msra.mxu0 %v144
    %1158 = vmatprep.subr.mxu0 0.0
    %1159 = vmatpush1.msra.mxu0 %v145
    %1160 = vmatprep.subr.mxu0 0.0
    %1161 = vmatpush1.msra.mxu0 %v146
    %1162 = vmatprep.subr.mxu0 0.0
    %1163 = vmatpush1.msra.mxu0 0.0
    %1164 = vmatprep.subr.mxu0 0.0
    %1165 = vmatpush1.msra.mxu0 0.0
    %1166 = vmatprep.subr.mxu0 0.0
    %1167 = vmatpush1.msra.mxu0 0.0
    %1168 = vmatprep.subr.mxu0 0.0
    %1169 = vmatpush1.msra.mxu0 0.0
    %1170 = vmatprep.subr.mxu0 0.0
    %1171 = vmatpush1.msra.mxu0 0.0
    %1172 = vmatprep.subr.mxu0 0.0
    %1173 = vmatpush1.msra.mxu0 0.0
    %1174 = vmatprep.subr.mxu0 0.0
    %1175 = vmatpush1.msra.mxu0 0.0
    %1176 = vmatprep.subr.mxu0 0.0
    %1177 = vmatpush1.msra.mxu0 0.0
    %1178 = vmatprep.subr.mxu0 0.0
    %1179 = vmatpush1.msra.mxu0 0.0
    %1180 = vmatprep.subr.mxu0 0.0
    %1181 = vmatpush1.msra.mxu0 0.0
    %1182 = vmatprep.subr.mxu0 0.0
    %1183 = vmatpush1.msra.mxu0 0.0
    %1184 = vmatprep.subr.mxu0 0.0
    %1185 = vmatpush1.msra.mxu0 0.0
    %1186 = vmatprep.subr.mxu0 0.0
    %1187 = vmatpush1.msra.mxu0 0.0
    %1188 = vmatprep.subr.mxu0 0.0
    %1189 = vmatpush1.msra.mxu0 0.0
    %1190 = vmatprep.subr.mxu0 0.0
    %1191 = vmatpush1.msra.mxu0 0.0
    %1192 = vmatprep.subr.mxu0 0.0
    %1193 = vmatpush1.msra.mxu0 0.0
    %1194 = vmatprep.subr.mxu0 0.0
    %1195 = vmatpush1.msra.mxu0 0.0
    %1196 = vmatprep.subr.mxu0 0.0
    %1197 = vmatpush1.msra.mxu0 0.0
    %1198 = vmatprep.subr.mxu0 0.0
    %1199 = vmatpush1.msra.mxu0 0.0
    %1200 = vmatprep.subr.mxu0 0.0
    %1201 = vmatpush1.msra.mxu0 0.0
    %1202 = vmatprep.subr.mxu0 0.0
    %1203 = vmatpush1.msra.mxu0 0.0
    %1204 = vmatprep.subr.mxu0 0.0
    %1205 = vmatpush1.msra.mxu0 0.0
    %1206 = vmatprep.subr.mxu0 0.0
    %1207 = vmatpush1.msra.mxu0 0.0
    %1208 = vmatprep.subr.mxu0 0.0
    %1209 = vmatpush1.msra.mxu0 0.0
    %1210 = vmatprep.subr.mxu0 0.0
    %1211 = vmatpush1.msra.mxu0 0.0
    %1212 = vmatprep.subr.mxu0 0.0
    %1213 = vmatpush1.msra.mxu0 0.0
    %1214 = vmatprep.subr.mxu0 0.0
    %1215 = vmatpush1.msra.mxu0 0.0
    %1216 = vmatprep.subr.mxu0 0.0
    %1217 = vmatpush1.msra.mxu0 0.0
    %1218 = vmatprep.mubr.f32.mxu0 0.0
    %1219 = vmatmul.mubr.f32.gmra.mrb[0].mxu0 %v1152
    %v1220 = vpop.f32.mrb[0].mxu0
    %v1221 = vadd.f32 0.0, %v1220
    %v1222 = vpop.f32.mrb[0].mxu0
    %1223 = vdwg.mxu0
    %v1224 = vadd.f32 %v275, %v1221
    %v1225 = vxor.u32 %v1224, 2147483648
    %v1226 = vmul.f32 %v1225, 1.442695
    %v1227 = vpow.pop %v1226
    %v1228 = vadd.f32 %v1227, 1.0
    %v1229 = vrcp.pop %v1228
    %v1230 = vmul.f32 1.0, %v1229
    %v1231 = vtanh.pop %v1224
    %v1232 = vmul.f32 %v1230, %v1042
    %1234 = vrot.lane.b32.xlu0 %v1231, 32
    %v1235 = vpop.permute.xlu0 %1234
    %v1237 = vmul.f32 %v1230, %v1235
    %1239 = vrot.lane.b32.xlu0 %v1237, 32
    %v1240 = vpop.permute.xlu0 %1239
    %v1242 = vadd.f32 %v1232, %v1240
    %v1243 = vtanh.pop %v1242
    %1245 = vrot.lane.b32.xlu0 %v1243, 32
    %v1246 = vpop.permute.xlu0 %1245
    %v1248 = vmul.f32 %v1230, %v1246
    %1250 = vrot.lane.b32.xlu0 %v1148, 64
    %v1251 = vpop.permute.xlu0 %1250
    %v1252 = vsel %vm443, %v1251, 0
    %1254 = vmatprep.subr.mxu0 0.0
    %1255 = vmatpush1.msra.mxu0 %v139
    %1256 = vmatprep.subr.mxu0 0.0
    %1257 = vmatpush1.msra.mxu0 %v140
    %1258 = vmatprep.subr.mxu0 0.0
    %1259 = vmatpush1.msra.mxu0 %v141
    %1260 = vmatprep.subr.mxu0 0.0
    %1261 = vmatpush1.msra.mxu0 %v142
    %1262 = vmatprep.subr.mxu0 0.0
    %1263 = vmatpush1.msra.mxu0 0.0
    %1264 = vmatprep.subr.mxu0 0.0
    %1265 = vmatpush1.msra.mxu0 0.0
    %1266 = vmatprep.subr.mxu0 0.0
    %1267 = vmatpush1.msra.mxu0 0.0
    %1268 = vmatprep.subr.mxu0 0.0
    %1269 = vmatpush1.msra.mxu0 0.0
    %1270 = vmatprep.subr.mxu0 0.0
    %1271 = vmatpush1.msra.mxu0 0.0
    %1272 = vmatprep.subr.mxu0 0.0
    %1273 = vmatpush1.msra.mxu0 0.0
    %1274 = vmatprep.subr.mxu0 0.0
    %1275 = vmatpush1.msra.mxu0 0.0
    %1276 = vmatprep.subr.mxu0 0.0
    %1277 = vmatpush1.msra.mxu0 0.0
    %1278 = vmatprep.subr.mxu0 0.0
    %1279 = vmatpush1.msra.mxu0 0.0
    %1280 = vmatprep.subr.mxu0 0.0
    %1281 = vmatpush1.msra.mxu0 0.0
    %1282 = vmatprep.subr.mxu0 0.0
    %1283 = vmatpush1.msra.mxu0 0.0
    %1284 = vmatprep.subr.mxu0 0.0
    %1285 = vmatpush1.msra.mxu0 0.0
    %1286 = vmatprep.subr.mxu0 0.0
    %1287 = vmatpush1.msra.mxu0 0.0
    %1288 = vmatprep.subr.mxu0 0.0
    %1289 = vmatpush1.msra.mxu0 0.0
    %1290 = vmatprep.subr.mxu0 0.0
    %1291 = vmatpush1.msra.mxu0 0.0
    %1292 = vmatprep.subr.mxu0 0.0
    %1293 = vmatpush1.msra.mxu0 0.0
    %1294 = vmatprep.subr.mxu0 0.0
    %1295 = vmatpush1.msra.mxu0 0.0
    %1296 = vmatprep.subr.mxu0 0.0
    %1297 = vmatpush1.msra.mxu0 0.0
    %1298 = vmatprep.subr.mxu0 0.0
    %1299 = vmatpush1.msra.mxu0 0.0
    %1300 = vmatprep.subr.mxu0 0.0
    %1301 = vmatpush1.msra.mxu0 0.0
    %1302 = vmatprep.subr.mxu0 0.0
    %1303 = vmatpush1.msra.mxu0 0.0
    %1304 = vmatprep.subr.mxu0 0.0
    %1305 = vmatpush1.msra.mxu0 0.0
    %1306 = vmatprep.subr.mxu0 0.0
    %1307 = vmatpush1.msra.mxu0 0.0
    %1308 = vmatprep.subr.mxu0 0.0
    %1309 = vmatpush1.msra.mxu0 0.0
    %1310 = vmatprep.subr.mxu0 0.0
    %1311 = vmatpush1.msra.mxu0 0.0
    %1312 = vmatprep.subr.mxu0 0.0
    %1313 = vmatpush1.msra.mxu0 0.0
    %1314 = vmatprep.subr.mxu0 0.0
    %1315 = vmatpush1.msra.mxu0 0.0
    %1316 = vmatprep.subr.mxu0 0.0
    %1317 = vmatpush1.msra.mxu0 0.0
    %1318 = vmatprep.mubr.f32.mxu0 0.0
    %1319 = vmatmul.mubr.f32.gmra.mrb[0].mxu0 %v1252
    %v1320 = vpop.f32.mrb[0].mxu0
    %v1321 = vadd.f32 0.0, %v1320
    %v1322 = vpop.f32.mrb[0].mxu0
    %1323 = vdwg.mxu0
    %v1324 = vadd.f32 %v338, %v1321
    %v1325 = vxor.u32 %v1324, 2147483648
    %v1326 = vmul.f32 %v1325, 1.442695
    %v1327 = vpow.pop %v1326
    %v1328 = vadd.f32 %v1327, 1.0
    %v1329 = vrcp.pop %v1328
    %v1330 = vmul.f32 1.0, %v1329
    %v1331 = vtanh.pop %v1324
    %v1332 = vmul.f32 %v1330, %v1142
    %1334 = vrot.lane.b32.xlu0 %v1331, 32
    %v1335 = vpop.permute.xlu0 %1334
    %v1337 = vmul.f32 %v1330, %v1335
    %1339 = vrot.lane.b32.xlu0 %v1337, 32
    %v1340 = vpop.permute.xlu0 %1339
    %v1342 = vadd.f32 %v1332, %v1340
    %v1343 = vtanh.pop %v1342
    %1345 = vrot.lane.b32.xlu0 %v1343, 32
    %v1346 = vpop.permute.xlu0 %1345
    %v1348 = vmul.f32 %v1330, %v1346
    %1350 = vrot.lane.b32.xlu0 %v1248, 64
    %v1351 = vpop.permute.xlu0 %1350
    %v1352 = vsel %vm443, %v1351, 0
    %1354 = vmatprep.subr.mxu0 0.0
    %1355 = vmatpush1.msra.mxu0 %v143
    %1356 = vmatprep.subr.mxu0 0.0
    %1357 = vmatpush1.msra.mxu0 %v144
    %1358 = vmatprep.subr.mxu0 0.0
    %1359 = vmatpush1.msra.mxu0 %v145
    %1360 = vmatprep.subr.mxu0 0.0
    %1361 = vmatpush1.msra.mxu0 %v146
    %1362 = vmatprep.subr.mxu0 0.0
    %1363 = vmatpush1.msra.mxu0 0.0
    %1364 = vmatprep.subr.mxu0 0.0
    %1365 = vmatpush1.msra.mxu0 0.0
    %1366 = vmatprep.subr.mxu0 0.0
    %1367 = vmatpush1.msra.mxu0 0.0
    %1368 = vmatprep.subr.mxu0 0.0
    %1369 = vmatpush1.msra.mxu0 0.0
    %1370 = vmatprep.subr.mxu0 0.0
    %1371 = vmatpush1.msra.mxu0 0.0
    %1372 = vmatprep.subr.mxu0 0.0
    %1373 = vmatpush1.msra.mxu0 0.0
    %1374 = vmatprep.subr.mxu0 0.0
    %1375 = vmatpush1.msra.mxu0 0.0
    %1376 = vmatprep.subr.mxu0 0.0
    %1377 = vmatpush1.msra.mxu0 0.0
    %1378 = vmatprep.subr.mxu0 0.0
    %1379 = vmatpush1.msra.mxu0 0.0
    %1380 = vmatprep.subr.mxu0 0.0
    %1381 = vmatpush1.msra.mxu0 0.0
    %1382 = vmatprep.subr.mxu0 0.0
    %1383 = vmatpush1.msra.mxu0 0.0
    %1384 = vmatprep.subr.mxu0 0.0
    %1385 = vmatpush1.msra.mxu0 0.0
    %1386 = vmatprep.subr.mxu0 0.0
    %1387 = vmatpush1.msra.mxu0 0.0
    %1388 = vmatprep.subr.mxu0 0.0
    %1389 = vmatpush1.msra.mxu0 0.0
    %1390 = vmatprep.subr.mxu0 0.0
    %1391 = vmatpush1.msra.mxu0 0.0
    %1392 = vmatprep.subr.mxu0 0.0
    %1393 = vmatpush1.msra.mxu0 0.0
    %1394 = vmatprep.subr.mxu0 0.0
    %1395 = vmatpush1.msra.mxu0 0.0
    %1396 = vmatprep.subr.mxu0 0.0
    %1397 = vmatpush1.msra.mxu0 0.0
    %1398 = vmatprep.subr.mxu0 0.0
    %1399 = vmatpush1.msra.mxu0 0.0
    %1400 = vmatprep.subr.mxu0 0.0
    %1401 = vmatpush1.msra.mxu0 0.0
    %1402 = vmatprep.subr.mxu0 0.0
    %1403 = vmatpush1.msra.mxu0 0.0
    %1404 = vmatprep.subr.mxu0 0.0
    %1405 = vmatpush1.msra.mxu0 0.0
    %1406 = vmatprep.subr.mxu0 0.0
    %1407 = vmatpush1.msra.mxu0 0.0
    %1408 = vmatprep.subr.mxu0 0.0
    %1409 = vmatpush1.msra.mxu0 0.0
    %1410 = vmatprep.subr.mxu0 0.0
    %1411 = vmatpush1.msra.mxu0 0.0
    %1412 = vmatprep.subr.mxu0 0.0
    %1413 = vmatpush1.msra.mxu0 0.0
    %1414 = vmatprep.subr.mxu0 0.0
    %1415 = vmatpush1.msra.mxu0 0.0
    %1416 = vmatprep.subr.mxu0 0.0
    %1417 = vmatpush1.msra.mxu0 0.0
    %1418 = vmatprep.mubr.f32.mxu0 0.0
    %1419 = vmatmul.mubr.f32.gmra.mrb[0].mxu0 %v1352
    %v1420 = vpop.f32.mrb[0].mxu0
    %v1421 = vadd.f32 0.0, %v1420
    %v1422 = vpop.f32.mrb[0].mxu0
    %1423 = vdwg.mxu0
    %v1424 = vadd.f32 %v243, %v1421
    %v1425 = vxor.u32 %v1424, 2147483648
    %v1426 = vmul.f32 %v1425, 1.442695
    %v1427 = vpow.pop %v1426
    %v1428 = vadd.f32 %v1427, 1.0
    %v1429 = vrcp.pop %v1428
    %v1430 = vmul.f32 1.0, %v1429
    %v1431 = vtanh.pop %v1424
    %v1432 = vmul.f32 %v1430, %v1242
    %1434 = vrot.lane.b32.xlu0 %v1431, 32
    %v1435 = vpop.permute.xlu0 %1434
    %v1437 = vmul.f32 %v1430, %v1435
    %1439 = vrot.lane.b32.xlu0 %v1437, 32
    %v1440 = vpop.permute.xlu0 %1439
    %v1442 = vadd.f32 %v1432, %v1440
    %v1443 = vtanh.pop %v1442
    %1445 = vrot.lane.b32.xlu0 %v1443, 32
    %v1446 = vpop.permute.xlu0 %1445
    %v1448 = vmul.f32 %v1430, %v1446
    %1450 = vrot.lane.b32.xlu0 %v1348, 64
    %v1451 = vpop.permute.xlu0 %1450
    %v1452 = vsel %vm443, %v1451, 0
    %1454 = vmatprep.subr.mxu0 0.0
    %1455 = vmatpush1.msra.mxu0 %v139
    %1456 = vmatprep.subr.mxu0 0.0
    %1457 = vmatpush1.msra.mxu0 %v140
    %1458 = vmatprep.subr.mxu0 0.0
    %1459 = vmatpush1.msra.mxu0 %v141
    %1460 = vmatprep.subr.mxu0 0.0
    %1461 = vmatpush1.msra.mxu0 %v142
    %1462 = vmatprep.subr.mxu0 0.0
    %1463 = vmatpush1.msra.mxu0 0.0
    %1464 = vmatprep.subr.mxu0 0.0
    %1465 = vmatpush1.msra.mxu0 0.0
    %1466 = vmatprep.subr.mxu0 0.0
    %1467 = vmatpush1.msra.mxu0 0.0
    %1468 = vmatprep.subr.mxu0 0.0
    %1469 = vmatpush1.msra.mxu0 0.0
    %1470 = vmatprep.subr.mxu0 0.0
    %1471 = vmatpush1.msra.mxu0 0.0
    %1472 = vmatprep.subr.mxu0 0.0
    %1473 = vmatpush1.msra.mxu0 0.0
    %1474 = vmatprep.subr.mxu0 0.0
    %1475 = vmatpush1.msra.mxu0 0.0
    %1476 = vmatprep.subr.mxu0 0.0
    %1477 = vmatpush1.msra.mxu0 0.0
    %1478 = vmatprep.subr.mxu0 0.0
    %1479 = vmatpush1.msra.mxu0 0.0
    %1480 = vmatprep.subr.mxu0 0.0
    %1481 = vmatpush1.msra.mxu0 0.0
    %1482 = vmatprep.subr.mxu0 0.0
    %1483 = vmatpush1.msra.mxu0 0.0
    %1484 = vmatprep.subr.mxu0 0.0
    %1485 = vmatpush1.msra.mxu0 0.0
    %1486 = vmatprep.subr.mxu0 0.0
    %1487 = vmatpush1.msra.mxu0 0.0
    %1488 = vmatprep.subr.mxu0 0.0
    %1489 = vmatpush1.msra.mxu0 0.0
    %1490 = vmatprep.subr.mxu0 0.0
    %1491 = vmatpush1.msra.mxu0 0.0
    %1492 = vmatprep.subr.mxu0 0.0
    %1493 = vmatpush1.msra.mxu0 0.0
    %1494 = vmatprep.subr.mxu0 0.0
    %1495 = vmatpush1.msra.mxu0 0.0
    %1496 = vmatprep.subr.mxu0 0.0
    %1497 = vmatpush1.msra.mxu0 0.0
    %1498 = vmatprep.subr.mxu0 0.0
    %1499 = vmatpush1.msra.mxu0 0.0
    %1500 = vmatprep.subr.mxu0 0.0
    %1501 = vmatpush1.msra.mxu0 0.0
    %1502 = vmatprep.subr.mxu0 0.0
    %1503 = vmatpush1.msra.mxu0 0.0
    %1504 = vmatprep.subr.mxu0 0.0
    %1505 = vmatpush1.msra.mxu0 0.0
    %1506 = vmatprep.subr.mxu0 0.0
    %1507 = vmatpush1.msra.mxu0 0.0
    %1508 = vmatprep.subr.mxu0 0.0
    %1509 = vmatpush1.msra.mxu0 0.0
    %1510 = vmatprep.subr.mxu0 0.0
    %1511 = vmatpush1.msra.mxu0 0.0
    %1512 = vmatprep.subr.mxu0 0.0
    %1513 = vmatpush1.msra.mxu0 0.0
    %1514 = vmatprep.subr.mxu0 0.0
    %1515 = vmatpush1.msra.mxu0 0.0
    %1516 = vmatprep.subr.mxu0 0.0
    %1517 = vmatpush1.msra.mxu0 0.0
    %1518 = vmatprep.mubr.f32.mxu0 0.0
    %1519 = vmatmul.mubr.f32.gmra.mrb[0].mxu0 %v1452
    %v1520 = vpop.f32.mrb[0].mxu0
    %v1521 = vadd.f32 0.0, %v1520
    %v1522 = vpop.f32.mrb[0].mxu0
    %1523 = vdwg.mxu0
    %v1524 = vadd.f32 %v370, %v1521
    %v1525 = vxor.u32 %v1524, 2147483648
    %v1526 = vmul.f32 %v1525, 1.442695
    %v1527 = vpow.pop %v1526
    %v1528 = vadd.f32 %v1527, 1.0
    %v1529 = vrcp.pop %v1528
    %v1530 = vmul.f32 1.0, %v1529
    %v1531 = vtanh.pop %v1524
    %v1532 = vmul.f32 %v1530, %v1342
    %1534 = vrot.lane.b32.xlu0 %v1531, 32
    %v1535 = vpop.permute.xlu0 %1534
    %v1537 = vmul.f32 %v1530, %v1535
    %1539 = vrot.lane.b32.xlu0 %v1537, 32
    %v1540 = vpop.permute.xlu0 %1539
    %v1542 = vadd.f32 %v1532, %v1540
    %v1543 = vtanh.pop %v1542
    %1545 = vrot.lane.b32.xlu0 %v1543, 32
    %v1546 = vpop.permute.xlu0 %1545
    %v1548 = vmul.f32 %v1530, %v1546
    %1550 = vrot.lane.b32.xlu0 %v1448, 64
    %v1551 = vpop.permute.xlu0 %1550
    %v1552 = vsel %vm443, %v1551, 0
    %1554 = vmatprep.subr.mxu0 0.0
    %1555 = vmatpush1.msra.mxu0 %v143
    %1556 = vmatprep.subr.mxu0 0.0
    %1557 = vmatpush1.msra.mxu0 %v144
    %1558 = vmatprep.subr.mxu0 0.0
    %1559 = vmatpush1.msra.mxu0 %v145
    %1560 = vmatprep.subr.mxu0 0.0
    %1561 = vmatpush1.msra.mxu0 %v146
    %1562 = vmatprep.subr.mxu0 0.0
    %1563 = vmatpush1.msra.mxu0 0.0
    %1564 = vmatprep.subr.mxu0 0.0
    %1565 = vmatpush1.msra.mxu0 0.0
    %1566 = vmatprep.subr.mxu0 0.0
    %1567 = vmatpush1.msra.mxu0 0.0
    %1568 = vmatprep.subr.mxu0 0.0
    %1569 = vmatpush1.msra.mxu0 0.0
    %1570 = vmatprep.subr.mxu0 0.0
    %1571 = vmatpush1.msra.mxu0 0.0
    %1572 = vmatprep.subr.mxu0 0.0
    %1573 = vmatpush1.msra.mxu0 0.0
    %1574 = vmatprep.subr.mxu0 0.0
    %1575 = vmatpush1.msra.mxu0 0.0
    %1576 = vmatprep.subr.mxu0 0.0
    %1577 = vmatpush1.msra.mxu0 0.0
    %1578 = vmatprep.subr.mxu0 0.0
    %1579 = vmatpush1.msra.mxu0 0.0
    %1580 = vmatprep.subr.mxu0 0.0
    %1581 = vmatpush1.msra.mxu0 0.0
    %1582 = vmatprep.subr.mxu0 0.0
    %1583 = vmatpush1.msra.mxu0 0.0
    %1584 = vmatprep.subr.mxu0 0.0
    %1585 = vmatpush1.msra.mxu0 0.0
    %1586 = vmatprep.subr.mxu0 0.0
    %1587 = vmatpush1.msra.mxu0 0.0
    %1588 = vmatprep.subr.mxu0 0.0
    %1589 = vmatpush1.msra.mxu0 0.0
    %1590 = vmatprep.subr.mxu0 0.0
    %1591 = vmatpush1.msra.mxu0 0.0
    %1592 = vmatprep.subr.mxu0 0.0
    %1593 = vmatpush1.msra.mxu0 0.0
    %1594 = vmatprep.subr.mxu0 0.0
    %1595 = vmatpush1.msra.mxu0 0.0
    %1596 = vmatprep.subr.mxu0 0.0
    %1597 = vmatpush1.msra.mxu0 0.0
    %1598 = vmatprep.subr.mxu0 0.0
    %1599 = vmatpush1.msra.mxu0 0.0
    %1600 = vmatprep.subr.mxu0 0.0
    %1601 = vmatpush1.msra.mxu0 0.0
    %1602 = vmatprep.subr.mxu0 0.0
    %1603 = vmatpush1.msra.mxu0 0.0
    %1604 = vmatprep.subr.mxu0 0.0
    %1605 = vmatpush1.msra.mxu0 0.0
    %1606 = vmatprep.subr.mxu0 0.0
    %1607 = vmatpush1.msra.mxu0 0.0
    %1608 = vmatprep.subr.mxu0 0.0
    %1609 = vmatpush1.msra.mxu0 0.0
    %1610 = vmatprep.subr.mxu0 0.0
    %1611 = vmatpush1.msra.mxu0 0.0
    %1612 = vmatprep.subr.mxu0 0.0
    %1613 = vmatpush1.msra.mxu0 0.0
    %1614 = vmatprep.subr.mxu0 0.0
    %1615 = vmatpush1.msra.mxu0 0.0
    %1616 = vmatprep.subr.mxu0 0.0
    %1617 = vmatpush1.msra.mxu0 0.0
    %1618 = vmatprep.mubr.f32.mxu0 0.0
    %1619 = vmatmul.mubr.f32.gmra.mrb[0].mxu0 %v1552
    %v1620 = vpop.f32.mrb[0].mxu0
    %v1621 = vadd.f32 0.0, %v1620
    %v1622 = vpop.f32.mrb[0].mxu0
    %1623 = vdwg.mxu0
    %v1624 = vadd.f32 %v211, %v1621
    %v1625 = vxor.u32 %v1624, 2147483648
    %v1626 = vmul.f32 %v1625, 1.442695
    %v1627 = vpow.pop %v1626
    %v1628 = vadd.f32 %v1627, 1.0
    %v1629 = vrcp.pop %v1628
    %v1630 = vmul.f32 1.0, %v1629
    %v1631 = vtanh.pop %v1624
    %v1632 = vmul.f32 %v1630, %v1442
    %1634 = vrot.lane.b32.xlu0 %v1631, 32
    %v1635 = vpop.permute.xlu0 %1634
    %v1637 = vmul.f32 %v1630, %v1635
    %1639 = vrot.lane.b32.xlu0 %v1637, 32
    %v1640 = vpop.permute.xlu0 %1639
    %v1642 = vadd.f32 %v1632, %v1640
    %v1643 = vtanh.pop %v1642
    %1645 = vrot.lane.b32.xlu0 %v1643, 32
    %v1646 = vpop.permute.xlu0 %1645
    %v1648 = vmul.f32 %v1630, %v1646
    %1650 = vrot.lane.b32.xlu0 %v1548, 64
    %v1651 = vpop.permute.xlu0 %1650
    %v1652 = vsel %vm443, %v1651, 0
    %1654 = vmatprep.subr.mxu0 0.0
    %1655 = vmatpush1.msra.mxu0 %v139
    %1656 = vmatprep.subr.mxu0 0.0
    %1657 = vmatpush1.msra.mxu0 %v140
    %1658 = vmatprep.subr.mxu0 0.0
    %1659 = vmatpush1.msra.mxu0 %v141
    %1660 = vmatprep.subr.mxu0 0.0
    %1661 = vmatpush1.msra.mxu0 %v142
    %1662 = vmatprep.subr.mxu0 0.0
    %1663 = vmatpush1.msra.mxu0 0.0
    %1664 = vmatprep.subr.mxu0 0.0
    %1665 = vmatpush1.msra.mxu0 0.0
    %1666 = vmatprep.subr.mxu0 0.0
    %1667 = vmatpush1.msra.mxu0 0.0
    %1668 = vmatprep.subr.mxu0 0.0
    %1669 = vmatpush1.msra.mxu0 0.0
    %1670 = vmatprep.subr.mxu0 0.0
    %1671 = vmatpush1.msra.mxu0 0.0
    %1672 = vmatprep.subr.mxu0 0.0
    %1673 = vmatpush1.msra.mxu0 0.0
    %1674 = vmatprep.subr.mxu0 0.0
    %1675 = vmatpush1.msra.mxu0 0.0
    %1676 = vmatprep.subr.mxu0 0.0
    %1677 = vmatpush1.msra.mxu0 0.0
    %1678 = vmatprep.subr.mxu0 0.0
    %1679 = vmatpush1.msra.mxu0 0.0
    %1680 = vmatprep.subr.mxu0 0.0
    %1681 = vmatpush1.msra.mxu0 0.0
    %1682 = vmatprep.subr.mxu0 0.0
    %1683 = vmatpush1.msra.mxu0 0.0
    %1684 = vmatprep.subr.mxu0 0.0
    %1685 = vmatpush1.msra.mxu0 0.0
    %1686 = vmatprep.subr.mxu0 0.0
    %1687 = vmatpush1.msra.mxu0 0.0
    %1688 = vmatprep.subr.mxu0 0.0
    %1689 = vmatpush1.msra.mxu0 0.0
    %1690 = vmatprep.subr.mxu0 0.0
    %1691 = vmatpush1.msra.mxu0 0.0
    %1692 = vmatprep.subr.mxu0 0.0
    %1693 = vmatpush1.msra.mxu0 0.0
    %1694 = vmatprep.subr.mxu0 0.0
    %1695 = vmatpush1.msra.mxu0 0.0
    %1696 = vmatprep.subr.mxu0 0.0
    %1697 = vmatpush1.msra.mxu0 0.0
    %1698 = vmatprep.subr.mxu0 0.0
    %1699 = vmatpush1.msra.mxu0 0.0
    %1700 = vmatprep.subr.mxu0 0.0
    %1701 = vmatpush1.msra.mxu0 0.0
    %1702 = vmatprep.subr.mxu0 0.0
    %1703 = vmatpush1.msra.mxu0 0.0
    %1704 = vmatprep.subr.mxu0 0.0
    %1705 = vmatpush1.msra.mxu0 0.0
    %1706 = vmatprep.subr.mxu0 0.0
    %1707 = vmatpush1.msra.mxu0 0.0
    %1708 = vmatprep.subr.mxu0 0.0
    %1709 = vmatpush1.msra.mxu0 0.0
    %1710 = vmatprep.subr.mxu0 0.0
    %1711 = vmatpush1.msra.mxu0 0.0
    %1712 = vmatprep.subr.mxu0 0.0
    %1713 = vmatpush1.msra.mxu0 0.0
    %1714 = vmatprep.subr.mxu0 0.0
    %1715 = vmatpush1.msra.mxu0 0.0
    %1716 = vmatprep.subr.mxu0 0.0
    %1717 = vmatpush1.msra.mxu0 0.0
    %1718 = vmatprep.mubr.f32.mxu0 0.0
    %1719 = vmatmul.mubr.f32.gmra.mrb[0].mxu0 %v1652
    %v1720 = vpop.f32.mrb[0].mxu0
    %v1721 = vadd.f32 0.0, %v1720
    %v1722 = vpop.f32.mrb[0].mxu0
    %1723 = vdwg.mxu0
    %v1724 = vadd.f32 %v402, %v1721
    %v1725 = vxor.u32 %v1724, 2147483648
    %v1726 = vmul.f32 %v1725, 1.442695
    %v1727 = vpow.pop %v1726
    %v1728 = vadd.f32 %v1727, 1.0
    %v1729 = vrcp.pop %v1728
    %v1730 = vmul.f32 1.0, %v1729
    %v1731 = vtanh.pop %v1724
    %v1732 = vmul.f32 %v1730, %v1542
    %1734 = vrot.lane.b32.xlu0 %v1731, 32
    %v1735 = vpop.permute.xlu0 %1734
    %v1737 = vmul.f32 %v1730, %v1735
    %1739 = vrot.lane.b32.xlu0 %v1737, 32
    %v1740 = vpop.permute.xlu0 %1739
    %v1742 = vadd.f32 %v1732, %v1740
    %v1743 = vtanh.pop %v1742
    %1745 = vrot.lane.b32.xlu0 %v1743, 32
    %v1746 = vpop.permute.xlu0 %1745
    %v1748 = vmul.f32 %v1730, %v1746
    %1750 = vrot.lane.b32.xlu0 %v1648, 64
    %v1751 = vpop.permute.xlu0 %1750
    %v1752 = vsel %vm443, %v1751, 0
    %1754 = vmatprep.subr.mxu0 0.0
    %1755 = vmatpush1.msra.mxu0 %v143
    %1756 = vmatprep.subr.mxu0 0.0
    %1757 = vmatpush1.msra.mxu0 %v144
    %1758 = vmatprep.subr.mxu0 0.0
    %1759 = vmatpush1.msra.mxu0 %v145
    %1760 = vmatprep.subr.mxu0 0.0
    %1761 = vmatpush1.msra.mxu0 %v146
    %1762 = vmatprep.subr.mxu0 0.0
    %1763 = vmatpush1.msra.mxu0 0.0
    %1764 = vmatprep.subr.mxu0 0.0
    %1765 = vmatpush1.msra.mxu0 0.0
    %1766 = vmatprep.subr.mxu0 0.0
    %1767 = vmatpush1.msra.mxu0 0.0
    %1768 = vmatprep.subr.mxu0 0.0
    %1769 = vmatpush1.msra.mxu0 0.0
    %1770 = vmatprep.subr.mxu0 0.0
    %1771 = vmatpush1.msra.mxu0 0.0
    %1772 = vmatprep.subr.mxu0 0.0
    %1773 = vmatpush1.msra.mxu0 0.0
    %1774 = vmatprep.subr.mxu0 0.0
    %1775 = vmatpush1.msra.mxu0 0.0
    %1776 = vmatprep.subr.mxu0 0.0
    %1777 = vmatpush1.msra.mxu0 0.0
    %1778 = vmatprep.subr.mxu0 0.0
    %1779 = vmatpush1.msra.mxu0 0.0
    %1780 = vmatprep.subr.mxu0 0.0
    %1781 = vmatpush1.msra.mxu0 0.0
    %1782 = vmatprep.subr.mxu0 0.0
    %1783 = vmatpush1.msra.mxu0 0.0
    %1784 = vmatprep.subr.mxu0 0.0
    %1785 = vmatpush1.msra.mxu0 0.0
    %1786 = vmatprep.subr.mxu0 0.0
    %1787 = vmatpush1.msra.mxu0 0.0
    %1788 = vmatprep.subr.mxu0 0.0
    %1789 = vmatpush1.msra.mxu0 0.0
    %1790 = vmatprep.subr.mxu0 0.0
    %1791 = vmatpush1.msra.mxu0 0.0
    %1792 = vmatprep.subr.mxu0 0.0
    %1793 = vmatpush1.msra.mxu0 0.0
    %1794 = vmatprep.subr.mxu0 0.0
    %1795 = vmatpush1.msra.mxu0 0.0
    %1796 = vmatprep.subr.mxu0 0.0
    %1797 = vmatpush1.msra.mxu0 0.0
    %1798 = vmatprep.subr.mxu0 0.0
    %1799 = vmatpush1.msra.mxu0 0.0
    %1800 = vmatprep.subr.mxu0 0.0
    %1801 = vmatpush1.msra.mxu0 0.0
    %1802 = vmatprep.subr.mxu0 0.0
    %1803 = vmatpush1.msra.mxu0 0.0
    %1804 = vmatprep.subr.mxu0 0.0
    %1805 = vmatpush1.msra.mxu0 0.0
    %1806 = vmatprep.subr.mxu0 0.0
    %1807 = vmatpush1.msra.mxu0 0.0
    %1808 = vmatprep.subr.mxu0 0.0
    %1809 = vmatpush1.msra.mxu0 0.0
    %1810 = vmatprep.subr.mxu0 0.0
    %1811 = vmatpush1.msra.mxu0 0.0
    %1812 = vmatprep.subr.mxu0 0.0
    %1813 = vmatpush1.msra.mxu0 0.0
    %1814 = vmatprep.subr.mxu0 0.0
    %1815 = vmatpush1.msra.mxu0 0.0
    %1816 = vmatprep.subr.mxu0 0.0
    %1817 = vmatpush1.msra.mxu0 0.0
    %1818 = vmatprep.mubr.f32.mxu0 0.0
    %1819 = vmatmul.mubr.f32.gmra.mrb[0].mxu0 %v1752
    %v1820 = vpop.f32.mrb[0].mxu0
    %v1821 = vadd.f32 0.0, %v1820
    %v1822 = vpop.f32.mrb[0].mxu0
    %1823 = vdwg.mxu0
    %v1824 = vadd.f32 %v179, %v1821
    %v1825 = vxor.u32 %v1824, 2147483648
    %v1826 = vmul.f32 %v1825, 1.442695
    %v1827 = vpow.pop %v1826
    %v1828 = vadd.f32 %v1827, 1.0
    %v1829 = vrcp.pop %v1828
    %v1830 = vmul.f32 1.0, %v1829
    %v1831 = vtanh.pop %v1824
    %v1832 = vmul.f32 %v1830, %v1642
    %1834 = vrot.lane.b32.xlu0 %v1831, 32
    %v1835 = vpop.permute.xlu0 %1834
    %v1837 = vmul.f32 %v1830, %v1835
    %1839 = vrot.lane.b32.xlu0 %v1837, 32
    %v1840 = vpop.permute.xlu0 %1839
    %v1842 = vadd.f32 %v1832, %v1840
    %v1843 = vtanh.pop %v1842
    %1845 = vrot.lane.b32.xlu0 %v1843, 32
    %v1846 = vpop.permute.xlu0 %1845
    %v1848 = vmul.f32 %v1830, %v1846
    %1851 = vrot.lane.b32.xlu0 %v1848, 96
    %v1852 = vpop.permute.xlu0 %1851
    %v1854 = vsel %vm443, %v442, %v1852
    %1856 = vrot.lane.b32.xlu0 %v1648, 96
    %v1857 = vpop.permute.xlu0 %1856
    %v1859 = vsel %vm443, %v651, %v1857
    %1861 = vrot.lane.b32.xlu0 %v1448, 96
    %v1862 = vpop.permute.xlu0 %1861
    %v1864 = vsel %vm443, %v851, %v1862
    %1866 = vrot.lane.b32.xlu0 %v1248, 96
    %v1867 = vpop.permute.xlu0 %1866
    %v1869 = vsel %vm443, %v1051, %v1867
    %1871 = vrot.lane.b32.xlu0 %v1048, 96
    %v1872 = vpop.permute.xlu0 %1871
    %v1874 = vsel %vm443, %v1251, %v1872
    %1876 = vrot.lane.b32.xlu0 %v848, 96
    %v1877 = vpop.permute.xlu0 %1876
    %v1879 = vsel %vm443, %v1451, %v1877
    %1881 = vrot.lane.b32.xlu0 %v648, 96
    %v1882 = vpop.permute.xlu0 %1881
    %v1884 = vsel %vm443, %v1651, %v1882
    %1886 = vrot.lane.b32.xlu0 %v1748, 64
    %v1887 = vpop.permute.xlu0 %1886
    %1889 = vrot.lane.b32.xlu0 %v439, 96
    %v1890 = vpop.permute.xlu0 %1889
    %v1892 = vsel %vm443, %v1887, %v1890
    %v1893 = vld [vmem:[#allocation9] sm:$0xff]
    %v1894 = vld [vmem:[#allocation9 + $0x8] sm:$0xff]
    %v1895 = vld [vmem:[#allocation9 + $0x10] sm:$0xff]
    %v1896 = vld [vmem:[#allocation9 + $0x18] sm:$0xff]
    %v1897 = vld [vmem:[#allocation9 + $0x20] sm:$0xff]
    %v1898 = vld [vmem:[#allocation9 + $0x28] sm:$0xff]
    %v1899 = vld [vmem:[#allocation9 + $0x30] sm:$0xff]
    %v1900 = vld [vmem:[#allocation9 + $0x38] sm:$0xff]
    %v1901 = vld [vmem:[#allocation9 + $0x40] sm:$0xff]
    %v1902 = vld [vmem:[#allocation9 + $0x48] sm:$0xff]
    %v1903 = vld [vmem:[#allocation9 + $0x50] sm:$0xff]
    %v1904 = vld [vmem:[#allocation9 + $0x58] sm:$0xff]
    %v1905 = vld [vmem:[#allocation9 + $0x60] sm:$0xff]
    %v1906 = vld [vmem:[#allocation9 + $0x68] sm:$0xff]
    %v1907 = vld [vmem:[#allocation9 + $0x70] sm:$0xff]
    %v1908 = vld [vmem:[#allocation9 + $0x78] sm:$0xff]
    %v1909 = vld [vmem:[#allocation9 + $0x80] sm:$0xff]
    %v1910 = vld [vmem:[#allocation9 + $0x88] sm:$0xff]
    %v1911 = vld [vmem:[#allocation9 + $0x90] sm:$0xff]
    %v1912 = vld [vmem:[#allocation9 + $0x98] sm:$0xff]
    %v1913 = vld [vmem:[#allocation9 + $0xa0] sm:$0xff]
    %v1914 = vld [vmem:[#allocation9 + $0xa8] sm:$0xff]
    %v1915 = vld [vmem:[#allocation9 + $0xb0] sm:$0xff]
    %v1916 = vld [vmem:[#allocation9 + $0xb8] sm:$0xff]
    %v1917 = vld [vmem:[#allocation10] sm:$0x1]
    %1919 = vrot.lane.b32.xlu0 %v1859, 64
    %v1920 = vpop.permute.xlu0 %1919
    %vm1922 = vcmask 523264
    %v1923 = vsel %vm1922, %v1854, %v1920
    %1925 = vrot.lane.b32.xlu0 %v1864, 64
    %v1926 = vpop.permute.xlu0 %1925
    %v1928 = vsel %vm1922, %v1859, %v1926
    %1930 = vrot.lane.b32.xlu0 %v1869, 64
    %v1931 = vpop.permute.xlu0 %1930
    %v1933 = vsel %vm1922, %v1864, %v1931
    %1935 = vrot.lane.b32.xlu0 %v1874, 64
    %v1936 = vpop.permute.xlu0 %1935
    %v1938 = vsel %vm1922, %v1869, %v1936
    %1940 = vrot.lane.b32.xlu0 %v1879, 64
    %v1941 = vpop.permute.xlu0 %1940
    %v1943 = vsel %vm1922, %v1874, %v1941
    %1945 = vrot.lane.b32.xlu0 %v1884, 64
    %v1946 = vpop.permute.xlu0 %1945
    %v1948 = vsel %vm1922, %v1879, %v1946
    %v1950 = vrot.slane %v1928, 6
    %v1951 = vrot.slane %v1869, 6
    %v1955 = vrot.slane %v1933, 4
    %v1956 = vrot.slane %v1874, 4
    %v1960 = vrot.slane %v1938, 2
    %v1961 = vrot.slane %v1879, 2
    %v1966 = vrot.slane %v1948, 6
    %v1967 = vrot.slane %v1892, 6
    %vm1970 = vcmask 1041408
    %v1971 = vsel %vm1970, %v1923, %v1950
    %v1972 = vsel %vm1970, %v1864, %v1951
    %vm1973 = vcmask 1043456
    %v1974 = vsel %vm1973, %v1971, %v1955
    %v1975 = vsel %vm1973, %v1972, %v1956
    %vm1976 = vcmask 1045504
    %v1977 = vsel %vm1976, %v1974, %v1960
    %v1978 = vsel %vm1976, %v1975, %v1961
    %v1979 = vsel %vm1970, %v1943, %v1966
    %v1980 = vsel %vm1970, %v1884, %v1967
    %v1982 = vlaneseq
    %v1983 = vshrl.u32 %v1982, 7
    %v1984 = vsub.s32 0, %v1983
    %v1985 = vrot.slane %v1917, %v1984
    %v1988 = vsel %vm1922, %v1978, 0
    %v1991 = vsel %vm1922, %v1980, 0
    %1993 = vmatprep.subr.mxu0 0.0
    %1994 = vmatpush1.msra.mxu0 %v1893
    %1995 = vmatprep.subr.mxu0 0.0
    %1996 = vmatpush1.msra.mxu0 %v1894
    %1997 = vmatprep.subr.mxu0 0.0
    %1998 = vmatpush1.msra.mxu0 %v1895
    %1999 = vmatprep.subr.mxu0 0.0
    %2000 = vmatpush1.msra.mxu0 %v1896
    %2001 = vmatprep.subr.mxu0 0.0
    %2002 = vmatpush1.msra.mxu0 %v1897
    %2003 = vmatprep.subr.mxu0 0.0
    %2004 = vmatpush1.msra.mxu0 %v1898
    %2005 = vmatprep.subr.mxu0 0.0
    %2006 = vmatpush1.msra.mxu0 %v1899
    %2007 = vmatprep.subr.mxu0 0.0
    %2008 = vmatpush1.msra.mxu0 %v1900
    %2009 = vmatprep.subr.mxu0 0.0
    %2010 = vmatpush1.msra.mxu0 %v1901
    %2011 = vmatprep.subr.mxu0 0.0
    %2012 = vmatpush1.msra.mxu0 %v1902
    %2013 = vmatprep.subr.mxu0 0.0
    %2014 = vmatpush1.msra.mxu0 %v1903
    %2015 = vmatprep.subr.mxu0 0.0
    %2016 = vmatpush1.msra.mxu0 %v1904
    %2017 = vmatprep.subr.mxu0 0.0
    %2018 = vmatpush1.msra.mxu0 %v1905
    %2019 = vmatprep.subr.mxu0 0.0
    %2020 = vmatpush1.msra.mxu0 %v1906
    %2021 = vmatprep.subr.mxu0 0.0
    %2022 = vmatpush1.msra.mxu0 %v1907
    %2023 = vmatprep.subr.mxu0 0.0
    %2024 = vmatpush1.msra.mxu0 %v1908
    %2025 = vmatprep.subr.mxu0 0.0
    %2026 = vmatpush1.msra.mxu0 %v1909
    %2027 = vmatprep.subr.mxu0 0.0
    %2028 = vmatpush1.msra.mxu0 %v1910
    %2029 = vmatprep.subr.mxu0 0.0
    %2030 = vmatpush1.msra.mxu0 %v1911
    %2031 = vmatprep.subr.mxu0 0.0
    %2032 = vmatpush1.msra.mxu0 %v1912
    %2033 = vmatprep.subr.mxu0 0.0
    %2034 = vmatpush1.msra.mxu0 %v1913
    %2035 = vmatprep.subr.mxu0 0.0
    %2036 = vmatpush1.msra.mxu0 %v1914
    %2037 = vmatprep.subr.mxu0 0.0
    %2038 = vmatpush1.msra.mxu0 %v1915
    %2039 = vmatprep.subr.mxu0 0.0
    %2040 = vmatpush1.msra.mxu0 %v1916
    %2041 = vmatprep.subr.mxu0 0.0
    %2042 = vmatpush1.msra.mxu0 0.0
    %2043 = vmatprep.subr.mxu0 0.0
    %2044 = vmatpush1.msra.mxu0 0.0
    %2045 = vmatprep.subr.mxu0 0.0
    %2046 = vmatpush1.msra.mxu0 0.0
    %2047 = vmatprep.subr.mxu0 0.0
    %2048 = vmatpush1.msra.mxu0 0.0
    %2049 = vmatprep.subr.mxu0 0.0
    %2050 = vmatpush1.msra.mxu0 0.0
    %2051 = vmatprep.subr.mxu0 0.0
    %2052 = vmatpush1.msra.mxu0 0.0
    %2053 = vmatprep.subr.mxu0 0.0
    %2054 = vmatpush1.msra.mxu0 0.0
    %2055 = vmatprep.subr.mxu0 0.0
    %2056 = vmatpush1.msra.mxu0 0.0
    %2057 = vmatprep.mubr.f32.mxu0 %v1988
    %2058 = vmatmul.mubr.f32.gmra.mrb[0].mxu0 %v1977
    %v2059 = vpop.f32.mrb[0].mxu0
    %v2060 = vadd.f32 %v1985, %v2059
    %v2061 = vpop.f32.mrb[0].mxu0
    %2062 = vmatprep.mubr.f32.mxu0 %v1991
    %2063 = vmatmul.mubr.f32.gmra.mrb[0].mxu0 %v1979
    %v2064 = vpop.f32.mrb[0].mxu0
    %v2065 = vadd.f32 %v1985, %v2064
    %v2066 = vpop.f32.mrb[0].mxu0
    %2067 = vdwg.mxu0
    %v2068 = vmax.f32 %v2060, 0.0
    %v2069 = vmax.f32 %v2065, 0.0
    %v2071 = vrot.slane %v2068, 2
    %v2073 = vmax.f32 %v2068, %v2071
    %v2074 = vrot.slane %v2068, 4
    %v2076 = vmax.f32 %v2073, %v2074
    %v2077 = vrot.slane %v2068, 6
    %v2079 = vmax.f32 %v2076, %v2077
    %v2080 = vmax.f32 %v2079, %v2069
    %v2082 = vrot.slane %v2069, 2
    %v2084 = vmax.f32 %v2080, %v2082
    %v2085 = vld [vmem:[#allocation12] sm:$0xff]
    %v2086 = vld [vmem:[#allocation12 + $0x8] sm:$0xff]
    %v2087 = vld [vmem:[#allocation12 + $0x10] sm:$0xff]
    %v2088 = vld [vmem:[#allocation12 + $0x18] sm:$0xff]
    %v2089 = vld [vmem:[#allocation12 + $0x20] sm:$0xff]
    %v2090 = vld [vmem:[#allocation12 + $0x28] sm:$0xff]
    %v2091 = vld [vmem:[#allocation12 + $0x30] sm:$0xff]
    %v2092 = vld [vmem:[#allocation12 + $0x38] sm:$0xff]
    %v2093 = vld [vmem:[#allocation12 + $0x40] sm:$0xff]
    %v2094 = vld [vmem:[#allocation12 + $0x48] sm:$0xff]
    %v2095 = vld [vmem:[#allocation12 + $0x50] sm:$0xff]
    %v2096 = vld [vmem:[#allocation12 + $0x58] sm:$0xff]
    %v2097 = vld [vmem:[#allocation12 + $0x60] sm:$0xff]
    %v2098 = vld [vmem:[#allocation12 + $0x68] sm:$0xff]
    %v2099 = vld [vmem:[#allocation12 + $0x70] sm:$0xff]
    %v2100 = vld [vmem:[#allocation12 + $0x78] sm:$0xff]
    %v2101 = vld [vmem:[#allocation12 + $0x80] sm:$0xff]
    %v2102 = vld [vmem:[#allocation12 + $0x88] sm:$0xff]
    %v2103 = vld [vmem:[#allocation12 + $0x90] sm:$0xff]
    %v2104 = vld [vmem:[#allocation12 + $0x98] sm:$0xff]
    %v2105 = vld [vmem:[#allocation12 + $0xa0] sm:$0xff]
    %v2106 = vld [vmem:[#allocation12 + $0xa8] sm:$0xff]
    %v2107 = vld [vmem:[#allocation12 + $0xb0] sm:$0xff]
    %v2108 = vld [vmem:[#allocation12 + $0xb8] sm:$0xff]
    %v2109 = vld [vmem:[#allocation12 + $0xc0] sm:$0xff]
    %v2110 = vld [vmem:[#allocation12 + $0xc8] sm:$0xff]
    %v2111 = vld [vmem:[#allocation12 + $0xd0] sm:$0xff]
    %v2112 = vld [vmem:[#allocation12 + $0xd8] sm:$0xff]
    %v2113 = vld [vmem:[#allocation12 + $0xe0] sm:$0xff]
    %v2114 = vld [vmem:[#allocation12 + $0xe8] sm:$0xff]
    %v2115 = vld [vmem:[#allocation12 + $0xf0] sm:$0xff]
    %v2116 = vld [vmem:[#allocation12 + $0xf8] sm:$0xff]
    %v2117 = vld [vmem:[%s7] sm:$0x1]
    %2118 = vrot.lane.b32.xlu0 %v1892, 64
    %v2119 = vpop.permute.xlu0 %2118
    %v2121 = vsel %vm1922, %v1884, %v2119
    %v2122 = vrot.slane %v1938, 6
    %v2125 = vrot.slane %v1943, 4
    %v2127 = vrot.slane %v1948, 2
    %v2129 = vsel %vm1970, %v1933, %v2122
    %v2130 = vsel %vm1973, %v2129, %v2125
    %v2131 = vsel %vm1976, %v2130, %v2127
    %v2133 = vlaneseq
    %v2134 = vshrl.u32 %v2133, 7
    %v2135 = vsub.s32 0, %v2134
    %v2136 = vrot.slane %v2117, %v2135
    %2138 = vmatprep.subr.mxu0 0.0
    %2139 = vmatpush1.msra.mxu0 %v2085
    %2140 = vmatprep.subr.mxu0 0.0
    %2141 = vmatpush1.msra.mxu0 %v2086
    %2142 = vmatprep.subr.mxu0 0.0
    %2143 = vmatpush1.msra.mxu0 %v2087
    %2144 = vmatprep.subr.mxu0 0.0
    %2145 = vmatpush1.msra.mxu0 %v2088
    %2146 = vmatprep.subr.mxu0 0.0
    %2147 = vmatpush1.msra.mxu0 %v2089
    %2148 = vmatprep.subr.mxu0 0.0
    %2149 = vmatpush1.msra.mxu0 %v2090
    %2150 = vmatprep.subr.mxu0 0.0
    %2151 = vmatpush1.msra.mxu0 %v2091
    %2152 = vmatprep.subr.mxu0 0.0
    %2153 = vmatpush1.msra.mxu0 %v2092
    %2154 = vmatprep.subr.mxu0 0.0
    %2155 = vmatpush1.msra.mxu0 %v2093
    %2156 = vmatprep.subr.mxu0 0.0
    %2157 = vmatpush1.msra.mxu0 %v2094
    %2158 = vmatprep.subr.mxu0 0.0
    %2159 = vmatpush1.msra.mxu0 %v2095
    %2160 = vmatprep.subr.mxu0 0.0
    %2161 = vmatpush1.msra.mxu0 %v2096
    %2162 = vmatprep.subr.mxu0 0.0
    %2163 = vmatpush1.msra.mxu0 %v2097
    %2164 = vmatprep.subr.mxu0 0.0
    %2165 = vmatpush1.msra.mxu0 %v2098
    %2166 = vmatprep.subr.mxu0 0.0
    %2167 = vmatpush1.msra.mxu0 %v2099
    %2168 = vmatprep.subr.mxu0 0.0
    %2169 = vmatpush1.msra.mxu0 %v2100
    %2170 = vmatprep.subr.mxu0 0.0
    %2171 = vmatpush1.msra.mxu0 %v2101
    %2172 = vmatprep.subr.mxu0 0.0
    %2173 = vmatpush1.msra.mxu0 %v2102
    %2174 = vmatprep.subr.mxu0 0.0
    %2175 = vmatpush1.msra.mxu0 %v2103
    %2176 = vmatprep.subr.mxu0 0.0
    %2177 = vmatpush1.msra.mxu0 %v2104
    %2178 = vmatprep.subr.mxu0 0.0
    %2179 = vmatpush1.msra.mxu0 %v2105
    %2180 = vmatprep.subr.mxu0 0.0
    %2181 = vmatpush1.msra.mxu0 %v2106
    %2182 = vmatprep.subr.mxu0 0.0
    %2183 = vmatpush1.msra.mxu0 %v2107
    %2184 = vmatprep.subr.mxu0 0.0
    %2185 = vmatpush1.msra.mxu0 %v2108
    %2186 = vmatprep.subr.mxu0 0.0
    %2187 = vmatpush1.msra.mxu0 %v2109
    %2188 = vmatprep.subr.mxu0 0.0
    %2189 = vmatpush1.msra.mxu0 %v2110
    %2190 = vmatprep.subr.mxu0 0.0
    %2191 = vmatpush1.msra.mxu0 %v2111
    %2192 = vmatprep.subr.mxu0 0.0
    %2193 = vmatpush1.msra.mxu0 %v2112
    %2194 = vmatprep.subr.mxu0 0.0
    %2195 = vmatpush1.msra.mxu0 %v2113
    %2196 = vmatprep.subr.mxu0 0.0
    %2197 = vmatpush1.msra.mxu0 %v2114
    %2198 = vmatprep.subr.mxu0 0.0
    %2199 = vmatpush1.msra.mxu0 %v2115
    %2200 = vmatprep.subr.mxu0 0.0
    %2201 = vmatpush1.msra.mxu0 %v2116
    %2202 = vmatprep.mubr.f32.mxu0 %v2131
    %2203 = vmatmul.mubr.f32.gmra.mrb[0].mxu0 %v1977
    %v2204 = vpop.f32.mrb[0].mxu0
    %v2205 = vadd.f32 %v2136, %v2204
    %v2206 = vpop.f32.mrb[0].mxu0
    %2207 = vmatprep.mubr.f32.mxu0 %v2121
    %2208 = vmatmul.mubr.f32.gmra.mrb[0].mxu0 %v1943
    %v2209 = vpop.f32.mrb[0].mxu0
    %v2210 = vadd.f32 %v2136, %v2209
    %v2211 = vpop.f32.mrb[0].mxu0
    %2212 = vdwg.mxu0
    %v2213 = vmax.f32 %v2205, 0.0
    %v2214 = vmax.f32 %v2210, 0.0
    %v2216 = vrot.slane %v2213, 2
    %v2218 = vmax.f32 %v2213, %v2216
    %v2219 = vrot.slane %v2213, 4
    %v2221 = vmax.f32 %v2218, %v2219
    %v2222 = vrot.slane %v2213, 6
    %v2224 = vmax.f32 %v2221, %v2222
    %v2225 = vmax.f32 %v2224, %v2214
    %v2226 = vld [vmem:[#allocation13] sm:$0xff]
    %v2227 = vld [vmem:[#allocation13 + $0x8] sm:$0xff]
    %v2228 = vld [vmem:[#allocation13 + $0x10] sm:$0xff]
    %v2229 = vld [vmem:[#allocation13 + $0x18] sm:$0xff]
    %v2230 = vld [vmem:[#allocation13 + $0x20] sm:$0xff]
    %v2231 = vld [vmem:[#allocation13 + $0x28] sm:$0xff]
    %v2232 = vld [vmem:[#allocation13 + $0x30] sm:$0xff]
    %v2233 = vld [vmem:[#allocation13 + $0x38] sm:$0xff]
    %v2234 = vld [vmem:[#allocation13 + $0x40] sm:$0xff]
    %v2235 = vld [vmem:[#allocation13 + $0x48] sm:$0xff]
    %v2236 = vld [vmem:[#allocation13 + $0x50] sm:$0xff]
    %v2237 = vld [vmem:[#allocation13 + $0x58] sm:$0xff]
    %v2238 = vld [vmem:[#allocation13 + $0x60] sm:$0xff]
    %v2239 = vld [vmem:[#allocation13 + $0x68] sm:$0xff]
    %v2240 = vld [vmem:[#allocation13 + $0x70] sm:$0xff]
    %v2241 = vld [vmem:[#allocation13 + $0x78] sm:$0xff]
    %v2242 = vld [vmem:[#allocation13 + $0x80] sm:$0xff]
    %v2243 = vld [vmem:[#allocation13 + $0x88] sm:$0xff]
    %v2244 = vld [vmem:[#allocation13 + $0x90] sm:$0xff]
    %v2245 = vld [vmem:[#allocation13 + $0x98] sm:$0xff]
    %v2246 = vld [vmem:[#allocation13 + $0xa0] sm:$0xff]
    %v2247 = vld [vmem:[#allocation13 + $0xa8] sm:$0xff]
    %v2248 = vld [vmem:[#allocation13 + $0xb0] sm:$0xff]
    %v2249 = vld [vmem:[#allocation13 + $0xb8] sm:$0xff]
    %v2250 = vld [vmem:[#allocation13 + $0xc0] sm:$0xff]
    %v2251 = vld [vmem:[#allocation13 + $0xc8] sm:$0xff]
    %v2252 = vld [vmem:[#allocation13 + $0xd0] sm:$0xff]
    %v2253 = vld [vmem:[#allocation13 + $0xd8] sm:$0xff]
    %v2254 = vld [vmem:[#allocation13 + $0xe0] sm:$0xff]
    %v2255 = vld [vmem:[#allocation13 + $0xe8] sm:$0xff]
    %v2256 = vld [vmem:[#allocation13 + $0xf0] sm:$0xff]
    %v2257 = vld [vmem:[#allocation13 + $0xf8] sm:$0xff]
    %v2258 = vld [vmem:[#allocation13 + $0x100] sm:$0xff]
    %v2259 = vld [vmem:[#allocation13 + $0x108] sm:$0xff]
    %v2260 = vld [vmem:[#allocation13 + $0x110] sm:$0xff]
    %v2261 = vld [vmem:[#allocation13 + $0x118] sm:$0xff]
    %v2262 = vld [vmem:[#allocation13 + $0x120] sm:$0xff]
    %v2263 = vld [vmem:[#allocation13 + $0x128] sm:$0xff]
    %v2264 = vld [vmem:[#allocation13 + $0x130] sm:$0xff]
    %v2265 = vld [vmem:[#allocation13 + $0x138] sm:$0xff]
    %v2266 = vld [vmem:[%s9] sm:$0x1]
    %v2267 = vrot.slane %v1879, 6
    %v2269 = vrot.slane %v1884, 4
    %v2271 = vrot.slane %v1892, 2
    %v2273 = vsel %vm1970, %v1874, %v2267
    %v2274 = vsel %vm1973, %v2273, %v2269
    %v2275 = vsel %vm1976, %v2274, %v2271
    %v2277 = vlaneseq
    %v2278 = vshrl.u32 %v2277, 7
    %v2279 = vsub.s32 0, %v2278
    %v2280 = vrot.slane %v2266, %v2279
    %v2283 = vsel %vm1922, %v2275, 0
    %2285 = vmatprep.subr.mxu0 0.0
    %2286 = vmatpush1.msra.mxu0 %v2226
    %2287 = vmatprep.subr.mxu0 0.0
    %2288 = vmatpush1.msra.mxu0 %v2227
    %2289 = vmatprep.subr.mxu0 0.0
    %2290 = vmatpush1.msra.mxu0 %v2228
    %2291 = vmatprep.subr.mxu0 0.0
    %2292 = vmatpush1.msra.mxu0 %v2229
    %2293 = vmatprep.subr.mxu0 0.0
    %2294 = vmatpush1.msra.mxu0 %v2230
    %2295 = vmatprep.subr.mxu0 0.0
    %2296 = vmatpush1.msra.mxu0 %v2231
    %2297 = vmatprep.subr.mxu0 0.0
    %2298 = vmatpush1.msra.mxu0 %v2232
    %2299 = vmatprep.subr.mxu0 0.0
    %2300 = vmatpush1.msra.mxu0 %v2233
    %2301 = vmatprep.subr.mxu0 0.0
    %2302 = vmatpush1.msra.mxu0 %v2234
    %2303 = vmatprep.subr.mxu0 0.0
    %2304 = vmatpush1.msra.mxu0 %v2235
    %2305 = vmatprep.subr.mxu0 0.0
    %2306 = vmatpush1.msra.mxu0 %v2236
    %2307 = vmatprep.subr.mxu0 0.0
    %2308 = vmatpush1.msra.mxu0 %v2237
    %2309 = vmatprep.subr.mxu0 0.0
    %2310 = vmatpush1.msra.mxu0 %v2238
    %2311 = vmatprep.subr.mxu0 0.0
    %2312 = vmatpush1.msra.mxu0 %v2239
    %2313 = vmatprep.subr.mxu0 0.0
    %2314 = vmatpush1.msra.mxu0 %v2240
    %2315 = vmatprep.subr.mxu0 0.0
    %2316 = vmatpush1.msra.mxu0 %v2241
    %2317 = vmatprep.subr.mxu0 0.0
    %2318 = vmatpush1.msra.mxu0 %v2242
    %2319 = vmatprep.subr.mxu0 0.0
    %2320 = vmatpush1.msra.mxu0 %v2243
    %2321 = vmatprep.subr.mxu0 0.0
    %2322 = vmatpush1.msra.mxu0 %v2244
    %2323 = vmatprep.subr.mxu0 0.0
    %2324 = vmatpush1.msra.mxu0 %v2245
    %2325 = vmatprep.subr.mxu0 0.0
    %2326 = vmatpush1.msra.mxu0 %v2246
    %2327 = vmatprep.subr.mxu0 0.0
    %2328 = vmatpush1.msra.mxu0 %v2247
    %2329 = vmatprep.subr.mxu0 0.0
    %2330 = vmatpush1.msra.mxu0 %v2248
    %2331 = vmatprep.subr.mxu0 0.0
    %2332 = vmatpush1.msra.mxu0 %v2249
    %2333 = vmatprep.subr.mxu0 0.0
    %2334 = vmatpush1.msra.mxu0 %v2250
    %2335 = vmatprep.subr.mxu0 0.0
    %2336 = vmatpush1.msra.mxu0 %v2251
    %2337 = vmatprep.subr.mxu0 0.0
    %2338 = vmatpush1.msra.mxu0 %v2252
    %2339 = vmatprep.subr.mxu0 0.0
    %2340 = vmatpush1.msra.mxu0 %v2253
    %2341 = vmatprep.subr.mxu0 0.0
    %2342 = vmatpush1.msra.mxu0 %v2254
    %2343 = vmatprep.subr.mxu0 0.0
    %2344 = vmatpush1.msra.mxu0 %v2255
    %2345 = vmatprep.subr.mxu0 0.0
    %2346 = vmatpush1.msra.mxu0 %v2256
    %2347 = vmatprep.subr.mxu0 0.0
    %2348 = vmatpush1.msra.mxu0 %v2257
    %2349 = vmatprep.mubr.f32.mxu0 %v2131
    %2350 = vmatmul.mubr.f32.gmra.mrb[0].mxu0 %v1977
    %v2351 = vpop.f32.mrb[0].mxu0
    %v2352 = vadd.f32 %v2280, %v2351
    %v2353 = vpop.f32.mrb[0].mxu0
    %2354 = vdwg.mxu0
    %2355 = vmatprep.subr.mxu0 0.0
    %2356 = vmatpush1.msra.mxu0 %v2258
    %2357 = vmatprep.subr.mxu0 0.0
    %2358 = vmatpush1.msra.mxu0 %v2259
    %2359 = vmatprep.subr.mxu0 0.0
    %2360 = vmatpush1.msra.mxu0 %v2260
    %2361 = vmatprep.subr.mxu0 0.0
    %2362 = vmatpush1.msra.mxu0 %v2261
    %2363 = vmatprep.subr.mxu0 0.0
    %2364 = vmatpush1.msra.mxu0 %v2262
    %2365 = vmatprep.subr.mxu0 0.0
    %2366 = vmatpush1.msra.mxu0 %v2263
    %2367 = vmatprep.subr.mxu0 0.0
    %2368 = vmatpush1.msra.mxu0 %v2264
    %2369 = vmatprep.subr.mxu0 0.0
    %2370 = vmatpush1.msra.mxu0 %v2265
    %2371 = vmatprep.subr.mxu0 0.0
    %2372 = vmatpush1.msra.mxu0 0.0
    %2373 = vmatprep.subr.mxu0 0.0
    %2374 = vmatpush1.msra.mxu0 0.0
    %2375 = vmatprep.subr.mxu0 0.0
    %2376 = vmatpush1.msra.mxu0 0.0
    %2377 = vmatprep.subr.mxu0 0.0
    %2378 = vmatpush1.msra.mxu0 0.0
    %2379 = vmatprep.subr.mxu0 0.0
    %2380 = vmatpush1.msra.mxu0 0.0
    %2381 = vmatprep.subr.mxu0 0.0
    %2382 = vmatpush1.msra.mxu0 0.0
    %2383 = vmatprep.subr.mxu0 0.0
    %2384 = vmatpush1.msra.mxu0 0.0
    %2385 = vmatprep.subr.mxu0 0.0
    %2386 = vmatpush1.msra.mxu0 0.0
    %2387 = vmatprep.subr.mxu0 0.0
    %2388 = vmatpush1.msra.mxu0 0.0
    %2389 = vmatprep.subr.mxu0 0.0
    %2390 = vmatpush1.msra.mxu0 0.0
    %2391 = vmatprep.subr.mxu0 0.0
    %2392 = vmatpush1.msra.mxu0 0.0
    %2393 = vmatprep.subr.mxu0 0.0
    %2394 = vmatpush1.msra.mxu0 0.0
    %2395 = vmatprep.subr.mxu0 0.0
    %2396 = vmatpush1.msra.mxu0 0.0
    %2397 = vmatprep.subr.mxu0 0.0
    %2398 = vmatpush1.msra.mxu0 0.0
    %2399 = vmatprep.subr.mxu0 0.0
    %2400 = vmatpush1.msra.mxu0 0.0
    %2401 = vmatprep.subr.mxu0 0.0
    %2402 = vmatpush1.msra.mxu0 0.0
    %2403 = vmatprep.subr.mxu0 0.0
    %2404 = vmatpush1.msra.mxu0 0.0
    %2405 = vmatprep.subr.mxu0 0.0
    %2406 = vmatpush1.msra.mxu0 0.0
    %2407 = vmatprep.subr.mxu0 0.0
    %2408 = vmatpush1.msra.mxu0 0.0
    %2409 = vmatprep.subr.mxu0 0.0
    %2410 = vmatpush1.msra.mxu0 0.0
    %2411 = vmatprep.subr.mxu0 0.0
    %2412 = vmatpush1.msra.mxu0 0.0
    %2413 = vmatprep.subr.mxu0 0.0
    %2414 = vmatpush1.msra.mxu0 0.0
    %2415 = vmatprep.subr.mxu0 0.0
    %2416 = vmatpush1.msra.mxu0 0.0
    %2417 = vmatprep.subr.mxu0 0.0
    %2418 = vmatpush1.msra.mxu0 0.0
    %2419 = vmatprep.mubr.f32.mxu0 0.0
    %2420 = vmatmul.mubr.f32.gmra.mrb[0].mxu0 %v2283
    %v2421 = vpop.f32.mrb[0].mxu0
    %v2422 = vadd.f32 %v2352, %v2421
    %v2423 = vpop.f32.mrb[0].mxu0
    %2424 = vdwg.mxu0
    %v2425 = vmax.f32 %v2422, 0.0
    %v2427 = vrot.slane %v2425, 2
    %v2429 = vmax.f32 %v2425, %v2427
    %v2430 = vrot.slane %v2425, 4
    %v2432 = vmax.f32 %v2429, %v2430
    %v2433 = vrot.slane %v2425, 6
    %v2435 = vmax.f32 %v2432, %v2433
    %v2436 = vld [vmem:[#allocation15] sm:$0xff]
    %v2437 = vld [vmem:[#allocation15 + $0x8] sm:$0xff]
    %v2438 = vld [vmem:[#allocation15 + $0x10] sm:$0xff]
    %v2439 = vld [vmem:[#allocation15 + $0x18] sm:$0xff]
    %v2440 = vld [vmem:[#allocation15 + $0x20] sm:$0xff]
    %v2441 = vld [vmem:[#allocation15 + $0x28] sm:$0xff]
    %v2442 = vld [vmem:[#allocation15 + $0x30] sm:$0xff]
    %v2443 = vld [vmem:[#allocation15 + $0x38] sm:$0xff]
    %v2444 = vld [vmem:[#allocation15 + $0x40] sm:$0xff]
    %v2445 = vld [vmem:[#allocation15 + $0x48] sm:$0xff]
    %v2446 = vld [vmem:[#allocation15 + $0x50] sm:$0xff]
    %v2447 = vld [vmem:[#allocation15 + $0x58] sm:$0xff]
    %v2448 = vld [vmem:[#allocation15 + $0x60] sm:$0xff]
    %v2449 = vld [vmem:[#allocation15 + $0x68] sm:$0xff]
    %v2450 = vld [vmem:[#allocation15 + $0x70] sm:$0xff]
    %v2451 = vld [vmem:[#allocation15 + $0x78] sm:$0xff]
    %v2452 = vld [vmem:[#allocation15 + $0x80] sm:$0xff]
    %v2453 = vld [vmem:[#allocation15 + $0x88] sm:$0xff]
    %v2454 = vld [vmem:[#allocation15 + $0x90] sm:$0xff]
    %v2455 = vld [vmem:[#allocation15 + $0x98] sm:$0xff]
    %v2456 = vld [vmem:[#allocation15 + $0xa0] sm:$0xff]
    %v2457 = vld [vmem:[#allocation15 + $0xa8] sm:$0xff]
    %v2458 = vld [vmem:[#allocation15 + $0xb0] sm:$0xff]
    %v2459 = vld [vmem:[#allocation15 + $0xb8] sm:$0xff]
    %v2460 = vld [vmem:[#allocation15 + $0xc0] sm:$0xff]
    %v2461 = vld [vmem:[#allocation15 + $0xc8] sm:$0xff]
    %v2462 = vld [vmem:[#allocation15 + $0xd0] sm:$0xff]
    %v2463 = vld [vmem:[#allocation15 + $0xd8] sm:$0xff]
    %v2464 = vld [vmem:[#allocation15 + $0xe0] sm:$0xff]
    %v2465 = vld [vmem:[#allocation15 + $0xe8] sm:$0xff]
    %v2466 = vld [vmem:[#allocation15 + $0xf0] sm:$0xff]
    %v2467 = vld [vmem:[#allocation15 + $0xf8] sm:$0xff]
    %v2468 = vld [vmem:[#allocation15 + $0x100] sm:$0xff]
    %v2469 = vld [vmem:[#allocation15 + $0x108] sm:$0xff]
    %v2470 = vld [vmem:[#allocation15 + $0x110] sm:$0xff]
    %v2471 = vld [vmem:[#allocation15 + $0x118] sm:$0xff]
    %v2472 = vld [vmem:[#allocation15 + $0x120] sm:$0xff]
    %v2473 = vld [vmem:[#allocation15 + $0x128] sm:$0xff]
    %v2474 = vld [vmem:[#allocation15 + $0x130] sm:$0xff]
    %v2475 = vld [vmem:[#allocation15 + $0x138] sm:$0xff]
    %v2476 = vld [vmem:[#allocation15 + $0x140] sm:$0xff]
    %v2477 = vld [vmem:[#allocation15 + $0x148] sm:$0xff]
    %v2478 = vld [vmem:[#allocation15 + $0x150] sm:$0xff]
    %v2479 = vld [vmem:[#allocation15 + $0x158] sm:$0xff]
    %v2480 = vld [vmem:[#allocation15 + $0x160] sm:$0xff]
    %v2481 = vld [vmem:[#allocation15 + $0x168] sm:$0xff]
    %v2482 = vld [vmem:[#allocation15 + $0x170] sm:$0xff]
    %v2483 = vld [vmem:[#allocation15 + $0x178] sm:$0xff]
    %v2484 = vld [vmem:[%s11] sm:$0x1]
    %v2486 = vlaneseq
    %v2487 = vshrl.u32 %v2486, 7
    %v2488 = vsub.s32 0, %v2487
    %v2489 = vrot.slane %v2484, %v2488
    %2491 = vmatprep.subr.mxu0 0.0
    %2492 = vmatpush1.msra.mxu0 %v2436
    %2493 = vmatprep.subr.mxu0 0.0
    %2494 = vmatpush1.msra.mxu0 %v2437
    %2495 = vmatprep.subr.mxu0 0.0
    %2496 = vmatpush1.msra.mxu0 %v2438
    %2497 = vmatprep.subr.mxu0 0.0
    %2498 = vmatpush1.msra.mxu0 %v2439
    %2499 = vmatprep.subr.mxu0 0.0
    %2500 = vmatpush1.msra.mxu0 %v2440
    %2501 = vmatprep.subr.mxu0 0.0
    %2502 = vmatpush1.msra.mxu0 %v2441
    %2503 = vmatprep.subr.mxu0 0.0
    %2504 = vmatpush1.msra.mxu0 %v2442
    %2505 = vmatprep.subr.mxu0 0.0
    %2506 = vmatpush1.msra.mxu0 %v2443
    %2507 = vmatprep.subr.mxu0 0.0
    %2508 = vmatpush1.msra.mxu0 %v2444
    %2509 = vmatprep.subr.mxu0 0.0
    %2510 = vmatpush1.msra.mxu0 %v2445
    %2511 = vmatprep.subr.mxu0 0.0
    %2512 = vmatpush1.msra.mxu0 %v2446
    %2513 = vmatprep.subr.mxu0 0.0
    %2514 = vmatpush1.msra.mxu0 %v2447
    %2515 = vmatprep.subr.mxu0 0.0
    %2516 = vmatpush1.msra.mxu0 %v2448
    %2517 = vmatprep.subr.mxu0 0.0
    %2518 = vmatpush1.msra.mxu0 %v2449
    %2519 = vmatprep.subr.mxu0 0.0
    %2520 = vmatpush1.msra.mxu0 %v2450
    %2521 = vmatprep.subr.mxu0 0.0
    %2522 = vmatpush1.msra.mxu0 %v2451
    %2523 = vmatprep.subr.mxu0 0.0
    %2524 = vmatpush1.msra.mxu0 %v2452
    %2525 = vmatprep.subr.mxu0 0.0
    %2526 = vmatpush1.msra.mxu0 %v2453
    %2527 = vmatprep.subr.mxu0 0.0
    %2528 = vmatpush1.msra.mxu0 %v2454
    %2529 = vmatprep.subr.mxu0 0.0
    %2530 = vmatpush1.msra.mxu0 %v2455
    %2531 = vmatprep.subr.mxu0 0.0
    %2532 = vmatpush1.msra.mxu0 %v2456
    %2533 = vmatprep.subr.mxu0 0.0
    %2534 = vmatpush1.msra.mxu0 %v2457
    %2535 = vmatprep.subr.mxu0 0.0
    %2536 = vmatpush1.msra.mxu0 %v2458
    %2537 = vmatprep.subr.mxu0 0.0
    %2538 = vmatpush1.msra.mxu0 %v2459
    %2539 = vmatprep.subr.mxu0 0.0
    %2540 = vmatpush1.msra.mxu0 %v2460
    %2541 = vmatprep.subr.mxu0 0.0
    %2542 = vmatpush1.msra.mxu0 %v2461
    %2543 = vmatprep.subr.mxu0 0.0
    %2544 = vmatpush1.msra.mxu0 %v2462
    %2545 = vmatprep.subr.mxu0 0.0
    %2546 = vmatpush1.msra.mxu0 %v2463
    %2547 = vmatprep.subr.mxu0 0.0
    %2548 = vmatpush1.msra.mxu0 %v2464
    %2549 = vmatprep.subr.mxu0 0.0
    %2550 = vmatpush1.msra.mxu0 %v2465
    %2551 = vmatprep.subr.mxu0 0.0
    %2552 = vmatpush1.msra.mxu0 %v2466
    %2553 = vmatprep.subr.mxu0 0.0
    %2554 = vmatpush1.msra.mxu0 %v2467
    %2555 = vmatprep.mubr.f32.mxu0 %v2225
    %2556 = vmatmul.mubr.f32.gmra.mrb[0].mxu0 %v2084
    %v2557 = vpop.f32.mrb[0].mxu0
    %v2558 = vadd.f32 %v2489, %v2557
    %v2559 = vpop.f32.mrb[0].mxu0
    %2560 = vdwg.mxu0
    %2561 = vmatprep.subr.mxu0 0.0
    %2562 = vmatpush1.msra.mxu0 %v2468
    %2563 = vmatprep.subr.mxu0 0.0
    %2564 = vmatpush1.msra.mxu0 %v2469
    %2565 = vmatprep.subr.mxu0 0.0
    %2566 = vmatpush1.msra.mxu0 %v2470
    %2567 = vmatprep.subr.mxu0 0.0
    %2568 = vmatpush1.msra.mxu0 %v2471
    %2569 = vmatprep.subr.mxu0 0.0
    %2570 = vmatpush1.msra.mxu0 %v2472
    %2571 = vmatprep.subr.mxu0 0.0
    %2572 = vmatpush1.msra.mxu0 %v2473
    %2573 = vmatprep.subr.mxu0 0.0
    %2574 = vmatpush1.msra.mxu0 %v2474
    %2575 = vmatprep.subr.mxu0 0.0
    %2576 = vmatpush1.msra.mxu0 %v2475
    %2577 = vmatprep.subr.mxu0 0.0
    %2578 = vmatpush1.msra.mxu0 %v2476
    %2579 = vmatprep.subr.mxu0 0.0
    %2580 = vmatpush1.msra.mxu0 %v2477
    %2581 = vmatprep.subr.mxu0 0.0
    %2582 = vmatpush1.msra.mxu0 %v2478
    %2583 = vmatprep.subr.mxu0 0.0
    %2584 = vmatpush1.msra.mxu0 %v2479
    %2585 = vmatprep.subr.mxu0 0.0
    %2586 = vmatpush1.msra.mxu0 %v2480
    %2587 = vmatprep.subr.mxu0 0.0
    %2588 = vmatpush1.msra.mxu0 %v2481
    %2589 = vmatprep.subr.mxu0 0.0
    %2590 = vmatpush1.msra.mxu0 %v2482
    %2591 = vmatprep.subr.mxu0 0.0
    %2592 = vmatpush1.msra.mxu0 %v2483
    %2593 = vmatprep.subr.mxu0 0.0
    %2594 = vmatpush1.msra.mxu0 0.0
    %2595 = vmatprep.subr.mxu0 0.0
    %2596 = vmatpush1.msra.mxu0 0.0
    %2597 = vmatprep.subr.mxu0 0.0
    %2598 = vmatpush1.msra.mxu0 0.0
    %2599 = vmatprep.subr.mxu0 0.0
    %2600 = vmatpush1.msra.mxu0 0.0
    %2601 = vmatprep.subr.mxu0 0.0
    %2602 = vmatpush1.msra.mxu0 0.0
    %2603 = vmatprep.subr.mxu0 0.0
    %2604 = vmatpush1.msra.mxu0 0.0
    %2605 = vmatprep.subr.mxu0 0.0
    %2606 = vmatpush1.msra.mxu0 0.0
    %2607 = vmatprep.subr.mxu0 0.0
    %2608 = vmatpush1.msra.mxu0 0.0
    %2609 = vmatprep.subr.mxu0 0.0
    %2610 = vmatpush1.msra.mxu0 0.0
    %2611 = vmatprep.subr.mxu0 0.0
    %2612 = vmatpush1.msra.mxu0 0.0
    %2613 = vmatprep.subr.mxu0 0.0
    %2614 = vmatpush1.msra.mxu0 0.0
    %2615 = vmatprep.subr.mxu0 0.0
    %2616 = vmatpush1.msra.mxu0 0.0
    %2617 = vmatprep.subr.mxu0 0.0
    %2618 = vmatpush1.msra.mxu0 0.0
    %2619 = vmatprep.subr.mxu0 0.0
    %2620 = vmatpush1.msra.mxu0 0.0
    %2621 = vmatprep.subr.mxu0 0.0
    %2622 = vmatpush1.msra.mxu0 0.0
    %2623 = vmatprep.subr.mxu0 0.0
    %2624 = vmatpush1.msra.mxu0 0.0
    %2625 = vmatprep.mubr.f32.mxu0 0.0
    %2626 = vmatmul.mubr.f32.gmra.mrb[0].mxu0 %v2435
    %v2627 = vpop.f32.mrb[0].mxu0
    %v2628 = vadd.f32 %v2558, %v2627
    %v2629 = vpop.f32.mrb[0].mxu0
    %2630 = vdwg.mxu0
    %2631 = vst [vmem:[#allocation16] sm:$0x3] %v2628
    // Predicated region
    $region74: #{lstmcnn_forward.1} parent=1 // pred_check
      _
    $region75: #{lstmcnn_forward.1} parent=1 // pred_check_branch
      %2633 = sbr.rel (0) target = $region77
    $region76: #{lstmcnn_forward.1} parent=1 // pred_region
      %s2635 = ssub.s32 32, 32
      %2636 = vsyncadd [#allocation6], %s2635
      %s2638 = sshll.u32 [#allocation16], 4
      %s2639 = int_to_ptr.vmem [resolvable:$true] %s2638
      %2641 = dma.vmem_to_hbm [thread:$0]  %s2639, 32, %s12, [#allocation6]
    $region77: #{lstmcnn_forward.1} parent=1 // pred_fallthru
      _
    // Predicated region
    $region78: #{lstmcnn_forward.1} parent=1 // pred_check
      _
    $region79: #{lstmcnn_forward.1} parent=1 // pred_check_branch
      %2643 = sbr.rel (0) target = $region81
    $region80: #{lstmcnn_forward.1} parent=1 // pred_region
      %2644 = dma.done [#allocation6], 32
    $region81: #{lstmcnn_forward.1} parent=1 // pred_fallthru
      _
    %2645 = vsyncpa [#allocation5], 1
    %2646 = vsyncpa [#allocation8], 1
    %2647 = vsyncpa [#allocation11], 1
    %2648 = vsyncpa [#allocation14], 1
    %2649 = vsyncpa [#allocation6], 1

</llo_original>
